<compile_context>
chip_gen: v7x
topology: tpu7x:2x2x1
jax: 0.10.0
libtpu: 0.0.40
codegen_flags: <defaults>
</compile_context>

<pallas_src>
import jax
import jax.numpy as jnp
from jax.experimental import pallas as pl
from jax.experimental.pallas import tpu as pltpu

# ---------------- configuration (mirrors ForecastLSTM.__init__ args) ----------------
NUM_OUTPUT_SEQ   = 1     # num_classes
INPUT_SEQ_LEN    = 4     # LSTM input_size (per-step feature width)
N_OTHER_FEATURES = 8
HIDDEN_SIZE      = 32
NUM_LAYERS       = 2
HIDDEN_NODES     = 32
LINEAR_LAYERS    = 3     # -> Linear(H+NF,HN)+ReLU, Linear(HN,HN)+ReLU, Linear(HN,1)
BATCH            = 2
SEQ_STEPS        = 8


# ------------------------------ fused forward kernel --------------------------------
def _forecast_kernel(xf_ref, other_ref,
                     w_ih0_ref, w_hh0_ref, b0_ref,
                     w_ih1_ref, w_hh1_ref, b1_ref,
                     ew1_ref, eb1_ref, ew2_ref, eb2_ref,
                     lw1h_ref, lw1e_ref, lb1_ref,
                     lw2_ref, lb2_ref, lw3_ref, lb3_ref,
                     out_ref, h0_scr, h1_scr):
    # xf_ref:    (T*B, Din) time-major flattened LSTM input
    # other_ref: (T, NF)    other-features branch
    # w_ih*:(Din/H, 4H)  w_hh*:(H, 4H)  b*:(1, 4H)   (PyTorch gate order i,f,g,o)
    # h0_scr/h1_scr: (T*B, H) VMEM scratch holding per-layer hidden-state history
    T, B, H = SEQ_STEPS, BATCH, HIDDEN_SIZE

    def run_layer(xp, w_hh_ref, h_out_scr):
        # xp: (T*B, 4H) hoisted input projection (x @ W_ih^T + b_ih + b_hh).
        # Recurrence keeps (h, c) as values (vregs); only h is stored per step.
        w_hh = w_hh_ref[...]                              # (H, 4H), loaded once
        h = jnp.zeros((B, H), jnp.float32)
        c = jnp.zeros((B, H), jnp.float32)
        for t in range(T):                                # fully unrolled (T static)
            gates = xp[t * B:(t + 1) * B, :] + jnp.dot(
                h, w_hh, preferred_element_type=jnp.float32)          # (B, 4H)
            sg = jax.nn.sigmoid(gates)                    # one full-width EUP pass
            th = jnp.tanh(gates)                          # one full-width EUP pass
            i_g = sg[:, 0 * H:1 * H]
            f_g = sg[:, 1 * H:2 * H]
            g_g = th[:, 2 * H:3 * H]
            o_g = sg[:, 3 * H:4 * H]
            c = f_g * c + i_g * g_g
            h = o_g * jnp.tanh(c)
            h_out_scr[t * B:(t + 1) * B, :] = h           # off the critical path

    # ---- LSTM layer 0: input projection hoisted out of the time loop ----
    xp0 = jnp.dot(xf_ref[...], w_ih0_ref[...],
                  preferred_element_type=jnp.float32) + b0_ref[...]   # (T*B, 4H)
    run_layer(xp0, w_hh0_ref, h0_scr)

    # ---- LSTM layer 1: same hoist, feeding off layer-0 hidden-state history ----
    xp1 = jnp.dot(h0_scr[...], w_ih1_ref[...],
                  preferred_element_type=jnp.float32) + b1_ref[...]   # (T*B, 4H)
    run_layer(xp1, w_hh1_ref, h1_scr)

    # ---- encoding_layer: Linear(NF,HN) -> ReLU -> Linear(HN,NF) on (T, NF) ----
    en = jnp.dot(other_ref[...], ew1_ref[...],
                 preferred_element_type=jnp.float32) + eb1_ref[...]
    en = jnp.maximum(en, 0.0)
    en = jnp.dot(en, ew2_ref[...],
                 preferred_element_type=jnp.float32) + eb2_ref[...]   # (T, NF)

    # ---- head: Linear(H+NF,HN)+ReLU, Linear(HN,HN)+ReLU, Linear(HN,1) ----
    # Linear over concat([h_all, en_expanded], dim=2) split into two matmuls;
    # the en part is computed once at (T, HN) and broadcast over batch.
    HN = lw1h_ref.shape[1]
    en_part = jnp.dot(en, lw1e_ref[...],
                      preferred_element_type=jnp.float32)             # (T, HN)
    z = jnp.dot(h1_scr[...], lw1h_ref[...],
                preferred_element_type=jnp.float32)                   # (T*B, HN)
    z = z.reshape(T, B, HN) + en_part[:, None, :] + lb1_ref[...]
    z = jnp.maximum(z, 0.0).reshape(T * B, HN)
    z = jnp.dot(z, lw2_ref[...], preferred_element_type=jnp.float32) + lb2_ref[...]
    z = jnp.maximum(z, 0.0)
    z = jnp.dot(z, lw3_ref[...], preferred_element_type=jnp.float32) + lb3_ref[...]
    out_ref[...] = z                                                  # (T*B, 1)


# --------------------------------- full forward -------------------------------------
@jax.jit
def forecast_lstm_forward(x, params):
    NF, H, HN, NC = N_OTHER_FEATURES, HIDDEN_SIZE, HIDDEN_NODES, NUM_OUTPUT_SEQ
    T, B, D = SEQ_STEPS, BATCH, INPUT_SEQ_LEN

    # TODO(synk): the reference's dim-0 slice leaves other_feat_x ill-typed for
    # encoding_layer (Linear expects last dim == n_other_features); we realize the
    # intended (T, NF) shape by taking channel 0 and transposing.
    other_feat = x[:NF, :, 0].T                                   # (T, NF)
    seq_x = x[NF:]                                                # (B, T, D), batch_first
    x_flat = jnp.transpose(seq_x, (1, 0, 2)).reshape(T * B, D)    # time-major rows

    (w_ih0, w_hh0, b_ih0, b_hh0), (w_ih1, w_hh1, b_ih1, b_hh1) = params['lstm']
    lw1 = params['lin_w1'].T                                      # (H+NF, HN)
    lw1_h, lw1_e = lw1[:H], lw1[H:]

    # Everything is KiB-scale: whole-array VMEM residency, no grid / pipelining.
    # TODO(synk): if batch grows, add a batch grid axis with
    # dimension_semantics=("parallel",) to use the second TensorCore on v7x.
    vmem = pl.BlockSpec(memory_space=pltpu.MemorySpace.VMEM)
    out_flat = pl.pallas_call(
        _forecast_kernel,
        out_shape=jax.ShapeDtypeStruct((T * B, NC), jnp.float32),
        in_specs=[vmem] * 19,
        out_specs=vmem,
        scratch_shapes=[pltpu.VMEM((T * B, H), jnp.float32),
                        pltpu.VMEM((T * B, H), jnp.float32)],
    )(x_flat, other_feat,
      w_ih0.T, w_hh0.T, (b_ih0 + b_hh0)[None, :],
      w_ih1.T, w_hh1.T, (b_ih1 + b_hh1)[None, :],
      params['enc_w1'].T, params['enc_b1'][None, :],
      params['enc_w2'].T, params['enc_b2'][None, :],
      lw1_h, lw1_e, params['lin_b1'][None, :],
      params['lin_w2'].T, params['lin_b2'][None, :],
      params['lin_w3'].T, params['lin_b3'][None, :])

    # row r of out_flat corresponds to (t, b) with r = t*B + b  ->  (B, T)
    return out_flat.reshape(T, B).T


# -------------------------------- parameter init ------------------------------------
def init_params(key):
    keys = iter(jax.random.split(key, 32))

    def w(shape, scale=0.1):
        return jax.random.normal(next(keys), shape, jnp.float32) * scale

    params = {}
    lstm = []
    for l in range(NUM_LAYERS):
        din = INPUT_SEQ_LEN if l == 0 else HIDDEN_SIZE
        lstm.append((w((4 * HIDDEN_SIZE, din)),          # weight_ih_l{l}
                     w((4 * HIDDEN_SIZE, HIDDEN_SIZE)),  # weight_hh_l{l}
                     w((4 * HIDDEN_SIZE,)),              # bias_ih_l{l}
                     w((4 * HIDDEN_SIZE,))))             # bias_hh_l{l}
    params['lstm'] = lstm
    # encoding_layer: Linear(NF, HN) -> ReLU -> Linear(HN, NF)   (PyTorch (out,in))
    params['enc_w1'] = w((HIDDEN_NODES, N_OTHER_FEATURES))
    params['enc_b1'] = w((HIDDEN_NODES,))
    params['enc_w2'] = w((N_OTHER_FEATURES, HIDDEN_NODES))
    params['enc_b2'] = w((N_OTHER_FEATURES,))
    # head: Linear(H+NF, HN)+ReLU, Linear(HN, HN)+ReLU, Linear(HN, num_classes)
    params['lin_w1'] = w((HIDDEN_NODES, HIDDEN_SIZE + N_OTHER_FEATURES))
    params['lin_b1'] = w((HIDDEN_NODES,))
    params['lin_w2'] = w((HIDDEN_NODES, HIDDEN_NODES))
    params['lin_b2'] = w((HIDDEN_NODES,))
    params['lin_w3'] = w((NUM_OUTPUT_SEQ, HIDDEN_NODES))
    params['lin_b3'] = w((NUM_OUTPUT_SEQ,))
    return params


if __name__ == "__main__":
    key = jax.random.PRNGKey(0)
    pkey, xkey = jax.random.split(key)
    params = init_params(pkey)
    x = jax.random.normal(
        xkey, (N_OTHER_FEATURES + BATCH, SEQ_STEPS, INPUT_SEQ_LEN), jnp.float32)
    out = forecast_lstm_forward(x, params)
    jax.block_until_ready(out)
    assert out.shape == (BATCH, SEQ_STEPS), out.shape
    assert jnp.all(jnp.isfinite(out))
    print("KERNEL_OK")
</pallas_src>

<mosaic_0001>
module attributes {stable_mosaic.version = 11 : i64} {
  func.func @_forecast_kernel(%arg0: memref<16x4xf32, #tpu.memory_space<vmem>>, %arg1: memref<8x8xf32, #tpu.memory_space<vmem>>, %arg2: memref<4x128xf32, #tpu.memory_space<vmem>>, %arg3: memref<32x128xf32, #tpu.memory_space<vmem>>, %arg4: memref<1x128xf32, #tpu.memory_space<vmem>>, %arg5: memref<32x128xf32, #tpu.memory_space<vmem>>, %arg6: memref<32x128xf32, #tpu.memory_space<vmem>>, %arg7: memref<1x128xf32, #tpu.memory_space<vmem>>, %arg8: memref<8x32xf32, #tpu.memory_space<vmem>>, %arg9: memref<1x32xf32, #tpu.memory_space<vmem>>, %arg10: memref<32x8xf32, #tpu.memory_space<vmem>>, %arg11: memref<1x8xf32, #tpu.memory_space<vmem>>, %arg12: memref<32x32xf32, #tpu.memory_space<vmem>>, %arg13: memref<8x32xf32, #tpu.memory_space<vmem>>, %arg14: memref<1x32xf32, #tpu.memory_space<vmem>>, %arg15: memref<32x32xf32, #tpu.memory_space<vmem>>, %arg16: memref<1x32xf32, #tpu.memory_space<vmem>>, %arg17: memref<32x1xf32, #tpu.memory_space<vmem>>, %arg18: memref<1x1xf32, #tpu.memory_space<vmem>>, %arg19: memref<16x1xf32, #tpu.memory_space<vmem>>, %arg20: memref<16x32xf32, #tpu.memory_space<vmem>>, %arg21: memref<16x32xf32, #tpu.memory_space<vmem>>) attributes {dimension_semantics = [], scalar_prefetch = 0 : i64, scratch_operands = 2 : i64, tpu.core_type = #tpu.core_type<tc>} {
    %c0 = arith.constant 0 : index
    %c0_0 = arith.constant 0 : index
    %0 = vector.load %arg0[%c0, %c0_0] : memref<16x4xf32, #tpu.memory_space<vmem>>, vector<16x4xf32>
    %c0_1 = arith.constant 0 : index
    %c0_2 = arith.constant 0 : index
    %1 = vector.load %arg2[%c0_1, %c0_2] : memref<4x128xf32, #tpu.memory_space<vmem>>, vector<4x128xf32>
    %cst = arith.constant dense<0.000000e+00> : vector<16x128xf32>
    %2 = tpu.matmul %0, %1, %cst {dimension_numbers = #tpu.dot_dimension_numbers<[1], [0], [0], [1], [0, 0, 1, 1], [], []>} : vector<16x4xf32>, vector<4x128xf32>, vector<16x128xf32> -> vector<16x128xf32>
    %c0_3 = arith.constant 0 : index
    %c0_4 = arith.constant 0 : index
    %3 = vector.load %arg4[%c0_3, %c0_4] : memref<1x128xf32, #tpu.memory_space<vmem>>, vector<1x128xf32>
    %4 = vector.broadcast %3 : vector<1x128xf32> to vector<16x128xf32>
    %5 = arith.addf %2, %4 : vector<16x128xf32>
    %c0_5 = arith.constant 0 : index
    %c0_6 = arith.constant 0 : index
    %6 = vector.load %arg3[%c0_5, %c0_6] : memref<32x128xf32, #tpu.memory_space<vmem>>, vector<32x128xf32>
    %cst_7 = arith.constant 0.000000e+00 : f32
    %7 = vector.broadcast %cst_7 : f32 to vector<2x32xf32>
    %cst_8 = arith.constant 0.000000e+00 : f32
    %8 = vector.broadcast %cst_8 : f32 to vector<2x32xf32>
    %9 = vector.extract_strided_slice %5 {offsets = [0, 0], sizes = [2, 128], strides = [1, 1]} : vector<16x128xf32> to vector<2x128xf32>
    %cst_9 = arith.constant dense<0.000000e+00> : vector<2x128xf32>
    %10 = tpu.matmul %7, %6, %cst_9 {dimension_numbers = #tpu.dot_dimension_numbers<[1], [0], [0], [1], [0, 0, 1, 1], [], []>} : vector<2x32xf32>, vector<32x128xf32>, vector<2x128xf32> -> vector<2x128xf32>
    %11 = arith.addf %9, %10 : vector<2x128xf32>
    %12 = arith.negf %11 : vector<2x128xf32>
    %13 = math.exp %12 : vector<2x128xf32>
    %cst_10 = arith.constant 1.000000e+00 : f32
    %14 = vector.broadcast %cst_10 : f32 to vector<2x128xf32>
    %15 = arith.addf %14, %13 : vector<2x128xf32>
    %16 = arith.divf %14, %15 : vector<2x128xf32>
    %17 = math.tanh %11 : vector<2x128xf32>
    %18 = vector.extract_strided_slice %16 {offsets = [0, 0], sizes = [2, 32], strides = [1, 1]} : vector<2x128xf32> to vector<2x32xf32>
    %19 = vector.extract_strided_slice %16 {offsets = [0, 32], sizes = [2, 32], strides = [1, 1]} : vector<2x128xf32> to vector<2x32xf32>
    %20 = vector.extract_strided_slice %17 {offsets = [0, 64], sizes = [2, 32], strides = [1, 1]} : vector<2x128xf32> to vector<2x32xf32>
    %21 = vector.extract_strided_slice %16 {offsets = [0, 96], sizes = [2, 32], strides = [1, 1]} : vector<2x128xf32> to vector<2x32xf32>
    %22 = arith.mulf %19, %8 : vector<2x32xf32>
    %23 = arith.mulf %18, %20 : vector<2x32xf32>
    %24 = arith.addf %22, %23 : vector<2x32xf32>
    %25 = math.tanh %24 : vector<2x32xf32>
    %26 = arith.mulf %21, %25 : vector<2x32xf32>
    %c0_11 = arith.constant 0 : index
    %c0_12 = arith.constant 0 : index
    %27 = vector.load %arg20[%c0_11, %c0_12] : memref<16x32xf32, #tpu.memory_space<vmem>>, vector<2x32xf32>
    tpu.vector_store %arg20[%c0_11, %c0_12], %26 {strides = array<i32>} : memref<16x32xf32, #tpu.memory_space<vmem>>, vector<2x32xf32>,
    %28 = vector.extract_strided_slice %5 {offsets = [2, 0], sizes = [2, 128], strides = [1, 1]} : vector<16x128xf32> to vector<2x128xf32>
    %cst_13 = arith.constant dense<0.000000e+00> : vector<2x128xf32>
    %29 = tpu.matmul %26, %6, %cst_13 {dimension_numbers = #tpu.dot_dimension_numbers<[1], [0], [0], [1], [0, 0, 1, 1], [], []>} : vector<2x32xf32>, vector<32x128xf32>, vector<2x128xf32> -> vector<2x128xf32>
    %30 = arith.addf %28, %29 : vector<2x128xf32>
    %31 = arith.negf %30 : vector<2x128xf32>
    %32 = math.exp %31 : vector<2x128xf32>
    %cst_14 = arith.constant 1.000000e+00 : f32
    %33 = vector.broadcast %cst_14 : f32 to vector<2x128xf32>
    %34 = arith.addf %33, %32 : vector<2x128xf32>
    %35 = arith.divf %33, %34 : vector<2x128xf32>
    %36 = math.tanh %30 : vector<2x128xf32>
    %37 = vector.extract_strided_slice %35 {offsets = [0, 0], sizes = [2, 32], strides = [1, 1]} : vector<2x128xf32> to vector<2x32xf32>
    %38 = vector.extract_strided_slice %35 {offsets = [0, 32], sizes = [2, 32], strides = [1, 1]} : vector<2x128xf32> to vector<2x32xf32>
    %39 = vector.extract_strided_slice %36 {offsets = [0, 64], sizes = [2, 32], strides = [1, 1]} : vector<2x128xf32> to vector<2x32xf32>
    %40 = vector.extract_strided_slice %35 {offsets = [0, 96], sizes = [2, 32], strides = [1, 1]} : vector<2x128xf32> to vector<2x32xf32>
    %41 = arith.mulf %38, %24 : vector<2x32xf32>
    %42 = arith.mulf %37, %39 : vector<2x32xf32>
    %43 = arith.addf %41, %42 : vector<2x32xf32>
    %44 = math.tanh %43 : vector<2x32xf32>
    %45 = arith.mulf %40, %44 : vector<2x32xf32>
    %c2 = arith.constant 2 : index
    %c0_15 = arith.constant 0 : index
    %46 = vector.load %arg20[%c2, %c0_15] : memref<16x32xf32, #tpu.memory_space<vmem>>, vector<2x32xf32>
    tpu.vector_store %arg20[%c2, %c0_15], %45 {strides = array<i32>} : memref<16x32xf32, #tpu.memory_space<vmem>>, vector<2x32xf32>,
    %47 = vector.extract_strided_slice %5 {offsets = [4, 0], sizes = [2, 128], strides = [1, 1]} : vector<16x128xf32> to vector<2x128xf32>
    %cst_16 = arith.constant dense<0.000000e+00> : vector<2x128xf32>
    %48 = tpu.matmul %45, %6, %cst_16 {dimension_numbers = #tpu.dot_dimension_numbers<[1], [0], [0], [1], [0, 0, 1, 1], [], []>} : vector<2x32xf32>, vector<32x128xf32>, vector<2x128xf32> -> vector<2x128xf32>
    %49 = arith.addf %47, %48 : vector<2x128xf32>
    %50 = arith.negf %49 : vector<2x128xf32>
    %51 = math.exp %50 : vector<2x128xf32>
    %cst_17 = arith.constant 1.000000e+00 : f32
    %52 = vector.broadcast %cst_17 : f32 to vector<2x128xf32>
    %53 = arith.addf %52, %51 : vector<2x128xf32>
    %54 = arith.divf %52, %53 : vector<2x128xf32>
    %55 = math.tanh %49 : vector<2x128xf32>
    %56 = vector.extract_strided_slice %54 {offsets = [0, 0], sizes = [2, 32], strides = [1, 1]} : vector<2x128xf32> to vector<2x32xf32>
    %57 = vector.extract_strided_slice %54 {offsets = [0, 32], sizes = [2, 32], strides = [1, 1]} : vector<2x128xf32> to vector<2x32xf32>
    %58 = vector.extract_strided_slice %55 {offsets = [0, 64], sizes = [2, 32], strides = [1, 1]} : vector<2x128xf32> to vector<2x32xf32>
    %59 = vector.extract_strided_slice %54 {offsets = [0, 96], sizes = [2, 32], strides = [1, 1]} : vector<2x128xf32> to vector<2x32xf32>
    %60 = arith.mulf %57, %43 : vector<2x32xf32>
    %61 = arith.mulf %56, %58 : vector<2x32xf32>
    %62 = arith.addf %60, %61 : vector<2x32xf32>
    %63 = math.tanh %62 : vector<2x32xf32>
    %64 = arith.mulf %59, %63 : vector<2x32xf32>
    %c4 = arith.constant 4 : index
    %c0_18 = arith.constant 0 : index
    %65 = vector.load %arg20[%c4, %c0_18] : memref<16x32xf32, #tpu.memory_space<vmem>>, vector<2x32xf32>
    tpu.vector_store %arg20[%c4, %c0_18], %64 {strides = array<i32>} : memref<16x32xf32, #tpu.memory_space<vmem>>, vector<2x32xf32>,
    %66 = vector.extract_strided_slice %5 {offsets = [6, 0], sizes = [2, 128], strides = [1, 1]} : vector<16x128xf32> to vector<2x128xf32>
    %cst_19 = arith.constant dense<0.000000e+00> : vector<2x128xf32>
    %67 = tpu.matmul %64, %6, %cst_19 {dimension_numbers = #tpu.dot_dimension_numbers<[1], [0], [0], [1], [0, 0, 1, 1], [], []>} : vector<2x32xf32>, vector<32x128xf32>, vector<2x128xf32> -> vector<2x128xf32>
    %68 = arith.addf %66, %67 : vector<2x128xf32>
    %69 = arith.negf %68 : vector<2x128xf32>
    %70 = math.exp %69 : vector<2x128xf32>
    %cst_20 = arith.constant 1.000000e+00 : f32
    %71 = vector.broadcast %cst_20 : f32 to vector<2x128xf32>
    %72 = arith.addf %71, %70 : vector<2x128xf32>
    %73 = arith.divf %71, %72 : vector<2x128xf32>
    %74 = math.tanh %68 : vector<2x128xf32>
    %75 = vector.extract_strided_slice %73 {offsets = [0, 0], sizes = [2, 32], strides = [1, 1]} : vector<2x128xf32> to vector<2x32xf32>
    %76 = vector.extract_strided_slice %73 {offsets = [0, 32], sizes = [2, 32], strides = [1, 1]} : vector<2x128xf32> to vector<2x32xf32>
    %77 = vector.extract_strided_slice %74 {offsets = [0, 64], sizes = [2, 32], strides = [1, 1]} : vector<2x128xf32> to vector<2x32xf32>
    %78 = vector.extract_strided_slice %73 {offsets = [0, 96], sizes = [2, 32], strides = [1, 1]} : vector<2x128xf32> to vector<2x32xf32>
    %79 = arith.mulf %76, %62 : vector<2x32xf32>
    %80 = arith.mulf %75, %77 : vector<2x32xf32>
    %81 = arith.addf %79, %80 : vector<2x32xf32>
    %82 = math.tanh %81 : vector<2x32xf32>
    %83 = arith.mulf %78, %82 : vector<2x32xf32>
    %c6 = arith.constant 6 : index
    %c0_21 = arith.constant 0 : index
    %84 = vector.load %arg20[%c6, %c0_21] : memref<16x32xf32, #tpu.memory_space<vmem>>, vector<2x32xf32>
    tpu.vector_store %arg20[%c6, %c0_21], %83 {strides = array<i32>} : memref<16x32xf32, #tpu.memory_space<vmem>>, vector<2x32xf32>,
    %85 = vector.extract_strided_slice %5 {offsets = [8, 0], sizes = [2, 128], strides = [1, 1]} : vector<16x128xf32> to vector<2x128xf32>
    %cst_22 = arith.constant dense<0.000000e+00> : vector<2x128xf32>
    %86 = tpu.matmul %83, %6, %cst_22 {dimension_numbers = #tpu.dot_dimension_numbers<[1], [0], [0], [1], [0, 0, 1, 1], [], []>} : vector<2x32xf32>, vector<32x128xf32>, vector<2x128xf32> -> vector<2x128xf32>
    %87 = arith.addf %85, %86 : vector<2x128xf32>
    %88 = arith.negf %87 : vector<2x128xf32>
    %89 = math.exp %88 : vector<2x128xf32>
    %cst_23 = arith.constant 1.000000e+00 : f32
    %90 = vector.broadcast %cst_23 : f32 to vector<2x128xf32>
    %91 = arith.addf %90, %89 : vector<2x128xf32>
    %92 = arith.divf %90, %91 : vector<2x128xf32>
    %93 = math.tanh %87 : vector<2x128xf32>
    %94 = vector.extract_strided_slice %92 {offsets = [0, 0], sizes = [2, 32], strides = [1, 1]} : vector<2x128xf32> to vector<2x32xf32>
    %95 = vector.extract_strided_slice %92 {offsets = [0, 32], sizes = [2, 32], strides = [1, 1]} : vector<2x128xf32> to vector<2x32xf32>
    %96 = vector.extract_strided_slice %93 {offsets = [0, 64], sizes = [2, 32], strides = [1, 1]} : vector<2x128xf32> to vector<2x32xf32>
    %97 = vector.extract_strided_slice %92 {offsets = [0, 96], sizes = [2, 32], strides = [1, 1]} : vector<2x128xf32> to vector<2x32xf32>
    %98 = arith.mulf %95, %81 : vector<2x32xf32>
    %99 = arith.mulf %94, %96 : vector<2x32xf32>
    %100 = arith.addf %98, %99 : vector<2x32xf32>
    %101 = math.tanh %100 : vector<2x32xf32>
    %102 = arith.mulf %97, %101 : vector<2x32xf32>
    %c8 = arith.constant 8 : index
    %c0_24 = arith.constant 0 : index
    %103 = vector.load %arg20[%c8, %c0_24] : memref<16x32xf32, #tpu.memory_space<vmem>>, vector<2x32xf32>
    tpu.vector_store %arg20[%c8, %c0_24], %102 {strides = array<i32>} : memref<16x32xf32, #tpu.memory_space<vmem>>, vector<2x32xf32>,
    %104 = vector.extract_strided_slice %5 {offsets = [10, 0], sizes = [2, 128], strides = [1, 1]} : vector<16x128xf32> to vector<2x128xf32>
    %cst_25 = arith.constant dense<0.000000e+00> : vector<2x128xf32>
    %105 = tpu.matmul %102, %6, %cst_25 {dimension_numbers = #tpu.dot_dimension_numbers<[1], [0], [0], [1], [0, 0, 1, 1], [], []>} : vector<2x32xf32>, vector<32x128xf32>, vector<2x128xf32> -> vector<2x128xf32>
    %106 = arith.addf %104, %105 : vector<2x128xf32>
    %107 = arith.negf %106 : vector<2x128xf32>
    %108 = math.exp %107 : vector<2x128xf32>
    %cst_26 = arith.constant 1.000000e+00 : f32
    %109 = vector.broadcast %cst_26 : f32 to vector<2x128xf32>
    %110 = arith.addf %109, %108 : vector<2x128xf32>
    %111 = arith.divf %109, %110 : vector<2x128xf32>
    %112 = math.tanh %106 : vector<2x128xf32>
    %113 = vector.extract_strided_slice %111 {offsets = [0, 0], sizes = [2, 32], strides = [1, 1]} : vector<2x128xf32> to vector<2x32xf32>
    %114 = vector.extract_strided_slice %111 {offsets = [0, 32], sizes = [2, 32], strides = [1, 1]} : vector<2x128xf32> to vector<2x32xf32>
    %115 = vector.extract_strided_slice %112 {offsets = [0, 64], sizes = [2, 32], strides = [1, 1]} : vector<2x128xf32> to vector<2x32xf32>
    %116 = vector.extract_strided_slice %111 {offsets = [0, 96], sizes = [2, 32], strides = [1, 1]} : vector<2x128xf32> to vector<2x32xf32>
    %117 = arith.mulf %114, %100 : vector<2x32xf32>
    %118 = arith.mulf %113, %115 : vector<2x32xf32>
    %119 = arith.addf %117, %118 : vector<2x32xf32>
    %120 = math.tanh %119 : vector<2x32xf32>
    %121 = arith.mulf %116, %120 : vector<2x32xf32>
    %c10 = arith.constant 10 : index
    %c0_27 = arith.constant 0 : index
    %122 = vector.load %arg20[%c10, %c0_27] : memref<16x32xf32, #tpu.memory_space<vmem>>, vector<2x32xf32>
    tpu.vector_store %arg20[%c10, %c0_27], %121 {strides = array<i32>} : memref<16x32xf32, #tpu.memory_space<vmem>>, vector<2x32xf32>,
    %123 = vector.extract_strided_slice %5 {offsets = [12, 0], sizes = [2, 128], strides = [1, 1]} : vector<16x128xf32> to vector<2x128xf32>
    %cst_28 = arith.constant dense<0.000000e+00> : vector<2x128xf32>
    %124 = tpu.matmul %121, %6, %cst_28 {dimension_numbers = #tpu.dot_dimension_numbers<[1], [0], [0], [1], [0, 0, 1, 1], [], []>} : vector<2x32xf32>, vector<32x128xf32>, vector<2x128xf32> -> vector<2x128xf32>
    %125 = arith.addf %123, %124 : vector<2x128xf32>
    %126 = arith.negf %125 : vector<2x128xf32>
    %127 = math.exp %126 : vector<2x128xf32>
    %cst_29 = arith.constant 1.000000e+00 : f32
    %128 = vector.broadcast %cst_29 : f32 to vector<2x128xf32>
    %129 = arith.addf %128, %127 : vector<2x128xf32>
    %130 = arith.divf %128, %129 : vector<2x128xf32>
    %131 = math.tanh %125 : vector<2x128xf32>
    %132 = vector.extract_strided_slice %130 {offsets = [0, 0], sizes = [2, 32], strides = [1, 1]} : vector<2x128xf32> to vector<2x32xf32>
    %133 = vector.extract_strided_slice %130 {offsets = [0, 32], sizes = [2, 32], strides = [1, 1]} : vector<2x128xf32> to vector<2x32xf32>
    %134 = vector.extract_strided_slice %131 {offsets = [0, 64], sizes = [2, 32], strides = [1, 1]} : vector<2x128xf32> to vector<2x32xf32>
    %135 = vector.extract_strided_slice %130 {offsets = [0, 96], sizes = [2, 32], strides = [1, 1]} : vector<2x128xf32> to vector<2x32xf32>
    %136 = arith.mulf %133, %119 : vector<2x32xf32>
    %137 = arith.mulf %132, %134 : vector<2x32xf32>
    %138 = arith.addf %136, %137 : vector<2x32xf32>
    %139 = math.tanh %138 : vector<2x32xf32>
    %140 = arith.mulf %135, %139 : vector<2x32xf32>
    %c12 = arith.constant 12 : index
    %c0_30 = arith.constant 0 : index
    %141 = vector.load %arg20[%c12, %c0_30] : memref<16x32xf32, #tpu.memory_space<vmem>>, vector<2x32xf32>
    tpu.vector_store %arg20[%c12, %c0_30], %140 {strides = array<i32>} : memref<16x32xf32, #tpu.memory_space<vmem>>, vector<2x32xf32>,
    %142 = vector.extract_strided_slice %5 {offsets = [14, 0], sizes = [2, 128], strides = [1, 1]} : vector<16x128xf32> to vector<2x128xf32>
    %cst_31 = arith.constant dense<0.000000e+00> : vector<2x128xf32>
    %143 = tpu.matmul %140, %6, %cst_31 {dimension_numbers = #tpu.dot_dimension_numbers<[1], [0], [0], [1], [0, 0, 1, 1], [], []>} : vector<2x32xf32>, vector<32x128xf32>, vector<2x128xf32> -> vector<2x128xf32>
    %144 = arith.addf %142, %143 : vector<2x128xf32>
    %145 = arith.negf %144 : vector<2x128xf32>
    %146 = math.exp %145 : vector<2x128xf32>
    %cst_32 = arith.constant 1.000000e+00 : f32
    %147 = vector.broadcast %cst_32 : f32 to vector<2x128xf32>
    %148 = arith.addf %147, %146 : vector<2x128xf32>
    %149 = arith.divf %147, %148 : vector<2x128xf32>
    %150 = math.tanh %144 : vector<2x128xf32>
    %151 = vector.extract_strided_slice %149 {offsets = [0, 0], sizes = [2, 32], strides = [1, 1]} : vector<2x128xf32> to vector<2x32xf32>
    %152 = vector.extract_strided_slice %149 {offsets = [0, 32], sizes = [2, 32], strides = [1, 1]} : vector<2x128xf32> to vector<2x32xf32>
    %153 = vector.extract_strided_slice %150 {offsets = [0, 64], sizes = [2, 32], strides = [1, 1]} : vector<2x128xf32> to vector<2x32xf32>
    %154 = vector.extract_strided_slice %149 {offsets = [0, 96], sizes = [2, 32], strides = [1, 1]} : vector<2x128xf32> to vector<2x32xf32>
    %155 = arith.mulf %152, %138 : vector<2x32xf32>
    %156 = arith.mulf %151, %153 : vector<2x32xf32>
    %157 = arith.addf %155, %156 : vector<2x32xf32>
    %158 = math.tanh %157 : vector<2x32xf32>
    %159 = arith.mulf %154, %158 : vector<2x32xf32>
    %c14 = arith.constant 14 : index
    %c0_33 = arith.constant 0 : index
    %160 = vector.load %arg20[%c14, %c0_33] : memref<16x32xf32, #tpu.memory_space<vmem>>, vector<2x32xf32>
    tpu.vector_store %arg20[%c14, %c0_33], %159 {strides = array<i32>} : memref<16x32xf32, #tpu.memory_space<vmem>>, vector<2x32xf32>,
    %c0_34 = arith.constant 0 : index
    %c0_35 = arith.constant 0 : index
    %161 = vector.load %arg20[%c0_34, %c0_35] : memref<16x32xf32, #tpu.memory_space<vmem>>, vector<16x32xf32>
    %c0_36 = arith.constant 0 : index
    %c0_37 = arith.constant 0 : index
    %162 = vector.load %arg5[%c0_36, %c0_37] : memref<32x128xf32, #tpu.memory_space<vmem>>, vector<32x128xf32>
    %cst_38 = arith.constant dense<0.000000e+00> : vector<16x128xf32>
    %163 = tpu.matmul %161, %162, %cst_38 {dimension_numbers = #tpu.dot_dimension_numbers<[1], [0], [0], [1], [0, 0, 1, 1], [], []>} : vector<16x32xf32>, vector<32x128xf32>, vector<16x128xf32> -> vector<16x128xf32>
    %c0_39 = arith.constant 0 : index
    %c0_40 = arith.constant 0 : index
    %164 = vector.load %arg7[%c0_39, %c0_40] : memref<1x128xf32, #tpu.memory_space<vmem>>, vector<1x128xf32>
    %165 = vector.broadcast %164 : vector<1x128xf32> to vector<16x128xf32>
    %166 = arith.addf %163, %165 : vector<16x128xf32>
    %c0_41 = arith.constant 0 : index
    %c0_42 = arith.constant 0 : index
    %167 = vector.load %arg6[%c0_41, %c0_42] : memref<32x128xf32, #tpu.memory_space<vmem>>, vector<32x128xf32>
    %cst_43 = arith.constant 0.000000e+00 : f32
    %168 = vector.broadcast %cst_43 : f32 to vector<2x32xf32>
    %cst_44 = arith.constant 0.000000e+00 : f32
    %169 = vector.broadcast %cst_44 : f32 to vector<2x32xf32>
    %170 = vector.extract_strided_slice %166 {offsets = [0, 0], sizes = [2, 128], strides = [1, 1]} : vector<16x128xf32> to vector<2x128xf32>
    %cst_45 = arith.constant dense<0.000000e+00> : vector<2x128xf32>
    %171 = tpu.matmul %168, %167, %cst_45 {dimension_numbers = #tpu.dot_dimension_numbers<[1], [0], [0], [1], [0, 0, 1, 1], [], []>} : vector<2x32xf32>, vector<32x128xf32>, vector<2x128xf32> -> vector<2x128xf32>
    %172 = arith.addf %170, %171 : vector<2x128xf32>
    %173 = arith.negf %172 : vector<2x128xf32>
    %174 = math.exp %173 : vector<2x128xf32>
    %cst_46 = arith.constant 1.000000e+00 : f32
    %175 = vector.broadcast %cst_46 : f32 to vector<2x128xf32>
    %176 = arith.addf %175, %174 : vector<2x128xf32>
    %177 = arith.divf %175, %176 : vector<2x128xf32>
    %178 = math.tanh %172 : vector<2x128xf32>
    %179 = vector.extract_strided_slice %177 {offsets = [0, 0], sizes = [2, 32], strides = [1, 1]} : vector<2x128xf32> to vector<2x32xf32>
    %180 = vector.extract_strided_slice %177 {offsets = [0, 32], sizes = [2, 32], strides = [1, 1]} : vector<2x128xf32> to vector<2x32xf32>
    %181 = vector.extract_strided_slice %178 {offsets = [0, 64], sizes = [2, 32], strides = [1, 1]} : vector<2x128xf32> to vector<2x32xf32>
    %182 = vector.extract_strided_slice %177 {offsets = [0, 96], sizes = [2, 32], strides = [1, 1]} : vector<2x128xf32> to vector<2x32xf32>
    %183 = arith.mulf %180, %169 : vector<2x32xf32>
    %184 = arith.mulf %179, %181 : vector<2x32xf32>
    %185 = arith.addf %183, %184 : vector<2x32xf32>
    %186 = math.tanh %185 : vector<2x32xf32>
    %187 = arith.mulf %182, %186 : vector<2x32xf32>
    %c0_47 = arith.constant 0 : index
    %c0_48 = arith.constant 0 : index
    %188 = vector.load %arg21[%c0_47, %c0_48] : memref<16x32xf32, #tpu.memory_space<vmem>>, vector<2x32xf32>
    tpu.vector_store %arg21[%c0_47, %c0_48], %187 {strides = array<i32>} : memref<16x32xf32, #tpu.memory_space<vmem>>, vector<2x32xf32>,
    %189 = vector.extract_strided_slice %166 {offsets = [2, 0], sizes = [2, 128], strides = [1, 1]} : vector<16x128xf32> to vector<2x128xf32>
    %cst_49 = arith.constant dense<0.000000e+00> : vector<2x128xf32>
    %190 = tpu.matmul %187, %167, %cst_49 {dimension_numbers = #tpu.dot_dimension_numbers<[1], [0], [0], [1], [0, 0, 1, 1], [], []>} : vector<2x32xf32>, vector<32x128xf32>, vector<2x128xf32> -> vector<2x128xf32>
    %191 = arith.addf %189, %190 : vector<2x128xf32>
    %192 = arith.negf %191 : vector<2x128xf32>
    %193 = math.exp %192 : vector<2x128xf32>
    %cst_50 = arith.constant 1.000000e+00 : f32
    %194 = vector.broadcast %cst_50 : f32 to vector<2x128xf32>
    %195 = arith.addf %194, %193 : vector<2x128xf32>
    %196 = arith.divf %194, %195 : vector<2x128xf32>
    %197 = math.tanh %191 : vector<2x128xf32>
    %198 = vector.extract_strided_slice %196 {offsets = [0, 0], sizes = [2, 32], strides = [1, 1]} : vector<2x128xf32> to vector<2x32xf32>
    %199 = vector.extract_strided_slice %196 {offsets = [0, 32], sizes = [2, 32], strides = [1, 1]} : vector<2x128xf32> to vector<2x32xf32>
    %200 = vector.extract_strided_slice %197 {offsets = [0, 64], sizes = [2, 32], strides = [1, 1]} : vector<2x128xf32> to vector<2x32xf32>
    %201 = vector.extract_strided_slice %196 {offsets = [0, 96], sizes = [2, 32], strides = [1, 1]} : vector<2x128xf32> to vector<2x32xf32>
    %202 = arith.mulf %199, %185 : vector<2x32xf32>
    %203 = arith.mulf %198, %200 : vector<2x32xf32>
    %204 = arith.addf %202, %203 : vector<2x32xf32>
    %205 = math.tanh %204 : vector<2x32xf32>
    %206 = arith.mulf %201, %205 : vector<2x32xf32>
    %c2_51 = arith.constant 2 : index
    %c0_52 = arith.constant 0 : index
    %207 = vector.load %arg21[%c2_51, %c0_52] : memref<16x32xf32, #tpu.memory_space<vmem>>, vector<2x32xf32>
    tpu.vector_store %arg21[%c2_51, %c0_52], %206 {strides = array<i32>} : memref<16x32xf32, #tpu.memory_space<vmem>>, vector<2x32xf32>,
    %208 = vector.extract_strided_slice %166 {offsets = [4, 0], sizes = [2, 128], strides = [1, 1]} : vector<16x128xf32> to vector<2x128xf32>
    %cst_53 = arith.constant dense<0.000000e+00> : vector<2x128xf32>
    %209 = tpu.matmul %206, %167, %cst_53 {dimension_numbers = #tpu.dot_dimension_numbers<[1], [0], [0], [1], [0, 0, 1, 1], [], []>} : vector<2x32xf32>, vector<32x128xf32>, vector<2x128xf32> -> vector<2x128xf32>
    %210 = arith.addf %208, %209 : vector<2x128xf32>
    %211 = arith.negf %210 : vector<2x128xf32>
    %212 = math.exp %211 : vector<2x128xf32>
    %cst_54 = arith.constant 1.000000e+00 : f32
    %213 = vector.broadcast %cst_54 : f32 to vector<2x128xf32>
    %214 = arith.addf %213, %212 : vector<2x128xf32>
    %215 = arith.divf %213, %214 : vector<2x128xf32>
    %216 = math.tanh %210 : vector<2x128xf32>
    %217 = vector.extract_strided_slice %215 {offsets = [0, 0], sizes = [2, 32], strides = [1, 1]} : vector<2x128xf32> to vector<2x32xf32>
    %218 = vector.extract_strided_slice %215 {offsets = [0, 32], sizes = [2, 32], strides = [1, 1]} : vector<2x128xf32> to vector<2x32xf32>
    %219 = vector.extract_strided_slice %216 {offsets = [0, 64], sizes = [2, 32], strides = [1, 1]} : vector<2x128xf32> to vector<2x32xf32>
    %220 = vector.extract_strided_slice %215 {offsets = [0, 96], sizes = [2, 32], strides = [1, 1]} : vector<2x128xf32> to vector<2x32xf32>
    %221 = arith.mulf %218, %204 : vector<2x32xf32>
    %222 = arith.mulf %217, %219 : vector<2x32xf32>
    %223 = arith.addf %221, %222 : vector<2x32xf32>
    %224 = math.tanh %223 : vector<2x32xf32>
    %225 = arith.mulf %220, %224 : vector<2x32xf32>
    %c4_55 = arith.constant 4 : index
    %c0_56 = arith.constant 0 : index
    %226 = vector.load %arg21[%c4_55, %c0_56] : memref<16x32xf32, #tpu.memory_space<vmem>>, vector<2x32xf32>
    tpu.vector_store %arg21[%c4_55, %c0_56], %225 {strides = array<i32>} : memref<16x32xf32, #tpu.memory_space<vmem>>, vector<2x32xf32>,
    %227 = vector.extract_strided_slice %166 {offsets = [6, 0], sizes = [2, 128], strides = [1, 1]} : vector<16x128xf32> to vector<2x128xf32>
    %cst_57 = arith.constant dense<0.000000e+00> : vector<2x128xf32>
    %228 = tpu.matmul %225, %167, %cst_57 {dimension_numbers = #tpu.dot_dimension_numbers<[1], [0], [0], [1], [0, 0, 1, 1], [], []>} : vector<2x32xf32>, vector<32x128xf32>, vector<2x128xf32> -> vector<2x128xf32>
    %229 = arith.addf %227, %228 : vector<2x128xf32>
    %230 = arith.negf %229 : vector<2x128xf32>
    %231 = math.exp %230 : vector<2x128xf32>
    %cst_58 = arith.constant 1.000000e+00 : f32
    %232 = vector.broadcast %cst_58 : f32 to vector<2x128xf32>
    %233 = arith.addf %232, %231 : vector<2x128xf32>
    %234 = arith.divf %232, %233 : vector<2x128xf32>
    %235 = math.tanh %229 : vector<2x128xf32>
    %236 = vector.extract_strided_slice %234 {offsets = [0, 0], sizes = [2, 32], strides = [1, 1]} : vector<2x128xf32> to vector<2x32xf32>
    %237 = vector.extract_strided_slice %234 {offsets = [0, 32], sizes = [2, 32], strides = [1, 1]} : vector<2x128xf32> to vector<2x32xf32>
    %238 = vector.extract_strided_slice %235 {offsets = [0, 64], sizes = [2, 32], strides = [1, 1]} : vector<2x128xf32> to vector<2x32xf32>
    %239 = vector.extract_strided_slice %234 {offsets = [0, 96], sizes = [2, 32], strides = [1, 1]} : vector<2x128xf32> to vector<2x32xf32>
    %240 = arith.mulf %237, %223 : vector<2x32xf32>
    %241 = arith.mulf %236, %238 : vector<2x32xf32>
    %242 = arith.addf %240, %241 : vector<2x32xf32>
    %243 = math.tanh %242 : vector<2x32xf32>
    %244 = arith.mulf %239, %243 : vector<2x32xf32>
    %c6_59 = arith.constant 6 : index
    %c0_60 = arith.constant 0 : index
    %245 = vector.load %arg21[%c6_59, %c0_60] : memref<16x32xf32, #tpu.memory_space<vmem>>, vector<2x32xf32>
    tpu.vector_store %arg21[%c6_59, %c0_60], %244 {strides = array<i32>} : memref<16x32xf32, #tpu.memory_space<vmem>>, vector<2x32xf32>,
    %246 = vector.extract_strided_slice %166 {offsets = [8, 0], sizes = [2, 128], strides = [1, 1]} : vector<16x128xf32> to vector<2x128xf32>
    %cst_61 = arith.constant dense<0.000000e+00> : vector<2x128xf32>
    %247 = tpu.matmul %244, %167, %cst_61 {dimension_numbers = #tpu.dot_dimension_numbers<[1], [0], [0], [1], [0, 0, 1, 1], [], []>} : vector<2x32xf32>, vector<32x128xf32>, vector<2x128xf32> -> vector<2x128xf32>
    %248 = arith.addf %246, %247 : vector<2x128xf32>
    %249 = arith.negf %248 : vector<2x128xf32>
    %250 = math.exp %249 : vector<2x128xf32>
    %cst_62 = arith.constant 1.000000e+00 : f32
    %251 = vector.broadcast %cst_62 : f32 to vector<2x128xf32>
    %252 = arith.addf %251, %250 : vector<2x128xf32>
    %253 = arith.divf %251, %252 : vector<2x128xf32>
    %254 = math.tanh %248 : vector<2x128xf32>
    %255 = vector.extract_strided_slice %253 {offsets = [0, 0], sizes = [2, 32], strides = [1, 1]} : vector<2x128xf32> to vector<2x32xf32>
    %256 = vector.extract_strided_slice %253 {offsets = [0, 32], sizes = [2, 32], strides = [1, 1]} : vector<2x128xf32> to vector<2x32xf32>
    %257 = vector.extract_strided_slice %254 {offsets = [0, 64], sizes = [2, 32], strides = [1, 1]} : vector<2x128xf32> to vector<2x32xf32>
    %258 = vector.extract_strided_slice %253 {offsets = [0, 96], sizes = [2, 32], strides = [1, 1]} : vector<2x128xf32> to vector<2x32xf32>
    %259 = arith.mulf %256, %242 : vector<2x32xf32>
    %260 = arith.mulf %255, %257 : vector<2x32xf32>
    %261 = arith.addf %259, %260 : vector<2x32xf32>
    %262 = math.tanh %261 : vector<2x32xf32>
    %263 = arith.mulf %258, %262 : vector<2x32xf32>
    %c8_63 = arith.constant 8 : index
    %c0_64 = arith.constant 0 : index
    %264 = vector.load %arg21[%c8_63, %c0_64] : memref<16x32xf32, #tpu.memory_space<vmem>>, vector<2x32xf32>
    tpu.vector_store %arg21[%c8_63, %c0_64], %263 {strides = array<i32>} : memref<16x32xf32, #tpu.memory_space<vmem>>, vector<2x32xf32>,
    %265 = vector.extract_strided_slice %166 {offsets = [10, 0], sizes = [2, 128], strides = [1, 1]} : vector<16x128xf32> to vector<2x128xf32>
    %cst_65 = arith.constant dense<0.000000e+00> : vector<2x128xf32>
    %266 = tpu.matmul %263, %167, %cst_65 {dimension_numbers = #tpu.dot_dimension_numbers<[1], [0], [0], [1], [0, 0, 1, 1], [], []>} : vector<2x32xf32>, vector<32x128xf32>, vector<2x128xf32> -> vector<2x128xf32>
    %267 = arith.addf %265, %266 : vector<2x128xf32>
    %268 = arith.negf %267 : vector<2x128xf32>
    %269 = math.exp %268 : vector<2x128xf32>
    %cst_66 = arith.constant 1.000000e+00 : f32
    %270 = vector.broadcast %cst_66 : f32 to vector<2x128xf32>
    %271 = arith.addf %270, %269 : vector<2x128xf32>
    %272 = arith.divf %270, %271 : vector<2x128xf32>
    %273 = math.tanh %267 : vector<2x128xf32>
    %274 = vector.extract_strided_slice %272 {offsets = [0, 0], sizes = [2, 32], strides = [1, 1]} : vector<2x128xf32> to vector<2x32xf32>
    %275 = vector.extract_strided_slice %272 {offsets = [0, 32], sizes = [2, 32], strides = [1, 1]} : vector<2x128xf32> to vector<2x32xf32>
    %276 = vector.extract_strided_slice %273 {offsets = [0, 64], sizes = [2, 32], strides = [1, 1]} : vector<2x128xf32> to vector<2x32xf32>
    %277 = vector.extract_strided_slice %272 {offsets = [0, 96], sizes = [2, 32], strides = [1, 1]} : vector<2x128xf32> to vector<2x32xf32>
    %278 = arith.mulf %275, %261 : vector<2x32xf32>
    %279 = arith.mulf %274, %276 : vector<2x32xf32>
    %280 = arith.addf %278, %279 : vector<2x32xf32>
    %281 = math.tanh %280 : vector<2x32xf32>
    %282 = arith.mulf %277, %281 : vector<2x32xf32>
    %c10_67 = arith.constant 10 : index
    %c0_68 = arith.constant 0 : index
    %283 = vector.load %arg21[%c10_67, %c0_68] : memref<16x32xf32, #tpu.memory_space<vmem>>, vector<2x32xf32>
    tpu.vector_store %arg21[%c10_67, %c0_68], %282 {strides = array<i32>} : memref<16x32xf32, #tpu.memory_space<vmem>>, vector<2x32xf32>,
    %284 = vector.extract_strided_slice %166 {offsets = [12, 0], sizes = [2, 128], strides = [1, 1]} : vector<16x128xf32> to vector<2x128xf32>
    %cst_69 = arith.constant dense<0.000000e+00> : vector<2x128xf32>
    %285 = tpu.matmul %282, %167, %cst_69 {dimension_numbers = #tpu.dot_dimension_numbers<[1], [0], [0], [1], [0, 0, 1, 1], [], []>} : vector<2x32xf32>, vector<32x128xf32>, vector<2x128xf32> -> vector<2x128xf32>
    %286 = arith.addf %284, %285 : vector<2x128xf32>
    %287 = arith.negf %286 : vector<2x128xf32>
    %288 = math.exp %287 : vector<2x128xf32>
    %cst_70 = arith.constant 1.000000e+00 : f32
    %289 = vector.broadcast %cst_70 : f32 to vector<2x128xf32>
    %290 = arith.addf %289, %288 : vector<2x128xf32>
    %291 = arith.divf %289, %290 : vector<2x128xf32>
    %292 = math.tanh %286 : vector<2x128xf32>
    %293 = vector.extract_strided_slice %291 {offsets = [0, 0], sizes = [2, 32], strides = [1, 1]} : vector<2x128xf32> to vector<2x32xf32>
    %294 = vector.extract_strided_slice %291 {offsets = [0, 32], sizes = [2, 32], strides = [1, 1]} : vector<2x128xf32> to vector<2x32xf32>
    %295 = vector.extract_strided_slice %292 {offsets = [0, 64], sizes = [2, 32], strides = [1, 1]} : vector<2x128xf32> to vector<2x32xf32>
    %296 = vector.extract_strided_slice %291 {offsets = [0, 96], sizes = [2, 32], strides = [1, 1]} : vector<2x128xf32> to vector<2x32xf32>
    %297 = arith.mulf %294, %280 : vector<2x32xf32>
    %298 = arith.mulf %293, %295 : vector<2x32xf32>
    %299 = arith.addf %297, %298 : vector<2x32xf32>
    %300 = math.tanh %299 : vector<2x32xf32>
    %301 = arith.mulf %296, %300 : vector<2x32xf32>
    %c12_71 = arith.constant 12 : index
    %c0_72 = arith.constant 0 : index
    %302 = vector.load %arg21[%c12_71, %c0_72] : memref<16x32xf32, #tpu.memory_space<vmem>>, vector<2x32xf32>
    tpu.vector_store %arg21[%c12_71, %c0_72], %301 {strides = array<i32>} : memref<16x32xf32, #tpu.memory_space<vmem>>, vector<2x32xf32>,
    %303 = vector.extract_strided_slice %166 {offsets = [14, 0], sizes = [2, 128], strides = [1, 1]} : vector<16x128xf32> to vector<2x128xf32>
    %cst_73 = arith.constant dense<0.000000e+00> : vector<2x128xf32>
    %304 = tpu.matmul %301, %167, %cst_73 {dimension_numbers = #tpu.dot_dimension_numbers<[1], [0], [0], [1], [0, 0, 1, 1], [], []>} : vector<2x32xf32>, vector<32x128xf32>, vector<2x128xf32> -> vector<2x128xf32>
    %305 = arith.addf %303, %304 : vector<2x128xf32>
    %306 = arith.negf %305 : vector<2x128xf32>
    %307 = math.exp %306 : vector<2x128xf32>
    %cst_74 = arith.constant 1.000000e+00 : f32
    %308 = vector.broadcast %cst_74 : f32 to vector<2x128xf32>
    %309 = arith.addf %308, %307 : vector<2x128xf32>
    %310 = arith.divf %308, %309 : vector<2x128xf32>
    %311 = math.tanh %305 : vector<2x128xf32>
    %312 = vector.extract_strided_slice %310 {offsets = [0, 0], sizes = [2, 32], strides = [1, 1]} : vector<2x128xf32> to vector<2x32xf32>
    %313 = vector.extract_strided_slice %310 {offsets = [0, 32], sizes = [2, 32], strides = [1, 1]} : vector<2x128xf32> to vector<2x32xf32>
    %314 = vector.extract_strided_slice %311 {offsets = [0, 64], sizes = [2, 32], strides = [1, 1]} : vector<2x128xf32> to vector<2x32xf32>
    %315 = vector.extract_strided_slice %310 {offsets = [0, 96], sizes = [2, 32], strides = [1, 1]} : vector<2x128xf32> to vector<2x32xf32>
    %316 = arith.mulf %313, %299 : vector<2x32xf32>
    %317 = arith.mulf %312, %314 : vector<2x32xf32>
    %318 = arith.addf %316, %317 : vector<2x32xf32>
    %319 = math.tanh %318 : vector<2x32xf32>
    %320 = arith.mulf %315, %319 : vector<2x32xf32>
    %c14_75 = arith.constant 14 : index
    %c0_76 = arith.constant 0 : index
    %321 = vector.load %arg21[%c14_75, %c0_76] : memref<16x32xf32, #tpu.memory_space<vmem>>, vector<2x32xf32>
    tpu.vector_store %arg21[%c14_75, %c0_76], %320 {strides = array<i32>} : memref<16x32xf32, #tpu.memory_space<vmem>>, vector<2x32xf32>,
    %c0_77 = arith.constant 0 : index
    %c0_78 = arith.constant 0 : index
    %322 = vector.load %arg1[%c0_77, %c0_78] : memref<8x8xf32, #tpu.memory_space<vmem>>, vector<8x8xf32>
    %c0_79 = arith.constant 0 : index
    %c0_80 = arith.constant 0 : index
    %323 = vector.load %arg8[%c0_79, %c0_80] : memref<8x32xf32, #tpu.memory_space<vmem>>, vector<8x32xf32>
    %cst_81 = arith.constant dense<0.000000e+00> : vector<8x32xf32>
    %324 = tpu.matmul %322, %323, %cst_81 {dimension_numbers = #tpu.dot_dimension_numbers<[1], [0], [0], [1], [0, 0, 1, 1], [], []>} : vector<8x8xf32>, vector<8x32xf32>, vector<8x32xf32> -> vector<8x32xf32>
    %c0_82 = arith.constant 0 : index
    %c0_83 = arith.constant 0 : index
    %325 = vector.load %arg9[%c0_82, %c0_83] : memref<1x32xf32, #tpu.memory_space<vmem>>, vector<1x32xf32>
    %326 = vector.broadcast %325 : vector<1x32xf32> to vector<8x32xf32>
    %327 = arith.addf %324, %326 : vector<8x32xf32>
    %cst_84 = arith.constant 0.000000e+00 : f32
    %328 = vector.broadcast %cst_84 : f32 to vector<8x32xf32>
    %329 = arith.maximumf %327, %328 : vector<8x32xf32>
    %c0_85 = arith.constant 0 : index
    %c0_86 = arith.constant 0 : index
    %330 = vector.load %arg10[%c0_85, %c0_86] : memref<32x8xf32, #tpu.memory_space<vmem>>, vector<32x8xf32>
    %cst_87 = arith.constant dense<0.000000e+00> : vector<8x8xf32>
    %331 = tpu.matmul %329, %330, %cst_87 {dimension_numbers = #tpu.dot_dimension_numbers<[1], [0], [0], [1], [0, 0, 1, 1], [], []>} : vector<8x32xf32>, vector<32x8xf32>, vector<8x8xf32> -> vector<8x8xf32>
    %c0_88 = arith.constant 0 : index
    %c0_89 = arith.constant 0 : index
    %332 = vector.load %arg11[%c0_88, %c0_89] : memref<1x8xf32, #tpu.memory_space<vmem>>, vector<1x8xf32>
    %333 = vector.broadcast %332 : vector<1x8xf32> to vector<8x8xf32>
    %334 = arith.addf %331, %333 : vector<8x8xf32>
    %c0_90 = arith.constant 0 : index
    %c0_91 = arith.constant 0 : index
    %335 = vector.load %arg13[%c0_90, %c0_91] : memref<8x32xf32, #tpu.memory_space<vmem>>, vector<8x32xf32>
    %cst_92 = arith.constant dense<0.000000e+00> : vector<8x32xf32>
    %336 = tpu.matmul %334, %335, %cst_92 {dimension_numbers = #tpu.dot_dimension_numbers<[1], [0], [0], [1], [0, 0, 1, 1], [], []>} : vector<8x8xf32>, vector<8x32xf32>, vector<8x32xf32> -> vector<8x32xf32>
    %c0_93 = arith.constant 0 : index
    %c0_94 = arith.constant 0 : index
    %337 = vector.load %arg21[%c0_93, %c0_94] : memref<16x32xf32, #tpu.memory_space<vmem>>, vector<16x32xf32>
    %c0_95 = arith.constant 0 : index
    %c0_96 = arith.constant 0 : index
    %338 = vector.load %arg12[%c0_95, %c0_96] : memref<32x32xf32, #tpu.memory_space<vmem>>, vector<32x32xf32>
    %cst_97 = arith.constant dense<0.000000e+00> : vector<16x32xf32>
    %339 = tpu.matmul %337, %338, %cst_97 {dimension_numbers = #tpu.dot_dimension_numbers<[1], [0], [0], [1], [0, 0, 1, 1], [], []>} : vector<16x32xf32>, vector<32x32xf32>, vector<16x32xf32> -> vector<16x32xf32>
    %340 = vector.shape_cast %339 : vector<16x32xf32> to vector<8x2x32xf32>
    %341 = vector.shape_cast %336 : vector<8x32xf32> to vector<8x1x32xf32>
    %342 = vector.broadcast %341 : vector<8x1x32xf32> to vector<8x2x32xf32>
    %343 = arith.addf %340, %342 : vector<8x2x32xf32>
    %c0_98 = arith.constant 0 : index
    %c0_99 = arith.constant 0 : index
    %344 = vector.load %arg14[%c0_98, %c0_99] : memref<1x32xf32, #tpu.memory_space<vmem>>, vector<1x32xf32>
    %345 = vector.shape_cast %344 : vector<1x32xf32> to vector<1x1x32xf32>
    %346 = vector.broadcast %345 : vector<1x1x32xf32> to vector<8x2x32xf32>
    %347 = arith.addf %343, %346 : vector<8x2x32xf32>
    %cst_100 = arith.constant 0.000000e+00 : f32
    %348 = vector.broadcast %cst_100 : f32 to vector<8x2x32xf32>
    %349 = arith.maximumf %347, %348 : vector<8x2x32xf32>
    %350 = vector.shape_cast %349 : vector<8x2x32xf32> to vector<16x32xf32>
    %c0_101 = arith.constant 0 : index
    %c0_102 = arith.constant 0 : index
    %351 = vector.load %arg15[%c0_101, %c0_102] : memref<32x32xf32, #tpu.memory_space<vmem>>, vector<32x32xf32>
    %cst_103 = arith.constant dense<0.000000e+00> : vector<16x32xf32>
    %352 = tpu.matmul %350, %351, %cst_103 {dimension_numbers = #tpu.dot_dimension_numbers<[1], [0], [0], [1], [0, 0, 1, 1], [], []>} : vector<16x32xf32>, vector<32x32xf32>, vector<16x32xf32> -> vector<16x32xf32>
    %c0_104 = arith.constant 0 : index
    %c0_105 = arith.constant 0 : index
    %353 = vector.load %arg16[%c0_104, %c0_105] : memref<1x32xf32, #tpu.memory_space<vmem>>, vector<1x32xf32>
    %354 = vector.broadcast %353 : vector<1x32xf32> to vector<16x32xf32>
    %355 = arith.addf %352, %354 : vector<16x32xf32>
    %cst_106 = arith.constant 0.000000e+00 : f32
    %356 = vector.broadcast %cst_106 : f32 to vector<16x32xf32>
    %357 = arith.maximumf %355, %356 : vector<16x32xf32>
    %c0_107 = arith.constant 0 : index
    %c0_108 = arith.constant 0 : index
    %358 = vector.load %arg17[%c0_107, %c0_108] : memref<32x1xf32, #tpu.memory_space<vmem>>, vector<32x1xf32>
    %cst_109 = arith.constant dense<0.000000e+00> : vector<16x1xf32>
    %359 = tpu.matmul %357, %358, %cst_109 {dimension_numbers = #tpu.dot_dimension_numbers<[1], [0], [0], [1], [0, 0, 1, 1], [], []>} : vector<16x32xf32>, vector<32x1xf32>, vector<16x1xf32> -> vector<16x1xf32>
    %c0_110 = arith.constant 0 : index
    %c0_111 = arith.constant 0 : index
    %360 = vector.load %arg18[%c0_110, %c0_111] : memref<1x1xf32, #tpu.memory_space<vmem>>, vector<1x1xf32>
    %361 = vector.broadcast %360 : vector<1x1xf32> to vector<16x1xf32>
    %362 = arith.addf %359, %361 : vector<16x1xf32>
    %c0_112 = arith.constant 0 : index
    %c0_113 = arith.constant 0 : index
    %363 = vector.load %arg19[%c0_112, %c0_113] : memref<16x1xf32, #tpu.memory_space<vmem>>, vector<16x1xf32>
    tpu.vector_store %arg19[%c0_112, %c0_113], %362 {strides = array<i32>} : memref<16x1xf32, #tpu.memory_space<vmem>>, vector<16x1xf32>,
    return
  }
}

</mosaic_0001>

<llo_original>
// kernel: forecast_lstm_forward.1
$region0: #{forecast_lstm_forward.1}
  #allocation0 [shape = 'u32[]', space=smem, size = 0x4, offset = 0x4, fixed_abs, tag = 'smem constant byte address 0x4 - core index']
  #allocation1 [shape = 'u32[144,128]{1,0:T(1,128)}', space=vmem, size = 0x12000, scoped, tag = 'internal scratch']
  #allocation2 [shape = 'f32[16,32]{1,0:T(8,128)}', space=vmem, size = 0x2000, scoped, tag = 'scratch operand']
  #allocation3 [shape = 'f32[16,32]{1,0:T(8,128)}', space=vmem, size = 0x2000, scoped, tag = 'scratch operand']
  #allocation4 [shape = 'f32[1,1]{1,0:T(1,128)S(1)}', space=vmem, size = 0x200, scoped, tag = 'scoped memory for forecast_lstm_forward.1']
  %s0 = inlined_call_operand.vmem [shape: f32[16,4], index: 0, kind: input, shape index: {}]
  %s1 = inlined_call_operand.vmem [shape: f32[8,8], index: 1, kind: input, shape index: {}]
  %s2 = inlined_call_operand.vmem [shape: f32[4,128], index: 2, kind: input, shape index: {}]
  %s3 = inlined_call_operand.vmem [shape: f32[32,128], index: 3, kind: input, shape index: {}]
  %s4 = inlined_call_operand.vmem [shape: f32[1,128], index: 4, kind: input, shape index: {}]
  %s5 = inlined_call_operand.vmem [shape: f32[32,128], index: 5, kind: input, shape index: {}]
  %s6 = inlined_call_operand.vmem [shape: f32[32,128], index: 6, kind: input, shape index: {}]
  %s7 = inlined_call_operand.vmem [shape: f32[1,128], index: 7, kind: input, shape index: {}]
  %s8 = inlined_call_operand.vmem [shape: f32[8,32], index: 8, kind: input, shape index: {}]
  %s9 = inlined_call_operand.vmem [shape: f32[1,32], index: 9, kind: input, shape index: {}]
  %s10 = inlined_call_operand.vmem [shape: f32[32,8], index: 10, kind: input, shape index: {}]
  %s11 = inlined_call_operand.vmem [shape: f32[1,8], index: 11, kind: input, shape index: {}]
  %s12 = inlined_call_operand.vmem [shape: f32[32,32], index: 12, kind: input, shape index: {}]
  %s13 = inlined_call_operand.vmem [shape: f32[8,32], index: 13, kind: input, shape index: {}]
  %s14 = inlined_call_operand.vmem [shape: f32[1,32], index: 14, kind: input, shape index: {}]
  %s15 = inlined_call_operand.vmem [shape: f32[32,32], index: 15, kind: input, shape index: {}]
  %s16 = inlined_call_operand.vmem [shape: f32[1,32], index: 16, kind: input, shape index: {}]
  %s17 = inlined_call_operand.vmem [shape: f32[32,1], index: 17, kind: input, shape index: {}]
  %s18 = inlined_call_operand.<no memory space> [shape: f32[1,1], index: 18, kind: input, shape index: {}]
  %s19 = inlined_call_operand.vmem [shape: f32[16,1], index: 19, kind: output, shape index: {}]
  %s20 = sld [smem:[#allocation0]]
  $region86: #{forecast_lstm_forward.1} parent=0
    _
  %s22 = ssub.s32 1, %s20
  %s23 = scalar_select 0, %s22, %s20
  %v24 = vstv %s18
  %25 = vst [vmem:[#allocation4] sm:$0x1] %v24
  // Predicated region
  $region2: #{forecast_lstm_forward.1} parent=0 // pred_check
    _
  $region3: #{forecast_lstm_forward.1} parent=0 // pred_check_branch
    %27 = sbr.rel (0) target = $region5
  $region4: #{forecast_lstm_forward.1} parent=0 // pred_region
    _
  $region5: #{forecast_lstm_forward.1} parent=0 // pred_fallthru
    _
  // Predicated region
  $region6: #{forecast_lstm_forward.1} parent=0 // pred_check
    _
  $region7: #{forecast_lstm_forward.1} parent=0 // pred_check_branch
    %29 = sbr.rel (0) target = $region9
  $region8: #{forecast_lstm_forward.1} parent=0 // pred_region
    _
  $region9: #{forecast_lstm_forward.1} parent=0 // pred_fallthru
    _
  // Predicated region
  $region10: #{forecast_lstm_forward.1} parent=0 // pred_check
    _
  $region11: #{forecast_lstm_forward.1} parent=0 // pred_check_branch
    %31 = sbr.rel (0) target = $region13
  $region12: #{forecast_lstm_forward.1} parent=0 // pred_region
    _
  $region13: #{forecast_lstm_forward.1} parent=0 // pred_fallthru
    _
  // Predicated region
  $region14: #{forecast_lstm_forward.1} parent=0 // pred_check
    _
  $region15: #{forecast_lstm_forward.1} parent=0 // pred_check_branch
    %33 = sbr.rel (0) target = $region17
  $region16: #{forecast_lstm_forward.1} parent=0 // pred_region
    _
  $region17: #{forecast_lstm_forward.1} parent=0 // pred_fallthru
    _
  // Predicated region
  $region18: #{forecast_lstm_forward.1} parent=0 // pred_check
    _
  $region19: #{forecast_lstm_forward.1} parent=0 // pred_check_branch
    %35 = sbr.rel (0) target = $region21
  $region20: #{forecast_lstm_forward.1} parent=0 // pred_region
    _
  $region21: #{forecast_lstm_forward.1} parent=0 // pred_fallthru
    _
  // Predicated region
  $region22: #{forecast_lstm_forward.1} parent=0 // pred_check
    _
  $region23: #{forecast_lstm_forward.1} parent=0 // pred_check_branch
    %37 = sbr.rel (0) target = $region25
  $region24: #{forecast_lstm_forward.1} parent=0 // pred_region
    _
  $region25: #{forecast_lstm_forward.1} parent=0 // pred_fallthru
    _
  // Predicated region
  $region26: #{forecast_lstm_forward.1} parent=0 // pred_check
    _
  $region27: #{forecast_lstm_forward.1} parent=0 // pred_check_branch
    %39 = sbr.rel (0) target = $region29
  $region28: #{forecast_lstm_forward.1} parent=0 // pred_region
    _
  $region29: #{forecast_lstm_forward.1} parent=0 // pred_fallthru
    _
  // Predicated region
  $region30: #{forecast_lstm_forward.1} parent=0 // pred_check
    _
  $region31: #{forecast_lstm_forward.1} parent=0 // pred_check_branch
    %41 = sbr.rel (0) target = $region33
  $region32: #{forecast_lstm_forward.1} parent=0 // pred_region
    _
  $region33: #{forecast_lstm_forward.1} parent=0 // pred_fallthru
    _
  // Predicated region
  $region34: #{forecast_lstm_forward.1} parent=0 // pred_check
    _
  $region35: #{forecast_lstm_forward.1} parent=0 // pred_check_branch
    %43 = sbr.rel (0) target = $region37
  $region36: #{forecast_lstm_forward.1} parent=0 // pred_region
    _
  $region37: #{forecast_lstm_forward.1} parent=0 // pred_fallthru
    _
  // Predicated region
  $region38: #{forecast_lstm_forward.1} parent=0 // pred_check
    _
  $region39: #{forecast_lstm_forward.1} parent=0 // pred_check_branch
    %45 = sbr.rel (0) target = $region41
  $region40: #{forecast_lstm_forward.1} parent=0 // pred_region
    _
  $region41: #{forecast_lstm_forward.1} parent=0 // pred_fallthru
    _
  // Predicated region
  $region42: #{forecast_lstm_forward.1} parent=0 // pred_check
    _
  $region43: #{forecast_lstm_forward.1} parent=0 // pred_check_branch
    %47 = sbr.rel (0) target = $region45
  $region44: #{forecast_lstm_forward.1} parent=0 // pred_region
    _
  $region45: #{forecast_lstm_forward.1} parent=0 // pred_fallthru
    _
  // Predicated region
  $region46: #{forecast_lstm_forward.1} parent=0 // pred_check
    _
  $region47: #{forecast_lstm_forward.1} parent=0 // pred_check_branch
    %49 = sbr.rel (0) target = $region49
  $region48: #{forecast_lstm_forward.1} parent=0 // pred_region
    _
  $region49: #{forecast_lstm_forward.1} parent=0 // pred_fallthru
    _
  // Predicated region
  $region50: #{forecast_lstm_forward.1} parent=0 // pred_check
    _
  $region51: #{forecast_lstm_forward.1} parent=0 // pred_check_branch
    %51 = sbr.rel (0) target = $region53
  $region52: #{forecast_lstm_forward.1} parent=0 // pred_region
    _
  $region53: #{forecast_lstm_forward.1} parent=0 // pred_fallthru
    _
  // Predicated region
  $region54: #{forecast_lstm_forward.1} parent=0 // pred_check
    _
  $region55: #{forecast_lstm_forward.1} parent=0 // pred_check_branch
    %53 = sbr.rel (0) target = $region57
  $region56: #{forecast_lstm_forward.1} parent=0 // pred_region
    _
  $region57: #{forecast_lstm_forward.1} parent=0 // pred_fallthru
    _
  // Predicated region
  $region58: #{forecast_lstm_forward.1} parent=0 // pred_check
    _
  $region59: #{forecast_lstm_forward.1} parent=0 // pred_check_branch
    %55 = sbr.rel (0) target = $region61
  $region60: #{forecast_lstm_forward.1} parent=0 // pred_region
    _
  $region61: #{forecast_lstm_forward.1} parent=0 // pred_fallthru
    _
  // Predicated region
  $region62: #{forecast_lstm_forward.1} parent=0 // pred_check
    _
  $region63: #{forecast_lstm_forward.1} parent=0 // pred_check_branch
    %57 = sbr.rel (0) target = $region65
  $region64: #{forecast_lstm_forward.1} parent=0 // pred_region
    _
  $region65: #{forecast_lstm_forward.1} parent=0 // pred_fallthru
    _
  // Predicated region
  $region66: #{forecast_lstm_forward.1} parent=0 // pred_check
    _
  $region67: #{forecast_lstm_forward.1} parent=0 // pred_check_branch
    %59 = sbr.rel (0) target = $region69
  $region68: #{forecast_lstm_forward.1} parent=0 // pred_region
    _
  $region69: #{forecast_lstm_forward.1} parent=0 // pred_fallthru
    _
  // Predicated region
  $region70: #{forecast_lstm_forward.1} parent=0 // pred_check
    _
  $region71: #{forecast_lstm_forward.1} parent=0 // pred_check_branch
    %61 = sbr.rel (0) target = $region73
  $region72: #{forecast_lstm_forward.1} parent=0 // pred_region
    _
  $region73: #{forecast_lstm_forward.1} parent=0 // pred_fallthru
    _
  // Predicated region
  $region74: #{forecast_lstm_forward.1} parent=0 // pred_check
    _
  $region75: #{forecast_lstm_forward.1} parent=0 // pred_check_branch
    %63 = sbr.rel (0) target = $region77
  $region76: #{forecast_lstm_forward.1} parent=0 // pred_region
    _
  $region77: #{forecast_lstm_forward.1} parent=0 // pred_fallthru
    _
  %v64 = vld [vmem:[%s0] sm:$0xff]
  %v65 = vld [vmem:[%s0 + $0x8] sm:$0xff]
  %v66 = vld [vmem:[%s2] sm:$0xf]
  %v67 = vld [vmem:[%s4] sm:$0x1]
  %v69 = vlaneseq
  %v70 = vshrl.u32 %v69, 7
  %v71 = vsub.s32 0, %v70
  %v72 = vrot.slane %v67, %v71
  %vm74 = vcmask 31744
  %v76 = vsel %vm74, %v64, 0
  %v79 = vsel %vm74, %v65, 0
  %vm81 = vcmask 1043456
  %v83 = vsel %vm81, %v66, 0
  %85 = vmatprep.subr.mxu0 0.0
  %86 = vmatpush1.msra.mxu0 %v83
  %87 = vmatprep.subr.mxu0 0.0
  %88 = vmatpush1.msra.mxu0 0.0
  %89 = vmatprep.subr.mxu0 0.0
  %90 = vmatpush1.msra.mxu0 0.0
  %91 = vmatprep.subr.mxu0 0.0
  %92 = vmatpush1.msra.mxu0 0.0
  %93 = vmatprep.subr.mxu0 0.0
  %94 = vmatpush1.msra.mxu0 0.0
  %95 = vmatprep.subr.mxu0 0.0
  %96 = vmatpush1.msra.mxu0 0.0
  %97 = vmatprep.subr.mxu0 0.0
  %98 = vmatpush1.msra.mxu0 0.0
  %99 = vmatprep.subr.mxu0 0.0
  %100 = vmatpush1.msra.mxu0 0.0
  %101 = vmatprep.subr.mxu0 0.0
  %102 = vmatpush1.msra.mxu0 0.0
  %103 = vmatprep.subr.mxu0 0.0
  %104 = vmatpush1.msra.mxu0 0.0
  %105 = vmatprep.subr.mxu0 0.0
  %106 = vmatpush1.msra.mxu0 0.0
  %107 = vmatprep.subr.mxu0 0.0
  %108 = vmatpush1.msra.mxu0 0.0
  %109 = vmatprep.subr.mxu0 0.0
  %110 = vmatpush1.msra.mxu0 0.0
  %111 = vmatprep.subr.mxu0 0.0
  %112 = vmatpush1.msra.mxu0 0.0
  %113 = vmatprep.subr.mxu0 0.0
  %114 = vmatpush1.msra.mxu0 0.0
  %115 = vmatprep.subr.mxu0 0.0
  %116 = vmatpush1.msra.mxu0 0.0
  %117 = vmatprep.subr.mxu0 0.0
  %118 = vmatpush1.msra.mxu0 0.0
  %119 = vmatprep.subr.mxu0 0.0
  %120 = vmatpush1.msra.mxu0 0.0
  %121 = vmatprep.subr.mxu0 0.0
  %122 = vmatpush1.msra.mxu0 0.0
  %123 = vmatprep.subr.mxu0 0.0
  %124 = vmatpush1.msra.mxu0 0.0
  %125 = vmatprep.subr.mxu0 0.0
  %126 = vmatpush1.msra.mxu0 0.0
  %127 = vmatprep.subr.mxu0 0.0
  %128 = vmatpush1.msra.mxu0 0.0
  %129 = vmatprep.subr.mxu0 0.0
  %130 = vmatpush1.msra.mxu0 0.0
  %131 = vmatprep.subr.mxu0 0.0
  %132 = vmatpush1.msra.mxu0 0.0
  %133 = vmatprep.subr.mxu0 0.0
  %134 = vmatpush1.msra.mxu0 0.0
  %135 = vmatprep.subr.mxu0 0.0
  %136 = vmatpush1.msra.mxu0 0.0
  %137 = vmatprep.subr.mxu0 0.0
  %138 = vmatpush1.msra.mxu0 0.0
  %139 = vmatprep.subr.mxu0 0.0
  %140 = vmatpush1.msra.mxu0 0.0
  %141 = vmatprep.subr.mxu0 0.0
  %142 = vmatpush1.msra.mxu0 0.0
  %143 = vmatprep.subr.mxu0 0.0
  %144 = vmatpush1.msra.mxu0 0.0
  %145 = vmatprep.subr.mxu0 0.0
  %146 = vmatpush1.msra.mxu0 0.0
  %147 = vmatprep.subr.mxu0 0.0
  %148 = vmatpush1.msra.mxu0 0.0
  %149 = vmatprep.mubr.f32.mxu0 0.0
  %150 = vmatmul.mubr.f32.gmra.mrb[0].mxu0 %v76
  %v151 = vpop.f32.mrb[0].mxu0
  %v152 = vadd.f32 %v72, %v151
  %v153 = vpop.f32.mrb[0].mxu0
  %154 = vmatprep.mubr.f32.mxu0 0.0
  %155 = vmatmul.mubr.f32.gmra.mrb[0].mxu0 %v79
  %v156 = vpop.f32.mrb[0].mxu0
  %v157 = vadd.f32 %v72, %v156
  %v158 = vpop.f32.mrb[0].mxu0
  %159 = vdwg.mxu0
  %v160 = vld [vmem:[%s3] sm:$0xff]
  %v161 = vld [vmem:[%s3 + $0x8] sm:$0xff]
  %v162 = vld [vmem:[%s3 + $0x10] sm:$0xff]
  %v163 = vld [vmem:[%s3 + $0x18] sm:$0xff]
  %vm164 = vcmask 261120
  %v166 = vsel %vm164, 0.0, 0
  %168 = vmatprep.subr.mxu0 0.0
  %169 = vmatpush1.msra.mxu0 %v160
  %170 = vmatprep.subr.mxu0 0.0
  %171 = vmatpush1.msra.mxu0 %v161
  %172 = vmatprep.subr.mxu0 0.0
  %173 = vmatpush1.msra.mxu0 %v162
  %174 = vmatprep.subr.mxu0 0.0
  %175 = vmatpush1.msra.mxu0 %v163
  %176 = vmatprep.subr.mxu0 0.0
  %177 = vmatpush1.msra.mxu0 0.0
  %178 = vmatprep.subr.mxu0 0.0
  %179 = vmatpush1.msra.mxu0 0.0
  %180 = vmatprep.subr.mxu0 0.0
  %181 = vmatpush1.msra.mxu0 0.0
  %182 = vmatprep.subr.mxu0 0.0
  %183 = vmatpush1.msra.mxu0 0.0
  %184 = vmatprep.subr.mxu0 0.0
  %185 = vmatpush1.msra.mxu0 0.0
  %186 = vmatprep.subr.mxu0 0.0
  %187 = vmatpush1.msra.mxu0 0.0
  %188 = vmatprep.subr.mxu0 0.0
  %189 = vmatpush1.msra.mxu0 0.0
  %190 = vmatprep.subr.mxu0 0.0
  %191 = vmatpush1.msra.mxu0 0.0
  %192 = vmatprep.subr.mxu0 0.0
  %193 = vmatpush1.msra.mxu0 0.0
  %194 = vmatprep.subr.mxu0 0.0
  %195 = vmatpush1.msra.mxu0 0.0
  %196 = vmatprep.subr.mxu0 0.0
  %197 = vmatpush1.msra.mxu0 0.0
  %198 = vmatprep.subr.mxu0 0.0
  %199 = vmatpush1.msra.mxu0 0.0
  %200 = vmatprep.subr.mxu0 0.0
  %201 = vmatpush1.msra.mxu0 0.0
  %202 = vmatprep.subr.mxu0 0.0
  %203 = vmatpush1.msra.mxu0 0.0
  %204 = vmatprep.subr.mxu0 0.0
  %205 = vmatpush1.msra.mxu0 0.0
  %206 = vmatprep.subr.mxu0 0.0
  %207 = vmatpush1.msra.mxu0 0.0
  %208 = vmatprep.subr.mxu0 0.0
  %209 = vmatpush1.msra.mxu0 0.0
  %210 = vmatprep.subr.mxu0 0.0
  %211 = vmatpush1.msra.mxu0 0.0
  %212 = vmatprep.subr.mxu0 0.0
  %213 = vmatpush1.msra.mxu0 0.0
  %214 = vmatprep.subr.mxu0 0.0
  %215 = vmatpush1.msra.mxu0 0.0
  %216 = vmatprep.subr.mxu0 0.0
  %217 = vmatpush1.msra.mxu0 0.0
  %218 = vmatprep.subr.mxu0 0.0
  %219 = vmatpush1.msra.mxu0 0.0
  %220 = vmatprep.subr.mxu0 0.0
  %221 = vmatpush1.msra.mxu0 0.0
  %222 = vmatprep.subr.mxu0 0.0
  %223 = vmatpush1.msra.mxu0 0.0
  %224 = vmatprep.subr.mxu0 0.0
  %225 = vmatpush1.msra.mxu0 0.0
  %226 = vmatprep.subr.mxu0 0.0
  %227 = vmatpush1.msra.mxu0 0.0
  %228 = vmatprep.subr.mxu0 0.0
  %229 = vmatpush1.msra.mxu0 0.0
  %230 = vmatprep.subr.mxu0 0.0
  %231 = vmatpush1.msra.mxu0 0.0
  %232 = vmatprep.mubr.f32.mxu0 0.0
  %233 = vmatmul.mubr.f32.gmra.mrb[0].mxu0 %v166
  %v234 = vpop.f32.mrb[0].mxu0
  %v235 = vadd.f32 0.0, %v234
  %v236 = vpop.f32.mrb[0].mxu0
  %237 = vdwg.mxu0
  %v238 = vadd.f32 %v152, %v235
  %v239 = vxor.u32 %v238, 2147483648
  %v240 = vmul.f32 %v239, 1.442695
  %v241 = vpow.pop %v240
  %v242 = vadd.f32 %v241, 1.0
  %v243 = vrcp.pop %v242
  %v244 = vmul.f32 1.0, %v243
  %v245 = vtanh.pop %v238
  %v246 = vmul.f32 %v244, 0.0
  %248 = vrot.lane.b32.xlu0 %v245, 64
  %v249 = vpop.permute.xlu0 %248
  %v251 = vmul.f32 %v244, %v249
  %253 = vrot.lane.b32.xlu0 %v251, 32
  %v254 = vpop.permute.xlu0 %253
  %v256 = vadd.f32 %v246, %v254
  %v257 = vtanh.pop %v256
  %259 = vrot.lane.b32.xlu0 %v257, 64
  %v260 = vpop.permute.xlu0 %259
  %v262 = vmul.f32 %v244, %v260
  %264 = vrot.lane.b32.xlu0 %v262, 32
  %v265 = vpop.permute.xlu0 %264
  %vm267 = vcmask 254976
  %268 = vst.msk [vmem:[#allocation2] sm:$0x3] %vm267, %v265
  %v269 = vsel %vm164, %v265, 0
  %271 = vmatprep.subr.mxu0 0.0
  %272 = vmatpush1.msra.mxu0 %v160
  %273 = vmatprep.subr.mxu0 0.0
  %274 = vmatpush1.msra.mxu0 %v161
  %275 = vmatprep.subr.mxu0 0.0
  %276 = vmatpush1.msra.mxu0 %v162
  %277 = vmatprep.subr.mxu0 0.0
  %278 = vmatpush1.msra.mxu0 %v163
  %279 = vmatprep.subr.mxu0 0.0
  %280 = vmatpush1.msra.mxu0 0.0
  %281 = vmatprep.subr.mxu0 0.0
  %282 = vmatpush1.msra.mxu0 0.0
  %283 = vmatprep.subr.mxu0 0.0
  %284 = vmatpush1.msra.mxu0 0.0
  %285 = vmatprep.subr.mxu0 0.0
  %286 = vmatpush1.msra.mxu0 0.0
  %287 = vmatprep.subr.mxu0 0.0
  %288 = vmatpush1.msra.mxu0 0.0
  %289 = vmatprep.subr.mxu0 0.0
  %290 = vmatpush1.msra.mxu0 0.0
  %291 = vmatprep.subr.mxu0 0.0
  %292 = vmatpush1.msra.mxu0 0.0
  %293 = vmatprep.subr.mxu0 0.0
  %294 = vmatpush1.msra.mxu0 0.0
  %295 = vmatprep.subr.mxu0 0.0
  %296 = vmatpush1.msra.mxu0 0.0
  %297 = vmatprep.subr.mxu0 0.0
  %298 = vmatpush1.msra.mxu0 0.0
  %299 = vmatprep.subr.mxu0 0.0
  %300 = vmatpush1.msra.mxu0 0.0
  %301 = vmatprep.subr.mxu0 0.0
  %302 = vmatpush1.msra.mxu0 0.0
  %303 = vmatprep.subr.mxu0 0.0
  %304 = vmatpush1.msra.mxu0 0.0
  %305 = vmatprep.subr.mxu0 0.0
  %306 = vmatpush1.msra.mxu0 0.0
  %307 = vmatprep.subr.mxu0 0.0
  %308 = vmatpush1.msra.mxu0 0.0
  %309 = vmatprep.subr.mxu0 0.0
  %310 = vmatpush1.msra.mxu0 0.0
  %311 = vmatprep.subr.mxu0 0.0
  %312 = vmatpush1.msra.mxu0 0.0
  %313 = vmatprep.subr.mxu0 0.0
  %314 = vmatpush1.msra.mxu0 0.0
  %315 = vmatprep.subr.mxu0 0.0
  %316 = vmatpush1.msra.mxu0 0.0
  %317 = vmatprep.subr.mxu0 0.0
  %318 = vmatpush1.msra.mxu0 0.0
  %319 = vmatprep.subr.mxu0 0.0
  %320 = vmatpush1.msra.mxu0 0.0
  %321 = vmatprep.subr.mxu0 0.0
  %322 = vmatpush1.msra.mxu0 0.0
  %323 = vmatprep.subr.mxu0 0.0
  %324 = vmatpush1.msra.mxu0 0.0
  %325 = vmatprep.subr.mxu0 0.0
  %326 = vmatpush1.msra.mxu0 0.0
  %327 = vmatprep.subr.mxu0 0.0
  %328 = vmatpush1.msra.mxu0 0.0
  %329 = vmatprep.subr.mxu0 0.0
  %330 = vmatpush1.msra.mxu0 0.0
  %331 = vmatprep.subr.mxu0 0.0
  %332 = vmatpush1.msra.mxu0 0.0
  %333 = vmatprep.subr.mxu0 0.0
  %334 = vmatpush1.msra.mxu0 0.0
  %335 = vmatprep.mubr.f32.mxu0 0.0
  %336 = vmatmul.mubr.f32.gmra.mrb[0].mxu0 %v269
  %v337 = vpop.f32.mrb[0].mxu0
  %v338 = vadd.f32 0.0, %v337
  %v339 = vpop.f32.mrb[0].mxu0
  %340 = vdwg.mxu0
  %v342 = vrot.slane %v338, 6
  %v344 = vadd.f32 %v152, %v342
  %v345 = vxor.u32 %v344, 2147483648
  %v346 = vmul.f32 %v345, 1.442695
  %v347 = vpow.pop %v346
  %v348 = vadd.f32 %v347, 1.0
  %v349 = vrcp.pop %v348
  %v350 = vmul.f32 1.0, %v349
  %v351 = vtanh.pop %v344
  %v353 = vrot.slane %v256, 6
  %v355 = vmul.f32 %v350, %v353
  %357 = vrot.lane.b32.xlu0 %v351, 64
  %v358 = vpop.permute.xlu0 %357
  %v360 = vmul.f32 %v350, %v358
  %362 = vrot.lane.b32.xlu0 %v360, 32
  %v363 = vpop.permute.xlu0 %362
  %v365 = vadd.f32 %v355, %v363
  %v366 = vtanh.pop %v365
  %368 = vrot.lane.b32.xlu0 %v366, 64
  %v369 = vpop.permute.xlu0 %368
  %v371 = vmul.f32 %v350, %v369
  %373 = vrot.lane.b32.xlu0 %v371, 32
  %v374 = vpop.permute.xlu0 %373
  %vm376 = vcmask 257026
  %377 = vst.msk [vmem:[#allocation2] sm:$0xc] %vm376, %v374
  %v378 = vrot.slane %v371, 2
  %379 = vrot.lane.b32.xlu0 %v378, 32
  %v380 = vpop.permute.xlu0 %379
  %v381 = vsel %vm164, %v380, 0
  %383 = vmatprep.subr.mxu0 0.0
  %384 = vmatpush1.msra.mxu0 %v160
  %385 = vmatprep.subr.mxu0 0.0
  %386 = vmatpush1.msra.mxu0 %v161
  %387 = vmatprep.subr.mxu0 0.0
  %388 = vmatpush1.msra.mxu0 %v162
  %389 = vmatprep.subr.mxu0 0.0
  %390 = vmatpush1.msra.mxu0 %v163
  %391 = vmatprep.subr.mxu0 0.0
  %392 = vmatpush1.msra.mxu0 0.0
  %393 = vmatprep.subr.mxu0 0.0
  %394 = vmatpush1.msra.mxu0 0.0
  %395 = vmatprep.subr.mxu0 0.0
  %396 = vmatpush1.msra.mxu0 0.0
  %397 = vmatprep.subr.mxu0 0.0
  %398 = vmatpush1.msra.mxu0 0.0
  %399 = vmatprep.subr.mxu0 0.0
  %400 = vmatpush1.msra.mxu0 0.0
  %401 = vmatprep.subr.mxu0 0.0
  %402 = vmatpush1.msra.mxu0 0.0
  %403 = vmatprep.subr.mxu0 0.0
  %404 = vmatpush1.msra.mxu0 0.0
  %405 = vmatprep.subr.mxu0 0.0
  %406 = vmatpush1.msra.mxu0 0.0
  %407 = vmatprep.subr.mxu0 0.0
  %408 = vmatpush1.msra.mxu0 0.0
  %409 = vmatprep.subr.mxu0 0.0
  %410 = vmatpush1.msra.mxu0 0.0
  %411 = vmatprep.subr.mxu0 0.0
  %412 = vmatpush1.msra.mxu0 0.0
  %413 = vmatprep.subr.mxu0 0.0
  %414 = vmatpush1.msra.mxu0 0.0
  %415 = vmatprep.subr.mxu0 0.0
  %416 = vmatpush1.msra.mxu0 0.0
  %417 = vmatprep.subr.mxu0 0.0
  %418 = vmatpush1.msra.mxu0 0.0
  %419 = vmatprep.subr.mxu0 0.0
  %420 = vmatpush1.msra.mxu0 0.0
  %421 = vmatprep.subr.mxu0 0.0
  %422 = vmatpush1.msra.mxu0 0.0
  %423 = vmatprep.subr.mxu0 0.0
  %424 = vmatpush1.msra.mxu0 0.0
  %425 = vmatprep.subr.mxu0 0.0
  %426 = vmatpush1.msra.mxu0 0.0
  %427 = vmatprep.subr.mxu0 0.0
  %428 = vmatpush1.msra.mxu0 0.0
  %429 = vmatprep.subr.mxu0 0.0
  %430 = vmatpush1.msra.mxu0 0.0
  %431 = vmatprep.subr.mxu0 0.0
  %432 = vmatpush1.msra.mxu0 0.0
  %433 = vmatprep.subr.mxu0 0.0
  %434 = vmatpush1.msra.mxu0 0.0
  %435 = vmatprep.subr.mxu0 0.0
  %436 = vmatpush1.msra.mxu0 0.0
  %437 = vmatprep.subr.mxu0 0.0
  %438 = vmatpush1.msra.mxu0 0.0
  %439 = vmatprep.subr.mxu0 0.0
  %440 = vmatpush1.msra.mxu0 0.0
  %441 = vmatprep.subr.mxu0 0.0
  %442 = vmatpush1.msra.mxu0 0.0
  %443 = vmatprep.subr.mxu0 0.0
  %444 = vmatpush1.msra.mxu0 0.0
  %445 = vmatprep.subr.mxu0 0.0
  %446 = vmatpush1.msra.mxu0 0.0
  %447 = vmatprep.mubr.f32.mxu0 0.0
  %448 = vmatmul.mubr.f32.gmra.mrb[0].mxu0 %v381
  %v449 = vpop.f32.mrb[0].mxu0
  %v450 = vadd.f32 0.0, %v449
  %v451 = vpop.f32.mrb[0].mxu0
  %452 = vdwg.mxu0
  %v454 = vrot.slane %v450, 4
  %v456 = vadd.f32 %v152, %v454
  %v457 = vxor.u32 %v456, 2147483648
  %v458 = vmul.f32 %v457, 1.442695
  %v459 = vpow.pop %v458
  %v460 = vadd.f32 %v459, 1.0
  %v461 = vrcp.pop %v460
  %v462 = vmul.f32 1.0, %v461
  %v463 = vtanh.pop %v456
  %v465 = vrot.slane %v365, 6
  %v467 = vmul.f32 %v462, %v465
  %469 = vrot.lane.b32.xlu0 %v463, 64
  %v470 = vpop.permute.xlu0 %469
  %v472 = vmul.f32 %v462, %v470
  %474 = vrot.lane.b32.xlu0 %v472, 32
  %v475 = vpop.permute.xlu0 %474
  %v477 = vadd.f32 %v467, %v475
  %v478 = vtanh.pop %v477
  %480 = vrot.lane.b32.xlu0 %v478, 64
  %v481 = vpop.permute.xlu0 %480
  %v483 = vmul.f32 %v462, %v481
  %485 = vrot.lane.b32.xlu0 %v483, 32
  %v486 = vpop.permute.xlu0 %485
  %vm488 = vcmask 259076
  %489 = vst.msk [vmem:[#allocation2] sm:$0x30] %vm488, %v486
  %v490 = vrot.slane %v483, 4
  %491 = vrot.lane.b32.xlu0 %v490, 32
  %v492 = vpop.permute.xlu0 %491
  %v493 = vsel %vm164, %v492, 0
  %495 = vmatprep.subr.mxu0 0.0
  %496 = vmatpush1.msra.mxu0 %v160
  %497 = vmatprep.subr.mxu0 0.0
  %498 = vmatpush1.msra.mxu0 %v161
  %499 = vmatprep.subr.mxu0 0.0
  %500 = vmatpush1.msra.mxu0 %v162
  %501 = vmatprep.subr.mxu0 0.0
  %502 = vmatpush1.msra.mxu0 %v163
  %503 = vmatprep.subr.mxu0 0.0
  %504 = vmatpush1.msra.mxu0 0.0
  %505 = vmatprep.subr.mxu0 0.0
  %506 = vmatpush1.msra.mxu0 0.0
  %507 = vmatprep.subr.mxu0 0.0
  %508 = vmatpush1.msra.mxu0 0.0
  %509 = vmatprep.subr.mxu0 0.0
  %510 = vmatpush1.msra.mxu0 0.0
  %511 = vmatprep.subr.mxu0 0.0
  %512 = vmatpush1.msra.mxu0 0.0
  %513 = vmatprep.subr.mxu0 0.0
  %514 = vmatpush1.msra.mxu0 0.0
  %515 = vmatprep.subr.mxu0 0.0
  %516 = vmatpush1.msra.mxu0 0.0
  %517 = vmatprep.subr.mxu0 0.0
  %518 = vmatpush1.msra.mxu0 0.0
  %519 = vmatprep.subr.mxu0 0.0
  %520 = vmatpush1.msra.mxu0 0.0
  %521 = vmatprep.subr.mxu0 0.0
  %522 = vmatpush1.msra.mxu0 0.0
  %523 = vmatprep.subr.mxu0 0.0
  %524 = vmatpush1.msra.mxu0 0.0
  %525 = vmatprep.subr.mxu0 0.0
  %526 = vmatpush1.msra.mxu0 0.0
  %527 = vmatprep.subr.mxu0 0.0
  %528 = vmatpush1.msra.mxu0 0.0
  %529 = vmatprep.subr.mxu0 0.0
  %530 = vmatpush1.msra.mxu0 0.0
  %531 = vmatprep.subr.mxu0 0.0
  %532 = vmatpush1.msra.mxu0 0.0
  %533 = vmatprep.subr.mxu0 0.0
  %534 = vmatpush1.msra.mxu0 0.0
  %535 = vmatprep.subr.mxu0 0.0
  %536 = vmatpush1.msra.mxu0 0.0
  %537 = vmatprep.subr.mxu0 0.0
  %538 = vmatpush1.msra.mxu0 0.0
  %539 = vmatprep.subr.mxu0 0.0
  %540 = vmatpush1.msra.mxu0 0.0
  %541 = vmatprep.subr.mxu0 0.0
  %542 = vmatpush1.msra.mxu0 0.0
  %543 = vmatprep.subr.mxu0 0.0
  %544 = vmatpush1.msra.mxu0 0.0
  %545 = vmatprep.subr.mxu0 0.0
  %546 = vmatpush1.msra.mxu0 0.0
  %547 = vmatprep.subr.mxu0 0.0
  %548 = vmatpush1.msra.mxu0 0.0
  %549 = vmatprep.subr.mxu0 0.0
  %550 = vmatpush1.msra.mxu0 0.0
  %551 = vmatprep.subr.mxu0 0.0
  %552 = vmatpush1.msra.mxu0 0.0
  %553 = vmatprep.subr.mxu0 0.0
  %554 = vmatpush1.msra.mxu0 0.0
  %555 = vmatprep.subr.mxu0 0.0
  %556 = vmatpush1.msra.mxu0 0.0
  %557 = vmatprep.subr.mxu0 0.0
  %558 = vmatpush1.msra.mxu0 0.0
  %559 = vmatprep.mubr.f32.mxu0 0.0
  %560 = vmatmul.mubr.f32.gmra.mrb[0].mxu0 %v493
  %v561 = vpop.f32.mrb[0].mxu0
  %v562 = vadd.f32 0.0, %v561
  %v563 = vpop.f32.mrb[0].mxu0
  %564 = vdwg.mxu0
  %v566 = vrot.slane %v562, 2
  %v568 = vadd.f32 %v152, %v566
  %v569 = vxor.u32 %v568, 2147483648
  %v570 = vmul.f32 %v569, 1.442695
  %v571 = vpow.pop %v570
  %v572 = vadd.f32 %v571, 1.0
  %v573 = vrcp.pop %v572
  %v574 = vmul.f32 1.0, %v573
  %v575 = vtanh.pop %v568
  %v577 = vrot.slane %v477, 6
  %v579 = vmul.f32 %v574, %v577
  %581 = vrot.lane.b32.xlu0 %v575, 64
  %v582 = vpop.permute.xlu0 %581
  %v584 = vmul.f32 %v574, %v582
  %586 = vrot.lane.b32.xlu0 %v584, 32
  %v587 = vpop.permute.xlu0 %586
  %v589 = vadd.f32 %v579, %v587
  %v590 = vtanh.pop %v589
  %592 = vrot.lane.b32.xlu0 %v590, 64
  %v593 = vpop.permute.xlu0 %592
  %v595 = vmul.f32 %v574, %v593
  %597 = vrot.lane.b32.xlu0 %v595, 32
  %v598 = vpop.permute.xlu0 %597
  %vm600 = vcmask 261126
  %601 = vst.msk [vmem:[#allocation2] sm:$0xc0] %vm600, %v598
  %v602 = vrot.slane %v595, 6
  %603 = vrot.lane.b32.xlu0 %v602, 32
  %v604 = vpop.permute.xlu0 %603
  %v605 = vsel %vm164, %v604, 0
  %607 = vmatprep.subr.mxu0 0.0
  %608 = vmatpush1.msra.mxu0 %v160
  %609 = vmatprep.subr.mxu0 0.0
  %610 = vmatpush1.msra.mxu0 %v161
  %611 = vmatprep.subr.mxu0 0.0
  %612 = vmatpush1.msra.mxu0 %v162
  %613 = vmatprep.subr.mxu0 0.0
  %614 = vmatpush1.msra.mxu0 %v163
  %615 = vmatprep.subr.mxu0 0.0
  %616 = vmatpush1.msra.mxu0 0.0
  %617 = vmatprep.subr.mxu0 0.0
  %618 = vmatpush1.msra.mxu0 0.0
  %619 = vmatprep.subr.mxu0 0.0
  %620 = vmatpush1.msra.mxu0 0.0
  %621 = vmatprep.subr.mxu0 0.0
  %622 = vmatpush1.msra.mxu0 0.0
  %623 = vmatprep.subr.mxu0 0.0
  %624 = vmatpush1.msra.mxu0 0.0
  %625 = vmatprep.subr.mxu0 0.0
  %626 = vmatpush1.msra.mxu0 0.0
  %627 = vmatprep.subr.mxu0 0.0
  %628 = vmatpush1.msra.mxu0 0.0
  %629 = vmatprep.subr.mxu0 0.0
  %630 = vmatpush1.msra.mxu0 0.0
  %631 = vmatprep.subr.mxu0 0.0
  %632 = vmatpush1.msra.mxu0 0.0
  %633 = vmatprep.subr.mxu0 0.0
  %634 = vmatpush1.msra.mxu0 0.0
  %635 = vmatprep.subr.mxu0 0.0
  %636 = vmatpush1.msra.mxu0 0.0
  %637 = vmatprep.subr.mxu0 0.0
  %638 = vmatpush1.msra.mxu0 0.0
  %639 = vmatprep.subr.mxu0 0.0
  %640 = vmatpush1.msra.mxu0 0.0
  %641 = vmatprep.subr.mxu0 0.0
  %642 = vmatpush1.msra.mxu0 0.0
  %643 = vmatprep.subr.mxu0 0.0
  %644 = vmatpush1.msra.mxu0 0.0
  %645 = vmatprep.subr.mxu0 0.0
  %646 = vmatpush1.msra.mxu0 0.0
  %647 = vmatprep.subr.mxu0 0.0
  %648 = vmatpush1.msra.mxu0 0.0
  %649 = vmatprep.subr.mxu0 0.0
  %650 = vmatpush1.msra.mxu0 0.0
  %651 = vmatprep.subr.mxu0 0.0
  %652 = vmatpush1.msra.mxu0 0.0
  %653 = vmatprep.subr.mxu0 0.0
  %654 = vmatpush1.msra.mxu0 0.0
  %655 = vmatprep.subr.mxu0 0.0
  %656 = vmatpush1.msra.mxu0 0.0
  %657 = vmatprep.subr.mxu0 0.0
  %658 = vmatpush1.msra.mxu0 0.0
  %659 = vmatprep.subr.mxu0 0.0
  %660 = vmatpush1.msra.mxu0 0.0
  %661 = vmatprep.subr.mxu0 0.0
  %662 = vmatpush1.msra.mxu0 0.0
  %663 = vmatprep.subr.mxu0 0.0
  %664 = vmatpush1.msra.mxu0 0.0
  %665 = vmatprep.subr.mxu0 0.0
  %666 = vmatpush1.msra.mxu0 0.0
  %667 = vmatprep.subr.mxu0 0.0
  %668 = vmatpush1.msra.mxu0 0.0
  %669 = vmatprep.subr.mxu0 0.0
  %670 = vmatpush1.msra.mxu0 0.0
  %671 = vmatprep.mubr.f32.mxu0 0.0
  %672 = vmatmul.mubr.f32.gmra.mrb[0].mxu0 %v605
  %v673 = vpop.f32.mrb[0].mxu0
  %v674 = vadd.f32 0.0, %v673
  %v675 = vpop.f32.mrb[0].mxu0
  %676 = vdwg.mxu0
  %v677 = vadd.f32 %v157, %v674
  %v678 = vxor.u32 %v677, 2147483648
  %v679 = vmul.f32 %v678, 1.442695
  %v680 = vpow.pop %v679
  %v681 = vadd.f32 %v680, 1.0
  %v682 = vrcp.pop %v681
  %v683 = vmul.f32 1.0, %v682
  %v684 = vtanh.pop %v677
  %v686 = vrot.slane %v589, 6
  %v688 = vmul.f32 %v683, %v686
  %690 = vrot.lane.b32.xlu0 %v684, 64
  %v691 = vpop.permute.xlu0 %690
  %v693 = vmul.f32 %v683, %v691
  %695 = vrot.lane.b32.xlu0 %v693, 32
  %v696 = vpop.permute.xlu0 %695
  %v698 = vadd.f32 %v688, %v696
  %v699 = vtanh.pop %v698
  %701 = vrot.lane.b32.xlu0 %v699, 64
  %v702 = vpop.permute.xlu0 %701
  %v704 = vmul.f32 %v683, %v702
  %706 = vrot.lane.b32.xlu0 %v704, 32
  %v707 = vpop.permute.xlu0 %706
  %709 = vst.msk [vmem:[#allocation2 + $0x8] sm:$0x3] %vm267, %v707
  %v710 = vsel %vm164, %v707, 0
  %712 = vmatprep.subr.mxu0 0.0
  %713 = vmatpush1.msra.mxu0 %v160
  %714 = vmatprep.subr.mxu0 0.0
  %715 = vmatpush1.msra.mxu0 %v161
  %716 = vmatprep.subr.mxu0 0.0
  %717 = vmatpush1.msra.mxu0 %v162
  %718 = vmatprep.subr.mxu0 0.0
  %719 = vmatpush1.msra.mxu0 %v163
  %720 = vmatprep.subr.mxu0 0.0
  %721 = vmatpush1.msra.mxu0 0.0
  %722 = vmatprep.subr.mxu0 0.0
  %723 = vmatpush1.msra.mxu0 0.0
  %724 = vmatprep.subr.mxu0 0.0
  %725 = vmatpush1.msra.mxu0 0.0
  %726 = vmatprep.subr.mxu0 0.0
  %727 = vmatpush1.msra.mxu0 0.0
  %728 = vmatprep.subr.mxu0 0.0
  %729 = vmatpush1.msra.mxu0 0.0
  %730 = vmatprep.subr.mxu0 0.0
  %731 = vmatpush1.msra.mxu0 0.0
  %732 = vmatprep.subr.mxu0 0.0
  %733 = vmatpush1.msra.mxu0 0.0
  %734 = vmatprep.subr.mxu0 0.0
  %735 = vmatpush1.msra.mxu0 0.0
  %736 = vmatprep.subr.mxu0 0.0
  %737 = vmatpush1.msra.mxu0 0.0
  %738 = vmatprep.subr.mxu0 0.0
  %739 = vmatpush1.msra.mxu0 0.0
  %740 = vmatprep.subr.mxu0 0.0
  %741 = vmatpush1.msra.mxu0 0.0
  %742 = vmatprep.subr.mxu0 0.0
  %743 = vmatpush1.msra.mxu0 0.0
  %744 = vmatprep.subr.mxu0 0.0
  %745 = vmatpush1.msra.mxu0 0.0
  %746 = vmatprep.subr.mxu0 0.0
  %747 = vmatpush1.msra.mxu0 0.0
  %748 = vmatprep.subr.mxu0 0.0
  %749 = vmatpush1.msra.mxu0 0.0
  %750 = vmatprep.subr.mxu0 0.0
  %751 = vmatpush1.msra.mxu0 0.0
  %752 = vmatprep.subr.mxu0 0.0
  %753 = vmatpush1.msra.mxu0 0.0
  %754 = vmatprep.subr.mxu0 0.0
  %755 = vmatpush1.msra.mxu0 0.0
  %756 = vmatprep.subr.mxu0 0.0
  %757 = vmatpush1.msra.mxu0 0.0
  %758 = vmatprep.subr.mxu0 0.0
  %759 = vmatpush1.msra.mxu0 0.0
  %760 = vmatprep.subr.mxu0 0.0
  %761 = vmatpush1.msra.mxu0 0.0
  %762 = vmatprep.subr.mxu0 0.0
  %763 = vmatpush1.msra.mxu0 0.0
  %764 = vmatprep.subr.mxu0 0.0
  %765 = vmatpush1.msra.mxu0 0.0
  %766 = vmatprep.subr.mxu0 0.0
  %767 = vmatpush1.msra.mxu0 0.0
  %768 = vmatprep.subr.mxu0 0.0
  %769 = vmatpush1.msra.mxu0 0.0
  %770 = vmatprep.subr.mxu0 0.0
  %771 = vmatpush1.msra.mxu0 0.0
  %772 = vmatprep.subr.mxu0 0.0
  %773 = vmatpush1.msra.mxu0 0.0
  %774 = vmatprep.subr.mxu0 0.0
  %775 = vmatpush1.msra.mxu0 0.0
  %776 = vmatprep.mubr.f32.mxu0 0.0
  %777 = vmatmul.mubr.f32.gmra.mrb[0].mxu0 %v710
  %v778 = vpop.f32.mrb[0].mxu0
  %v779 = vadd.f32 0.0, %v778
  %v780 = vpop.f32.mrb[0].mxu0
  %781 = vdwg.mxu0
  %v783 = vrot.slane %v779, 6
  %v785 = vadd.f32 %v157, %v783
  %v786 = vxor.u32 %v785, 2147483648
  %v787 = vmul.f32 %v786, 1.442695
  %v788 = vpow.pop %v787
  %v789 = vadd.f32 %v788, 1.0
  %v790 = vrcp.pop %v789
  %v791 = vmul.f32 1.0, %v790
  %v792 = vtanh.pop %v785
  %v794 = vrot.slane %v698, 6
  %v796 = vmul.f32 %v791, %v794
  %798 = vrot.lane.b32.xlu0 %v792, 64
  %v799 = vpop.permute.xlu0 %798
  %v801 = vmul.f32 %v791, %v799
  %803 = vrot.lane.b32.xlu0 %v801, 32
  %v804 = vpop.permute.xlu0 %803
  %v806 = vadd.f32 %v796, %v804
  %v807 = vtanh.pop %v806
  %809 = vrot.lane.b32.xlu0 %v807, 64
  %v810 = vpop.permute.xlu0 %809
  %v812 = vmul.f32 %v791, %v810
  %814 = vrot.lane.b32.xlu0 %v812, 32
  %v815 = vpop.permute.xlu0 %814
  %817 = vst.msk [vmem:[#allocation2 + $0x8] sm:$0xc] %vm376, %v815
  %v818 = vrot.slane %v812, 2
  %819 = vrot.lane.b32.xlu0 %v818, 32
  %v820 = vpop.permute.xlu0 %819
  %v821 = vsel %vm164, %v820, 0
  %823 = vmatprep.subr.mxu0 0.0
  %824 = vmatpush1.msra.mxu0 %v160
  %825 = vmatprep.subr.mxu0 0.0
  %826 = vmatpush1.msra.mxu0 %v161
  %827 = vmatprep.subr.mxu0 0.0
  %828 = vmatpush1.msra.mxu0 %v162
  %829 = vmatprep.subr.mxu0 0.0
  %830 = vmatpush1.msra.mxu0 %v163
  %831 = vmatprep.subr.mxu0 0.0
  %832 = vmatpush1.msra.mxu0 0.0
  %833 = vmatprep.subr.mxu0 0.0
  %834 = vmatpush1.msra.mxu0 0.0
  %835 = vmatprep.subr.mxu0 0.0
  %836 = vmatpush1.msra.mxu0 0.0
  %837 = vmatprep.subr.mxu0 0.0
  %838 = vmatpush1.msra.mxu0 0.0
  %839 = vmatprep.subr.mxu0 0.0
  %840 = vmatpush1.msra.mxu0 0.0
  %841 = vmatprep.subr.mxu0 0.0
  %842 = vmatpush1.msra.mxu0 0.0
  %843 = vmatprep.subr.mxu0 0.0
  %844 = vmatpush1.msra.mxu0 0.0
  %845 = vmatprep.subr.mxu0 0.0
  %846 = vmatpush1.msra.mxu0 0.0
  %847 = vmatprep.subr.mxu0 0.0
  %848 = vmatpush1.msra.mxu0 0.0
  %849 = vmatprep.subr.mxu0 0.0
  %850 = vmatpush1.msra.mxu0 0.0
  %851 = vmatprep.subr.mxu0 0.0
  %852 = vmatpush1.msra.mxu0 0.0
  %853 = vmatprep.subr.mxu0 0.0
  %854 = vmatpush1.msra.mxu0 0.0
  %855 = vmatprep.subr.mxu0 0.0
  %856 = vmatpush1.msra.mxu0 0.0
  %857 = vmatprep.subr.mxu0 0.0
  %858 = vmatpush1.msra.mxu0 0.0
  %859 = vmatprep.subr.mxu0 0.0
  %860 = vmatpush1.msra.mxu0 0.0
  %861 = vmatprep.subr.mxu0 0.0
  %862 = vmatpush1.msra.mxu0 0.0
  %863 = vmatprep.subr.mxu0 0.0
  %864 = vmatpush1.msra.mxu0 0.0
  %865 = vmatprep.subr.mxu0 0.0
  %866 = vmatpush1.msra.mxu0 0.0
  %867 = vmatprep.subr.mxu0 0.0
  %868 = vmatpush1.msra.mxu0 0.0
  %869 = vmatprep.subr.mxu0 0.0
  %870 = vmatpush1.msra.mxu0 0.0
  %871 = vmatprep.subr.mxu0 0.0
  %872 = vmatpush1.msra.mxu0 0.0
  %873 = vmatprep.subr.mxu0 0.0
  %874 = vmatpush1.msra.mxu0 0.0
  %875 = vmatprep.subr.mxu0 0.0
  %876 = vmatpush1.msra.mxu0 0.0
  %877 = vmatprep.subr.mxu0 0.0
  %878 = vmatpush1.msra.mxu0 0.0
  %879 = vmatprep.subr.mxu0 0.0
  %880 = vmatpush1.msra.mxu0 0.0
  %881 = vmatprep.subr.mxu0 0.0
  %882 = vmatpush1.msra.mxu0 0.0
  %883 = vmatprep.subr.mxu0 0.0
  %884 = vmatpush1.msra.mxu0 0.0
  %885 = vmatprep.subr.mxu0 0.0
  %886 = vmatpush1.msra.mxu0 0.0
  %887 = vmatprep.mubr.f32.mxu0 0.0
  %888 = vmatmul.mubr.f32.gmra.mrb[0].mxu0 %v821
  %v889 = vpop.f32.mrb[0].mxu0
  %v890 = vadd.f32 0.0, %v889
  %v891 = vpop.f32.mrb[0].mxu0
  %892 = vdwg.mxu0
  %v894 = vrot.slane %v890, 4
  %v896 = vadd.f32 %v157, %v894
  %v897 = vxor.u32 %v896, 2147483648
  %v898 = vmul.f32 %v897, 1.442695
  %v899 = vpow.pop %v898
  %v900 = vadd.f32 %v899, 1.0
  %v901 = vrcp.pop %v900
  %v902 = vmul.f32 1.0, %v901
  %v903 = vtanh.pop %v896
  %v905 = vrot.slane %v806, 6
  %v907 = vmul.f32 %v902, %v905
  %909 = vrot.lane.b32.xlu0 %v903, 64
  %v910 = vpop.permute.xlu0 %909
  %v912 = vmul.f32 %v902, %v910
  %914 = vrot.lane.b32.xlu0 %v912, 32
  %v915 = vpop.permute.xlu0 %914
  %v917 = vadd.f32 %v907, %v915
  %v918 = vtanh.pop %v917
  %920 = vrot.lane.b32.xlu0 %v918, 64
  %v921 = vpop.permute.xlu0 %920
  %v923 = vmul.f32 %v902, %v921
  %925 = vrot.lane.b32.xlu0 %v923, 32
  %v926 = vpop.permute.xlu0 %925
  %928 = vst.msk [vmem:[#allocation2 + $0x8] sm:$0x30] %vm488, %v926
  %v929 = vrot.slane %v923, 4
  %930 = vrot.lane.b32.xlu0 %v929, 32
  %v931 = vpop.permute.xlu0 %930
  %v932 = vsel %vm164, %v931, 0
  %934 = vmatprep.subr.mxu0 0.0
  %935 = vmatpush1.msra.mxu0 %v160
  %936 = vmatprep.subr.mxu0 0.0
  %937 = vmatpush1.msra.mxu0 %v161
  %938 = vmatprep.subr.mxu0 0.0
  %939 = vmatpush1.msra.mxu0 %v162
  %940 = vmatprep.subr.mxu0 0.0
  %941 = vmatpush1.msra.mxu0 %v163
  %942 = vmatprep.subr.mxu0 0.0
  %943 = vmatpush1.msra.mxu0 0.0
  %944 = vmatprep.subr.mxu0 0.0
  %945 = vmatpush1.msra.mxu0 0.0
  %946 = vmatprep.subr.mxu0 0.0
  %947 = vmatpush1.msra.mxu0 0.0
  %948 = vmatprep.subr.mxu0 0.0
  %949 = vmatpush1.msra.mxu0 0.0
  %950 = vmatprep.subr.mxu0 0.0
  %951 = vmatpush1.msra.mxu0 0.0
  %952 = vmatprep.subr.mxu0 0.0
  %953 = vmatpush1.msra.mxu0 0.0
  %954 = vmatprep.subr.mxu0 0.0
  %955 = vmatpush1.msra.mxu0 0.0
  %956 = vmatprep.subr.mxu0 0.0
  %957 = vmatpush1.msra.mxu0 0.0
  %958 = vmatprep.subr.mxu0 0.0
  %959 = vmatpush1.msra.mxu0 0.0
  %960 = vmatprep.subr.mxu0 0.0
  %961 = vmatpush1.msra.mxu0 0.0
  %962 = vmatprep.subr.mxu0 0.0
  %963 = vmatpush1.msra.mxu0 0.0
  %964 = vmatprep.subr.mxu0 0.0
  %965 = vmatpush1.msra.mxu0 0.0
  %966 = vmatprep.subr.mxu0 0.0
  %967 = vmatpush1.msra.mxu0 0.0
  %968 = vmatprep.subr.mxu0 0.0
  %969 = vmatpush1.msra.mxu0 0.0
  %970 = vmatprep.subr.mxu0 0.0
  %971 = vmatpush1.msra.mxu0 0.0
  %972 = vmatprep.subr.mxu0 0.0
  %973 = vmatpush1.msra.mxu0 0.0
  %974 = vmatprep.subr.mxu0 0.0
  %975 = vmatpush1.msra.mxu0 0.0
  %976 = vmatprep.subr.mxu0 0.0
  %977 = vmatpush1.msra.mxu0 0.0
  %978 = vmatprep.subr.mxu0 0.0
  %979 = vmatpush1.msra.mxu0 0.0
  %980 = vmatprep.subr.mxu0 0.0
  %981 = vmatpush1.msra.mxu0 0.0
  %982 = vmatprep.subr.mxu0 0.0
  %983 = vmatpush1.msra.mxu0 0.0
  %984 = vmatprep.subr.mxu0 0.0
  %985 = vmatpush1.msra.mxu0 0.0
  %986 = vmatprep.subr.mxu0 0.0
  %987 = vmatpush1.msra.mxu0 0.0
  %988 = vmatprep.subr.mxu0 0.0
  %989 = vmatpush1.msra.mxu0 0.0
  %990 = vmatprep.subr.mxu0 0.0
  %991 = vmatpush1.msra.mxu0 0.0
  %992 = vmatprep.subr.mxu0 0.0
  %993 = vmatpush1.msra.mxu0 0.0
  %994 = vmatprep.subr.mxu0 0.0
  %995 = vmatpush1.msra.mxu0 0.0
  %996 = vmatprep.subr.mxu0 0.0
  %997 = vmatpush1.msra.mxu0 0.0
  %998 = vmatprep.mubr.f32.mxu0 0.0
  %999 = vmatmul.mubr.f32.gmra.mrb[0].mxu0 %v932
  %v1000 = vpop.f32.mrb[0].mxu0
  %v1001 = vadd.f32 0.0, %v1000
  %v1002 = vpop.f32.mrb[0].mxu0
  %1003 = vdwg.mxu0
  %v1005 = vrot.slane %v1001, 2
  %v1007 = vadd.f32 %v157, %v1005
  %v1008 = vxor.u32 %v1007, 2147483648
  %v1009 = vmul.f32 %v1008, 1.442695
  %v1010 = vpow.pop %v1009
  %v1011 = vadd.f32 %v1010, 1.0
  %v1012 = vrcp.pop %v1011
  %v1013 = vmul.f32 1.0, %v1012
  %v1014 = vtanh.pop %v1007
  %v1016 = vrot.slane %v917, 6
  %v1018 = vmul.f32 %v1013, %v1016
  %1020 = vrot.lane.b32.xlu0 %v1014, 64
  %v1021 = vpop.permute.xlu0 %1020
  %v1023 = vmul.f32 %v1013, %v1021
  %1025 = vrot.lane.b32.xlu0 %v1023, 32
  %v1026 = vpop.permute.xlu0 %1025
  %v1028 = vadd.f32 %v1018, %v1026
  %v1029 = vtanh.pop %v1028
  %1031 = vrot.lane.b32.xlu0 %v1029, 64
  %v1032 = vpop.permute.xlu0 %1031
  %v1034 = vmul.f32 %v1013, %v1032
  %1036 = vrot.lane.b32.xlu0 %v1034, 32
  %v1037 = vpop.permute.xlu0 %1036
  %1039 = vst.msk [vmem:[#allocation2 + $0x8] sm:$0xc0] %vm600, %v1037
  %v1040 = vld [vmem:[#allocation2] sm:$0xff]
  %v1041 = vld [vmem:[#allocation2 + $0x8] sm:$0xff]
  %v1042 = vld [vmem:[%s5] sm:$0xff]
  %v1043 = vld [vmem:[%s5 + $0x8] sm:$0xff]
  %v1044 = vld [vmem:[%s5 + $0x10] sm:$0xff]
  %v1045 = vld [vmem:[%s5 + $0x18] sm:$0xff]
  %v1046 = vld [vmem:[%s7] sm:$0x1]
  %v1048 = vlaneseq
  %v1049 = vshrl.u32 %v1048, 7
  %v1050 = vsub.s32 0, %v1049
  %v1051 = vrot.slane %v1046, %v1050
  %v1054 = vsel %vm164, %v1040, 0
  %v1057 = vsel %vm164, %v1041, 0
  %1059 = vmatprep.subr.mxu0 0.0
  %1060 = vmatpush1.msra.mxu0 %v1042
  %1061 = vmatprep.subr.mxu0 0.0
  %1062 = vmatpush1.msra.mxu0 %v1043
  %1063 = vmatprep.subr.mxu0 0.0
  %1064 = vmatpush1.msra.mxu0 %v1044
  %1065 = vmatprep.subr.mxu0 0.0
  %1066 = vmatpush1.msra.mxu0 %v1045
  %1067 = vmatprep.subr.mxu0 0.0
  %1068 = vmatpush1.msra.mxu0 0.0
  %1069 = vmatprep.subr.mxu0 0.0
  %1070 = vmatpush1.msra.mxu0 0.0
  %1071 = vmatprep.subr.mxu0 0.0
  %1072 = vmatpush1.msra.mxu0 0.0
  %1073 = vmatprep.subr.mxu0 0.0
  %1074 = vmatpush1.msra.mxu0 0.0
  %1075 = vmatprep.subr.mxu0 0.0
  %1076 = vmatpush1.msra.mxu0 0.0
  %1077 = vmatprep.subr.mxu0 0.0
  %1078 = vmatpush1.msra.mxu0 0.0
  %1079 = vmatprep.subr.mxu0 0.0
  %1080 = vmatpush1.msra.mxu0 0.0
  %1081 = vmatprep.subr.mxu0 0.0
  %1082 = vmatpush1.msra.mxu0 0.0
  %1083 = vmatprep.subr.mxu0 0.0
  %1084 = vmatpush1.msra.mxu0 0.0
  %1085 = vmatprep.subr.mxu0 0.0
  %1086 = vmatpush1.msra.mxu0 0.0
  %1087 = vmatprep.subr.mxu0 0.0
  %1088 = vmatpush1.msra.mxu0 0.0
  %1089 = vmatprep.subr.mxu0 0.0
  %1090 = vmatpush1.msra.mxu0 0.0
  %1091 = vmatprep.subr.mxu0 0.0
  %1092 = vmatpush1.msra.mxu0 0.0
  %1093 = vmatprep.subr.mxu0 0.0
  %1094 = vmatpush1.msra.mxu0 0.0
  %1095 = vmatprep.subr.mxu0 0.0
  %1096 = vmatpush1.msra.mxu0 0.0
  %1097 = vmatprep.subr.mxu0 0.0
  %1098 = vmatpush1.msra.mxu0 0.0
  %1099 = vmatprep.subr.mxu0 0.0
  %1100 = vmatpush1.msra.mxu0 0.0
  %1101 = vmatprep.subr.mxu0 0.0
  %1102 = vmatpush1.msra.mxu0 0.0
  %1103 = vmatprep.subr.mxu0 0.0
  %1104 = vmatpush1.msra.mxu0 0.0
  %1105 = vmatprep.subr.mxu0 0.0
  %1106 = vmatpush1.msra.mxu0 0.0
  %1107 = vmatprep.subr.mxu0 0.0
  %1108 = vmatpush1.msra.mxu0 0.0
  %1109 = vmatprep.subr.mxu0 0.0
  %1110 = vmatpush1.msra.mxu0 0.0
  %1111 = vmatprep.subr.mxu0 0.0
  %1112 = vmatpush1.msra.mxu0 0.0
  %1113 = vmatprep.subr.mxu0 0.0
  %1114 = vmatpush1.msra.mxu0 0.0
  %1115 = vmatprep.subr.mxu0 0.0
  %1116 = vmatpush1.msra.mxu0 0.0
  %1117 = vmatprep.subr.mxu0 0.0
  %1118 = vmatpush1.msra.mxu0 0.0
  %1119 = vmatprep.subr.mxu0 0.0
  %1120 = vmatpush1.msra.mxu0 0.0
  %1121 = vmatprep.subr.mxu0 0.0
  %1122 = vmatpush1.msra.mxu0 0.0
  %1123 = vmatprep.mubr.f32.mxu0 0.0
  %1124 = vmatmul.mubr.f32.gmra.mrb[0].mxu0 %v1054
  %v1125 = vpop.f32.mrb[0].mxu0
  %v1126 = vadd.f32 %v1051, %v1125
  %v1127 = vpop.f32.mrb[0].mxu0
  %1128 = vmatprep.mubr.f32.mxu0 0.0
  %1129 = vmatmul.mubr.f32.gmra.mrb[0].mxu0 %v1057
  %v1130 = vpop.f32.mrb[0].mxu0
  %v1131 = vadd.f32 %v1051, %v1130
  %v1132 = vpop.f32.mrb[0].mxu0
  %1133 = vdwg.mxu0
  %v1134 = vld [vmem:[%s6] sm:$0xff]
  %v1135 = vld [vmem:[%s6 + $0x8] sm:$0xff]
  %v1136 = vld [vmem:[%s6 + $0x10] sm:$0xff]
  %v1137 = vld [vmem:[%s6 + $0x18] sm:$0xff]
  %1138 = vmatprep.subr.mxu0 0.0
  %1139 = vmatpush1.msra.mxu0 %v1134
  %1140 = vmatprep.subr.mxu0 0.0
  %1141 = vmatpush1.msra.mxu0 %v1135
  %1142 = vmatprep.subr.mxu0 0.0
  %1143 = vmatpush1.msra.mxu0 %v1136
  %1144 = vmatprep.subr.mxu0 0.0
  %1145 = vmatpush1.msra.mxu0 %v1137
  %1146 = vmatprep.subr.mxu0 0.0
  %1147 = vmatpush1.msra.mxu0 0.0
  %1148 = vmatprep.subr.mxu0 0.0
  %1149 = vmatpush1.msra.mxu0 0.0
  %1150 = vmatprep.subr.mxu0 0.0
  %1151 = vmatpush1.msra.mxu0 0.0
  %1152 = vmatprep.subr.mxu0 0.0
  %1153 = vmatpush1.msra.mxu0 0.0
  %1154 = vmatprep.subr.mxu0 0.0
  %1155 = vmatpush1.msra.mxu0 0.0
  %1156 = vmatprep.subr.mxu0 0.0
  %1157 = vmatpush1.msra.mxu0 0.0
  %1158 = vmatprep.subr.mxu0 0.0
  %1159 = vmatpush1.msra.mxu0 0.0
  %1160 = vmatprep.subr.mxu0 0.0
  %1161 = vmatpush1.msra.mxu0 0.0
  %1162 = vmatprep.subr.mxu0 0.0
  %1163 = vmatpush1.msra.mxu0 0.0
  %1164 = vmatprep.subr.mxu0 0.0
  %1165 = vmatpush1.msra.mxu0 0.0
  %1166 = vmatprep.subr.mxu0 0.0
  %1167 = vmatpush1.msra.mxu0 0.0
  %1168 = vmatprep.subr.mxu0 0.0
  %1169 = vmatpush1.msra.mxu0 0.0
  %1170 = vmatprep.subr.mxu0 0.0
  %1171 = vmatpush1.msra.mxu0 0.0
  %1172 = vmatprep.subr.mxu0 0.0
  %1173 = vmatpush1.msra.mxu0 0.0
  %1174 = vmatprep.subr.mxu0 0.0
  %1175 = vmatpush1.msra.mxu0 0.0
  %1176 = vmatprep.subr.mxu0 0.0
  %1177 = vmatpush1.msra.mxu0 0.0
  %1178 = vmatprep.subr.mxu0 0.0
  %1179 = vmatpush1.msra.mxu0 0.0
  %1180 = vmatprep.subr.mxu0 0.0
  %1181 = vmatpush1.msra.mxu0 0.0
  %1182 = vmatprep.subr.mxu0 0.0
  %1183 = vmatpush1.msra.mxu0 0.0
  %1184 = vmatprep.subr.mxu0 0.0
  %1185 = vmatpush1.msra.mxu0 0.0
  %1186 = vmatprep.subr.mxu0 0.0
  %1187 = vmatpush1.msra.mxu0 0.0
  %1188 = vmatprep.subr.mxu0 0.0
  %1189 = vmatpush1.msra.mxu0 0.0
  %1190 = vmatprep.subr.mxu0 0.0
  %1191 = vmatpush1.msra.mxu0 0.0
  %1192 = vmatprep.subr.mxu0 0.0
  %1193 = vmatpush1.msra.mxu0 0.0
  %1194 = vmatprep.subr.mxu0 0.0
  %1195 = vmatpush1.msra.mxu0 0.0
  %1196 = vmatprep.subr.mxu0 0.0
  %1197 = vmatpush1.msra.mxu0 0.0
  %1198 = vmatprep.subr.mxu0 0.0
  %1199 = vmatpush1.msra.mxu0 0.0
  %1200 = vmatprep.subr.mxu0 0.0
  %1201 = vmatpush1.msra.mxu0 0.0
  %1202 = vmatprep.mubr.f32.mxu0 0.0
  %1203 = vmatmul.mubr.f32.gmra.mrb[0].mxu0 %v166
  %v1204 = vpop.f32.mrb[0].mxu0
  %v1205 = vadd.f32 0.0, %v1204
  %v1206 = vpop.f32.mrb[0].mxu0
  %1207 = vdwg.mxu0
  %v1208 = vadd.f32 %v1126, %v1205
  %v1209 = vxor.u32 %v1208, 2147483648
  %v1210 = vmul.f32 %v1209, 1.442695
  %v1211 = vpow.pop %v1210
  %v1212 = vadd.f32 %v1211, 1.0
  %v1213 = vrcp.pop %v1212
  %v1214 = vmul.f32 1.0, %v1213
  %v1215 = vtanh.pop %v1208
  %v1216 = vmul.f32 %v1214, 0.0
  %1218 = vrot.lane.b32.xlu0 %v1215, 64
  %v1219 = vpop.permute.xlu0 %1218
  %v1221 = vmul.f32 %v1214, %v1219
  %1223 = vrot.lane.b32.xlu0 %v1221, 32
  %v1224 = vpop.permute.xlu0 %1223
  %v1226 = vadd.f32 %v1216, %v1224
  %v1227 = vtanh.pop %v1226
  %1229 = vrot.lane.b32.xlu0 %v1227, 64
  %v1230 = vpop.permute.xlu0 %1229
  %v1232 = vmul.f32 %v1214, %v1230
  %1234 = vrot.lane.b32.xlu0 %v1232, 32
  %v1235 = vpop.permute.xlu0 %1234
  %1237 = vst.msk [vmem:[#allocation3] sm:$0x3] %vm267, %v1235
  %v1238 = vsel %vm164, %v1235, 0
  %1240 = vmatprep.subr.mxu0 0.0
  %1241 = vmatpush1.msra.mxu0 %v1134
  %1242 = vmatprep.subr.mxu0 0.0
  %1243 = vmatpush1.msra.mxu0 %v1135
  %1244 = vmatprep.subr.mxu0 0.0
  %1245 = vmatpush1.msra.mxu0 %v1136
  %1246 = vmatprep.subr.mxu0 0.0
  %1247 = vmatpush1.msra.mxu0 %v1137
  %1248 = vmatprep.subr.mxu0 0.0
  %1249 = vmatpush1.msra.mxu0 0.0
  %1250 = vmatprep.subr.mxu0 0.0
  %1251 = vmatpush1.msra.mxu0 0.0
  %1252 = vmatprep.subr.mxu0 0.0
  %1253 = vmatpush1.msra.mxu0 0.0
  %1254 = vmatprep.subr.mxu0 0.0
  %1255 = vmatpush1.msra.mxu0 0.0
  %1256 = vmatprep.subr.mxu0 0.0
  %1257 = vmatpush1.msra.mxu0 0.0
  %1258 = vmatprep.subr.mxu0 0.0
  %1259 = vmatpush1.msra.mxu0 0.0
  %1260 = vmatprep.subr.mxu0 0.0
  %1261 = vmatpush1.msra.mxu0 0.0
  %1262 = vmatprep.subr.mxu0 0.0
  %1263 = vmatpush1.msra.mxu0 0.0
  %1264 = vmatprep.subr.mxu0 0.0
  %1265 = vmatpush1.msra.mxu0 0.0
  %1266 = vmatprep.subr.mxu0 0.0
  %1267 = vmatpush1.msra.mxu0 0.0
  %1268 = vmatprep.subr.mxu0 0.0
  %1269 = vmatpush1.msra.mxu0 0.0
  %1270 = vmatprep.subr.mxu0 0.0
  %1271 = vmatpush1.msra.mxu0 0.0
  %1272 = vmatprep.subr.mxu0 0.0
  %1273 = vmatpush1.msra.mxu0 0.0
  %1274 = vmatprep.subr.mxu0 0.0
  %1275 = vmatpush1.msra.mxu0 0.0
  %1276 = vmatprep.subr.mxu0 0.0
  %1277 = vmatpush1.msra.mxu0 0.0
  %1278 = vmatprep.subr.mxu0 0.0
  %1279 = vmatpush1.msra.mxu0 0.0
  %1280 = vmatprep.subr.mxu0 0.0
  %1281 = vmatpush1.msra.mxu0 0.0
  %1282 = vmatprep.subr.mxu0 0.0
  %1283 = vmatpush1.msra.mxu0 0.0
  %1284 = vmatprep.subr.mxu0 0.0
  %1285 = vmatpush1.msra.mxu0 0.0
  %1286 = vmatprep.subr.mxu0 0.0
  %1287 = vmatpush1.msra.mxu0 0.0
  %1288 = vmatprep.subr.mxu0 0.0
  %1289 = vmatpush1.msra.mxu0 0.0
  %1290 = vmatprep.subr.mxu0 0.0
  %1291 = vmatpush1.msra.mxu0 0.0
  %1292 = vmatprep.subr.mxu0 0.0
  %1293 = vmatpush1.msra.mxu0 0.0
  %1294 = vmatprep.subr.mxu0 0.0
  %1295 = vmatpush1.msra.mxu0 0.0
  %1296 = vmatprep.subr.mxu0 0.0
  %1297 = vmatpush1.msra.mxu0 0.0
  %1298 = vmatprep.subr.mxu0 0.0
  %1299 = vmatpush1.msra.mxu0 0.0
  %1300 = vmatprep.subr.mxu0 0.0
  %1301 = vmatpush1.msra.mxu0 0.0
  %1302 = vmatprep.subr.mxu0 0.0
  %1303 = vmatpush1.msra.mxu0 0.0
  %1304 = vmatprep.mubr.f32.mxu0 0.0
  %1305 = vmatmul.mubr.f32.gmra.mrb[0].mxu0 %v1238
  %v1306 = vpop.f32.mrb[0].mxu0
  %v1307 = vadd.f32 0.0, %v1306
  %v1308 = vpop.f32.mrb[0].mxu0
  %1309 = vdwg.mxu0
  %v1311 = vrot.slane %v1307, 6
  %v1313 = vadd.f32 %v1126, %v1311
  %v1314 = vxor.u32 %v1313, 2147483648
  %v1315 = vmul.f32 %v1314, 1.442695
  %v1316 = vpow.pop %v1315
  %v1317 = vadd.f32 %v1316, 1.0
  %v1318 = vrcp.pop %v1317
  %v1319 = vmul.f32 1.0, %v1318
  %v1320 = vtanh.pop %v1313
  %v1322 = vrot.slane %v1226, 6
  %v1324 = vmul.f32 %v1319, %v1322
  %1326 = vrot.lane.b32.xlu0 %v1320, 64
  %v1327 = vpop.permute.xlu0 %1326
  %v1329 = vmul.f32 %v1319, %v1327
  %1331 = vrot.lane.b32.xlu0 %v1329, 32
  %v1332 = vpop.permute.xlu0 %1331
  %v1334 = vadd.f32 %v1324, %v1332
  %v1335 = vtanh.pop %v1334
  %1337 = vrot.lane.b32.xlu0 %v1335, 64
  %v1338 = vpop.permute.xlu0 %1337
  %v1340 = vmul.f32 %v1319, %v1338
  %1342 = vrot.lane.b32.xlu0 %v1340, 32
  %v1343 = vpop.permute.xlu0 %1342
  %1345 = vst.msk [vmem:[#allocation3] sm:$0xc] %vm376, %v1343
  %v1346 = vrot.slane %v1340, 2
  %1347 = vrot.lane.b32.xlu0 %v1346, 32
  %v1348 = vpop.permute.xlu0 %1347
  %v1349 = vsel %vm164, %v1348, 0
  %1351 = vmatprep.subr.mxu0 0.0
  %1352 = vmatpush1.msra.mxu0 %v1134
  %1353 = vmatprep.subr.mxu0 0.0
  %1354 = vmatpush1.msra.mxu0 %v1135
  %1355 = vmatprep.subr.mxu0 0.0
  %1356 = vmatpush1.msra.mxu0 %v1136
  %1357 = vmatprep.subr.mxu0 0.0
  %1358 = vmatpush1.msra.mxu0 %v1137
  %1359 = vmatprep.subr.mxu0 0.0
  %1360 = vmatpush1.msra.mxu0 0.0
  %1361 = vmatprep.subr.mxu0 0.0
  %1362 = vmatpush1.msra.mxu0 0.0
  %1363 = vmatprep.subr.mxu0 0.0
  %1364 = vmatpush1.msra.mxu0 0.0
  %1365 = vmatprep.subr.mxu0 0.0
  %1366 = vmatpush1.msra.mxu0 0.0
  %1367 = vmatprep.subr.mxu0 0.0
  %1368 = vmatpush1.msra.mxu0 0.0
  %1369 = vmatprep.subr.mxu0 0.0
  %1370 = vmatpush1.msra.mxu0 0.0
  %1371 = vmatprep.subr.mxu0 0.0
  %1372 = vmatpush1.msra.mxu0 0.0
  %1373 = vmatprep.subr.mxu0 0.0
  %1374 = vmatpush1.msra.mxu0 0.0
  %1375 = vmatprep.subr.mxu0 0.0
  %1376 = vmatpush1.msra.mxu0 0.0
  %1377 = vmatprep.subr.mxu0 0.0
  %1378 = vmatpush1.msra.mxu0 0.0
  %1379 = vmatprep.subr.mxu0 0.0
  %1380 = vmatpush1.msra.mxu0 0.0
  %1381 = vmatprep.subr.mxu0 0.0
  %1382 = vmatpush1.msra.mxu0 0.0
  %1383 = vmatprep.subr.mxu0 0.0
  %1384 = vmatpush1.msra.mxu0 0.0
  %1385 = vmatprep.subr.mxu0 0.0
  %1386 = vmatpush1.msra.mxu0 0.0
  %1387 = vmatprep.subr.mxu0 0.0
  %1388 = vmatpush1.msra.mxu0 0.0
  %1389 = vmatprep.subr.mxu0 0.0
  %1390 = vmatpush1.msra.mxu0 0.0
  %1391 = vmatprep.subr.mxu0 0.0
  %1392 = vmatpush1.msra.mxu0 0.0
  %1393 = vmatprep.subr.mxu0 0.0
  %1394 = vmatpush1.msra.mxu0 0.0
  %1395 = vmatprep.subr.mxu0 0.0
  %1396 = vmatpush1.msra.mxu0 0.0
  %1397 = vmatprep.subr.mxu0 0.0
  %1398 = vmatpush1.msra.mxu0 0.0
  %1399 = vmatprep.subr.mxu0 0.0
  %1400 = vmatpush1.msra.mxu0 0.0
  %1401 = vmatprep.subr.mxu0 0.0
  %1402 = vmatpush1.msra.mxu0 0.0
  %1403 = vmatprep.subr.mxu0 0.0
  %1404 = vmatpush1.msra.mxu0 0.0
  %1405 = vmatprep.subr.mxu0 0.0
  %1406 = vmatpush1.msra.mxu0 0.0
  %1407 = vmatprep.subr.mxu0 0.0
  %1408 = vmatpush1.msra.mxu0 0.0
  %1409 = vmatprep.subr.mxu0 0.0
  %1410 = vmatpush1.msra.mxu0 0.0
  %1411 = vmatprep.subr.mxu0 0.0
  %1412 = vmatpush1.msra.mxu0 0.0
  %1413 = vmatprep.subr.mxu0 0.0
  %1414 = vmatpush1.msra.mxu0 0.0
  %1415 = vmatprep.mubr.f32.mxu0 0.0
  %1416 = vmatmul.mubr.f32.gmra.mrb[0].mxu0 %v1349
  %v1417 = vpop.f32.mrb[0].mxu0
  %v1418 = vadd.f32 0.0, %v1417
  %v1419 = vpop.f32.mrb[0].mxu0
  %1420 = vdwg.mxu0
  %v1422 = vrot.slane %v1418, 4
  %v1424 = vadd.f32 %v1126, %v1422
  %v1425 = vxor.u32 %v1424, 2147483648
  %v1426 = vmul.f32 %v1425, 1.442695
  %v1427 = vpow.pop %v1426
  %v1428 = vadd.f32 %v1427, 1.0
  %v1429 = vrcp.pop %v1428
  %v1430 = vmul.f32 1.0, %v1429
  %v1431 = vtanh.pop %v1424
  %v1433 = vrot.slane %v1334, 6
  %v1435 = vmul.f32 %v1430, %v1433
  %1437 = vrot.lane.b32.xlu0 %v1431, 64
  %v1438 = vpop.permute.xlu0 %1437
  %v1440 = vmul.f32 %v1430, %v1438
  %1442 = vrot.lane.b32.xlu0 %v1440, 32
  %v1443 = vpop.permute.xlu0 %1442
  %v1445 = vadd.f32 %v1435, %v1443
  %v1446 = vtanh.pop %v1445
  %1448 = vrot.lane.b32.xlu0 %v1446, 64
  %v1449 = vpop.permute.xlu0 %1448
  %v1451 = vmul.f32 %v1430, %v1449
  %1453 = vrot.lane.b32.xlu0 %v1451, 32
  %v1454 = vpop.permute.xlu0 %1453
  %1456 = vst.msk [vmem:[#allocation3] sm:$0x30] %vm488, %v1454
  %v1457 = vrot.slane %v1451, 4
  %1458 = vrot.lane.b32.xlu0 %v1457, 32
  %v1459 = vpop.permute.xlu0 %1458
  %v1460 = vsel %vm164, %v1459, 0
  %1462 = vmatprep.subr.mxu0 0.0
  %1463 = vmatpush1.msra.mxu0 %v1134
  %1464 = vmatprep.subr.mxu0 0.0
  %1465 = vmatpush1.msra.mxu0 %v1135
  %1466 = vmatprep.subr.mxu0 0.0
  %1467 = vmatpush1.msra.mxu0 %v1136
  %1468 = vmatprep.subr.mxu0 0.0
  %1469 = vmatpush1.msra.mxu0 %v1137
  %1470 = vmatprep.subr.mxu0 0.0
  %1471 = vmatpush1.msra.mxu0 0.0
  %1472 = vmatprep.subr.mxu0 0.0
  %1473 = vmatpush1.msra.mxu0 0.0
  %1474 = vmatprep.subr.mxu0 0.0
  %1475 = vmatpush1.msra.mxu0 0.0
  %1476 = vmatprep.subr.mxu0 0.0
  %1477 = vmatpush1.msra.mxu0 0.0
  %1478 = vmatprep.subr.mxu0 0.0
  %1479 = vmatpush1.msra.mxu0 0.0
  %1480 = vmatprep.subr.mxu0 0.0
  %1481 = vmatpush1.msra.mxu0 0.0
  %1482 = vmatprep.subr.mxu0 0.0
  %1483 = vmatpush1.msra.mxu0 0.0
  %1484 = vmatprep.subr.mxu0 0.0
  %1485 = vmatpush1.msra.mxu0 0.0
  %1486 = vmatprep.subr.mxu0 0.0
  %1487 = vmatpush1.msra.mxu0 0.0
  %1488 = vmatprep.subr.mxu0 0.0
  %1489 = vmatpush1.msra.mxu0 0.0
  %1490 = vmatprep.subr.mxu0 0.0
  %1491 = vmatpush1.msra.mxu0 0.0
  %1492 = vmatprep.subr.mxu0 0.0
  %1493 = vmatpush1.msra.mxu0 0.0
  %1494 = vmatprep.subr.mxu0 0.0
  %1495 = vmatpush1.msra.mxu0 0.0
  %1496 = vmatprep.subr.mxu0 0.0
  %1497 = vmatpush1.msra.mxu0 0.0
  %1498 = vmatprep.subr.mxu0 0.0
  %1499 = vmatpush1.msra.mxu0 0.0
  %1500 = vmatprep.subr.mxu0 0.0
  %1501 = vmatpush1.msra.mxu0 0.0
  %1502 = vmatprep.subr.mxu0 0.0
  %1503 = vmatpush1.msra.mxu0 0.0
  %1504 = vmatprep.subr.mxu0 0.0
  %1505 = vmatpush1.msra.mxu0 0.0
  %1506 = vmatprep.subr.mxu0 0.0
  %1507 = vmatpush1.msra.mxu0 0.0
  %1508 = vmatprep.subr.mxu0 0.0
  %1509 = vmatpush1.msra.mxu0 0.0
  %1510 = vmatprep.subr.mxu0 0.0
  %1511 = vmatpush1.msra.mxu0 0.0
  %1512 = vmatprep.subr.mxu0 0.0
  %1513 = vmatpush1.msra.mxu0 0.0
  %1514 = vmatprep.subr.mxu0 0.0
  %1515 = vmatpush1.msra.mxu0 0.0
  %1516 = vmatprep.subr.mxu0 0.0
  %1517 = vmatpush1.msra.mxu0 0.0
  %1518 = vmatprep.subr.mxu0 0.0
  %1519 = vmatpush1.msra.mxu0 0.0
  %1520 = vmatprep.subr.mxu0 0.0
  %1521 = vmatpush1.msra.mxu0 0.0
  %1522 = vmatprep.subr.mxu0 0.0
  %1523 = vmatpush1.msra.mxu0 0.0
  %1524 = vmatprep.subr.mxu0 0.0
  %1525 = vmatpush1.msra.mxu0 0.0
  %1526 = vmatprep.mubr.f32.mxu0 0.0
  %1527 = vmatmul.mubr.f32.gmra.mrb[0].mxu0 %v1460
  %v1528 = vpop.f32.mrb[0].mxu0
  %v1529 = vadd.f32 0.0, %v1528
  %v1530 = vpop.f32.mrb[0].mxu0
  %1531 = vdwg.mxu0
  %v1533 = vrot.slane %v1529, 2
  %v1535 = vadd.f32 %v1126, %v1533
  %v1536 = vxor.u32 %v1535, 2147483648
  %v1537 = vmul.f32 %v1536, 1.442695
  %v1538 = vpow.pop %v1537
  %v1539 = vadd.f32 %v1538, 1.0
  %v1540 = vrcp.pop %v1539
  %v1541 = vmul.f32 1.0, %v1540
  %v1542 = vtanh.pop %v1535
  %v1544 = vrot.slane %v1445, 6
  %v1546 = vmul.f32 %v1541, %v1544
  %1548 = vrot.lane.b32.xlu0 %v1542, 64
  %v1549 = vpop.permute.xlu0 %1548
  %v1551 = vmul.f32 %v1541, %v1549
  %1553 = vrot.lane.b32.xlu0 %v1551, 32
  %v1554 = vpop.permute.xlu0 %1553
  %v1556 = vadd.f32 %v1546, %v1554
  %v1557 = vtanh.pop %v1556
  %1559 = vrot.lane.b32.xlu0 %v1557, 64
  %v1560 = vpop.permute.xlu0 %1559
  %v1562 = vmul.f32 %v1541, %v1560
  %1564 = vrot.lane.b32.xlu0 %v1562, 32
  %v1565 = vpop.permute.xlu0 %1564
  %1567 = vst.msk [vmem:[#allocation3] sm:$0xc0] %vm600, %v1565
  %v1568 = vrot.slane %v1562, 6
  %1569 = vrot.lane.b32.xlu0 %v1568, 32
  %v1570 = vpop.permute.xlu0 %1569
  %v1571 = vsel %vm164, %v1570, 0
  %1573 = vmatprep.subr.mxu0 0.0
  %1574 = vmatpush1.msra.mxu0 %v1134
  %1575 = vmatprep.subr.mxu0 0.0
  %1576 = vmatpush1.msra.mxu0 %v1135
  %1577 = vmatprep.subr.mxu0 0.0
  %1578 = vmatpush1.msra.mxu0 %v1136
  %1579 = vmatprep.subr.mxu0 0.0
  %1580 = vmatpush1.msra.mxu0 %v1137
  %1581 = vmatprep.subr.mxu0 0.0
  %1582 = vmatpush1.msra.mxu0 0.0
  %1583 = vmatprep.subr.mxu0 0.0
  %1584 = vmatpush1.msra.mxu0 0.0
  %1585 = vmatprep.subr.mxu0 0.0
  %1586 = vmatpush1.msra.mxu0 0.0
  %1587 = vmatprep.subr.mxu0 0.0
  %1588 = vmatpush1.msra.mxu0 0.0
  %1589 = vmatprep.subr.mxu0 0.0
  %1590 = vmatpush1.msra.mxu0 0.0
  %1591 = vmatprep.subr.mxu0 0.0
  %1592 = vmatpush1.msra.mxu0 0.0
  %1593 = vmatprep.subr.mxu0 0.0
  %1594 = vmatpush1.msra.mxu0 0.0
  %1595 = vmatprep.subr.mxu0 0.0
  %1596 = vmatpush1.msra.mxu0 0.0
  %1597 = vmatprep.subr.mxu0 0.0
  %1598 = vmatpush1.msra.mxu0 0.0
  %1599 = vmatprep.subr.mxu0 0.0
  %1600 = vmatpush1.msra.mxu0 0.0
  %1601 = vmatprep.subr.mxu0 0.0
  %1602 = vmatpush1.msra.mxu0 0.0
  %1603 = vmatprep.subr.mxu0 0.0
  %1604 = vmatpush1.msra.mxu0 0.0
  %1605 = vmatprep.subr.mxu0 0.0
  %1606 = vmatpush1.msra.mxu0 0.0
  %1607 = vmatprep.subr.mxu0 0.0
  %1608 = vmatpush1.msra.mxu0 0.0
  %1609 = vmatprep.subr.mxu0 0.0
  %1610 = vmatpush1.msra.mxu0 0.0
  %1611 = vmatprep.subr.mxu0 0.0
  %1612 = vmatpush1.msra.mxu0 0.0
  %1613 = vmatprep.subr.mxu0 0.0
  %1614 = vmatpush1.msra.mxu0 0.0
  %1615 = vmatprep.subr.mxu0 0.0
  %1616 = vmatpush1.msra.mxu0 0.0
  %1617 = vmatprep.subr.mxu0 0.0
  %1618 = vmatpush1.msra.mxu0 0.0
  %1619 = vmatprep.subr.mxu0 0.0
  %1620 = vmatpush1.msra.mxu0 0.0
  %1621 = vmatprep.subr.mxu0 0.0
  %1622 = vmatpush1.msra.mxu0 0.0
  %1623 = vmatprep.subr.mxu0 0.0
  %1624 = vmatpush1.msra.mxu0 0.0
  %1625 = vmatprep.subr.mxu0 0.0
  %1626 = vmatpush1.msra.mxu0 0.0
  %1627 = vmatprep.subr.mxu0 0.0
  %1628 = vmatpush1.msra.mxu0 0.0
  %1629 = vmatprep.subr.mxu0 0.0
  %1630 = vmatpush1.msra.mxu0 0.0
  %1631 = vmatprep.subr.mxu0 0.0
  %1632 = vmatpush1.msra.mxu0 0.0
  %1633 = vmatprep.subr.mxu0 0.0
  %1634 = vmatpush1.msra.mxu0 0.0
  %1635 = vmatprep.subr.mxu0 0.0
  %1636 = vmatpush1.msra.mxu0 0.0
  %1637 = vmatprep.mubr.f32.mxu0 0.0
  %1638 = vmatmul.mubr.f32.gmra.mrb[0].mxu0 %v1571
  %v1639 = vpop.f32.mrb[0].mxu0
  %v1640 = vadd.f32 0.0, %v1639
  %v1641 = vpop.f32.mrb[0].mxu0
  %1642 = vdwg.mxu0
  %v1643 = vadd.f32 %v1131, %v1640
  %v1644 = vxor.u32 %v1643, 2147483648
  %v1645 = vmul.f32 %v1644, 1.442695
  %v1646 = vpow.pop %v1645
  %v1647 = vadd.f32 %v1646, 1.0
  %v1648 = vrcp.pop %v1647
  %v1649 = vmul.f32 1.0, %v1648
  %v1650 = vtanh.pop %v1643
  %v1652 = vrot.slane %v1556, 6
  %v1654 = vmul.f32 %v1649, %v1652
  %1656 = vrot.lane.b32.xlu0 %v1650, 64
  %v1657 = vpop.permute.xlu0 %1656
  %v1659 = vmul.f32 %v1649, %v1657
  %1661 = vrot.lane.b32.xlu0 %v1659, 32
  %v1662 = vpop.permute.xlu0 %1661
  %v1664 = vadd.f32 %v1654, %v1662
  %v1665 = vtanh.pop %v1664
  %1667 = vrot.lane.b32.xlu0 %v1665, 64
  %v1668 = vpop.permute.xlu0 %1667
  %v1670 = vmul.f32 %v1649, %v1668
  %1672 = vrot.lane.b32.xlu0 %v1670, 32
  %v1673 = vpop.permute.xlu0 %1672
  %1675 = vst.msk [vmem:[#allocation3 + $0x8] sm:$0x3] %vm267, %v1673
  %v1676 = vsel %vm164, %v1673, 0
  %1678 = vmatprep.subr.mxu0 0.0
  %1679 = vmatpush1.msra.mxu0 %v1134
  %1680 = vmatprep.subr.mxu0 0.0
  %1681 = vmatpush1.msra.mxu0 %v1135
  %1682 = vmatprep.subr.mxu0 0.0
  %1683 = vmatpush1.msra.mxu0 %v1136
  %1684 = vmatprep.subr.mxu0 0.0
  %1685 = vmatpush1.msra.mxu0 %v1137
  %1686 = vmatprep.subr.mxu0 0.0
  %1687 = vmatpush1.msra.mxu0 0.0
  %1688 = vmatprep.subr.mxu0 0.0
  %1689 = vmatpush1.msra.mxu0 0.0
  %1690 = vmatprep.subr.mxu0 0.0
  %1691 = vmatpush1.msra.mxu0 0.0
  %1692 = vmatprep.subr.mxu0 0.0
  %1693 = vmatpush1.msra.mxu0 0.0
  %1694 = vmatprep.subr.mxu0 0.0
  %1695 = vmatpush1.msra.mxu0 0.0
  %1696 = vmatprep.subr.mxu0 0.0
  %1697 = vmatpush1.msra.mxu0 0.0
  %1698 = vmatprep.subr.mxu0 0.0
  %1699 = vmatpush1.msra.mxu0 0.0
  %1700 = vmatprep.subr.mxu0 0.0
  %1701 = vmatpush1.msra.mxu0 0.0
  %1702 = vmatprep.subr.mxu0 0.0
  %1703 = vmatpush1.msra.mxu0 0.0
  %1704 = vmatprep.subr.mxu0 0.0
  %1705 = vmatpush1.msra.mxu0 0.0
  %1706 = vmatprep.subr.mxu0 0.0
  %1707 = vmatpush1.msra.mxu0 0.0
  %1708 = vmatprep.subr.mxu0 0.0
  %1709 = vmatpush1.msra.mxu0 0.0
  %1710 = vmatprep.subr.mxu0 0.0
  %1711 = vmatpush1.msra.mxu0 0.0
  %1712 = vmatprep.subr.mxu0 0.0
  %1713 = vmatpush1.msra.mxu0 0.0
  %1714 = vmatprep.subr.mxu0 0.0
  %1715 = vmatpush1.msra.mxu0 0.0
  %1716 = vmatprep.subr.mxu0 0.0
  %1717 = vmatpush1.msra.mxu0 0.0
  %1718 = vmatprep.subr.mxu0 0.0
  %1719 = vmatpush1.msra.mxu0 0.0
  %1720 = vmatprep.subr.mxu0 0.0
  %1721 = vmatpush1.msra.mxu0 0.0
  %1722 = vmatprep.subr.mxu0 0.0
  %1723 = vmatpush1.msra.mxu0 0.0
  %1724 = vmatprep.subr.mxu0 0.0
  %1725 = vmatpush1.msra.mxu0 0.0
  %1726 = vmatprep.subr.mxu0 0.0
  %1727 = vmatpush1.msra.mxu0 0.0
  %1728 = vmatprep.subr.mxu0 0.0
  %1729 = vmatpush1.msra.mxu0 0.0
  %1730 = vmatprep.subr.mxu0 0.0
  %1731 = vmatpush1.msra.mxu0 0.0
  %1732 = vmatprep.subr.mxu0 0.0
  %1733 = vmatpush1.msra.mxu0 0.0
  %1734 = vmatprep.subr.mxu0 0.0
  %1735 = vmatpush1.msra.mxu0 0.0
  %1736 = vmatprep.subr.mxu0 0.0
  %1737 = vmatpush1.msra.mxu0 0.0
  %1738 = vmatprep.subr.mxu0 0.0
  %1739 = vmatpush1.msra.mxu0 0.0
  %1740 = vmatprep.subr.mxu0 0.0
  %1741 = vmatpush1.msra.mxu0 0.0
  %1742 = vmatprep.mubr.f32.mxu0 0.0
  %1743 = vmatmul.mubr.f32.gmra.mrb[0].mxu0 %v1676
  %v1744 = vpop.f32.mrb[0].mxu0
  %v1745 = vadd.f32 0.0, %v1744
  %v1746 = vpop.f32.mrb[0].mxu0
  %1747 = vdwg.mxu0
  %v1749 = vrot.slane %v1745, 6
  %v1751 = vadd.f32 %v1131, %v1749
  %v1752 = vxor.u32 %v1751, 2147483648
  %v1753 = vmul.f32 %v1752, 1.442695
  %v1754 = vpow.pop %v1753
  %v1755 = vadd.f32 %v1754, 1.0
  %v1756 = vrcp.pop %v1755
  %v1757 = vmul.f32 1.0, %v1756
  %v1758 = vtanh.pop %v1751
  %v1760 = vrot.slane %v1664, 6
  %v1762 = vmul.f32 %v1757, %v1760
  %1764 = vrot.lane.b32.xlu0 %v1758, 64
  %v1765 = vpop.permute.xlu0 %1764
  %v1767 = vmul.f32 %v1757, %v1765
  %1769 = vrot.lane.b32.xlu0 %v1767, 32
  %v1770 = vpop.permute.xlu0 %1769
  %v1772 = vadd.f32 %v1762, %v1770
  %v1773 = vtanh.pop %v1772
  %1775 = vrot.lane.b32.xlu0 %v1773, 64
  %v1776 = vpop.permute.xlu0 %1775
  %v1778 = vmul.f32 %v1757, %v1776
  %1780 = vrot.lane.b32.xlu0 %v1778, 32
  %v1781 = vpop.permute.xlu0 %1780
  %1783 = vst.msk [vmem:[#allocation3 + $0x8] sm:$0xc] %vm376, %v1781
  %v1784 = vrot.slane %v1778, 2
  %1785 = vrot.lane.b32.xlu0 %v1784, 32
  %v1786 = vpop.permute.xlu0 %1785
  %v1787 = vsel %vm164, %v1786, 0
  %1789 = vmatprep.subr.mxu0 0.0
  %1790 = vmatpush1.msra.mxu0 %v1134
  %1791 = vmatprep.subr.mxu0 0.0
  %1792 = vmatpush1.msra.mxu0 %v1135
  %1793 = vmatprep.subr.mxu0 0.0
  %1794 = vmatpush1.msra.mxu0 %v1136
  %1795 = vmatprep.subr.mxu0 0.0
  %1796 = vmatpush1.msra.mxu0 %v1137
  %1797 = vmatprep.subr.mxu0 0.0
  %1798 = vmatpush1.msra.mxu0 0.0
  %1799 = vmatprep.subr.mxu0 0.0
  %1800 = vmatpush1.msra.mxu0 0.0
  %1801 = vmatprep.subr.mxu0 0.0
  %1802 = vmatpush1.msra.mxu0 0.0
  %1803 = vmatprep.subr.mxu0 0.0
  %1804 = vmatpush1.msra.mxu0 0.0
  %1805 = vmatprep.subr.mxu0 0.0
  %1806 = vmatpush1.msra.mxu0 0.0
  %1807 = vmatprep.subr.mxu0 0.0
  %1808 = vmatpush1.msra.mxu0 0.0
  %1809 = vmatprep.subr.mxu0 0.0
  %1810 = vmatpush1.msra.mxu0 0.0
  %1811 = vmatprep.subr.mxu0 0.0
  %1812 = vmatpush1.msra.mxu0 0.0
  %1813 = vmatprep.subr.mxu0 0.0
  %1814 = vmatpush1.msra.mxu0 0.0
  %1815 = vmatprep.subr.mxu0 0.0
  %1816 = vmatpush1.msra.mxu0 0.0
  %1817 = vmatprep.subr.mxu0 0.0
  %1818 = vmatpush1.msra.mxu0 0.0
  %1819 = vmatprep.subr.mxu0 0.0
  %1820 = vmatpush1.msra.mxu0 0.0
  %1821 = vmatprep.subr.mxu0 0.0
  %1822 = vmatpush1.msra.mxu0 0.0
  %1823 = vmatprep.subr.mxu0 0.0
  %1824 = vmatpush1.msra.mxu0 0.0
  %1825 = vmatprep.subr.mxu0 0.0
  %1826 = vmatpush1.msra.mxu0 0.0
  %1827 = vmatprep.subr.mxu0 0.0
  %1828 = vmatpush1.msra.mxu0 0.0
  %1829 = vmatprep.subr.mxu0 0.0
  %1830 = vmatpush1.msra.mxu0 0.0
  %1831 = vmatprep.subr.mxu0 0.0
  %1832 = vmatpush1.msra.mxu0 0.0
  %1833 = vmatprep.subr.mxu0 0.0
  %1834 = vmatpush1.msra.mxu0 0.0
  %1835 = vmatprep.subr.mxu0 0.0
  %1836 = vmatpush1.msra.mxu0 0.0
  %1837 = vmatprep.subr.mxu0 0.0
  %1838 = vmatpush1.msra.mxu0 0.0
  %1839 = vmatprep.subr.mxu0 0.0
  %1840 = vmatpush1.msra.mxu0 0.0
  %1841 = vmatprep.subr.mxu0 0.0
  %1842 = vmatpush1.msra.mxu0 0.0
  %1843 = vmatprep.subr.mxu0 0.0
  %1844 = vmatpush1.msra.mxu0 0.0
  %1845 = vmatprep.subr.mxu0 0.0
  %1846 = vmatpush1.msra.mxu0 0.0
  %1847 = vmatprep.subr.mxu0 0.0
  %1848 = vmatpush1.msra.mxu0 0.0
  %1849 = vmatprep.subr.mxu0 0.0
  %1850 = vmatpush1.msra.mxu0 0.0
  %1851 = vmatprep.subr.mxu0 0.0
  %1852 = vmatpush1.msra.mxu0 0.0
  %1853 = vmatprep.mubr.f32.mxu0 0.0
  %1854 = vmatmul.mubr.f32.gmra.mrb[0].mxu0 %v1787
  %v1855 = vpop.f32.mrb[0].mxu0
  %v1856 = vadd.f32 0.0, %v1855
  %v1857 = vpop.f32.mrb[0].mxu0
  %1858 = vdwg.mxu0
  %v1860 = vrot.slane %v1856, 4
  %v1862 = vadd.f32 %v1131, %v1860
  %v1863 = vxor.u32 %v1862, 2147483648
  %v1864 = vmul.f32 %v1863, 1.442695
  %v1865 = vpow.pop %v1864
  %v1866 = vadd.f32 %v1865, 1.0
  %v1867 = vrcp.pop %v1866
  %v1868 = vmul.f32 1.0, %v1867
  %v1869 = vtanh.pop %v1862
  %v1871 = vrot.slane %v1772, 6
  %v1873 = vmul.f32 %v1868, %v1871
  %1875 = vrot.lane.b32.xlu0 %v1869, 64
  %v1876 = vpop.permute.xlu0 %1875
  %v1878 = vmul.f32 %v1868, %v1876
  %1880 = vrot.lane.b32.xlu0 %v1878, 32
  %v1881 = vpop.permute.xlu0 %1880
  %v1883 = vadd.f32 %v1873, %v1881
  %v1884 = vtanh.pop %v1883
  %1886 = vrot.lane.b32.xlu0 %v1884, 64
  %v1887 = vpop.permute.xlu0 %1886
  %v1889 = vmul.f32 %v1868, %v1887
  %1891 = vrot.lane.b32.xlu0 %v1889, 32
  %v1892 = vpop.permute.xlu0 %1891
  %1894 = vst.msk [vmem:[#allocation3 + $0x8] sm:$0x30] %vm488, %v1892
  %v1895 = vrot.slane %v1889, 4
  %1896 = vrot.lane.b32.xlu0 %v1895, 32
  %v1897 = vpop.permute.xlu0 %1896
  %v1898 = vsel %vm164, %v1897, 0
  %1900 = vmatprep.subr.mxu0 0.0
  %1901 = vmatpush1.msra.mxu0 %v1134
  %1902 = vmatprep.subr.mxu0 0.0
  %1903 = vmatpush1.msra.mxu0 %v1135
  %1904 = vmatprep.subr.mxu0 0.0
  %1905 = vmatpush1.msra.mxu0 %v1136
  %1906 = vmatprep.subr.mxu0 0.0
  %1907 = vmatpush1.msra.mxu0 %v1137
  %1908 = vmatprep.subr.mxu0 0.0
  %1909 = vmatpush1.msra.mxu0 0.0
  %1910 = vmatprep.subr.mxu0 0.0
  %1911 = vmatpush1.msra.mxu0 0.0
  %1912 = vmatprep.subr.mxu0 0.0
  %1913 = vmatpush1.msra.mxu0 0.0
  %1914 = vmatprep.subr.mxu0 0.0
  %1915 = vmatpush1.msra.mxu0 0.0
  %1916 = vmatprep.subr.mxu0 0.0
  %1917 = vmatpush1.msra.mxu0 0.0
  %1918 = vmatprep.subr.mxu0 0.0
  %1919 = vmatpush1.msra.mxu0 0.0
  %1920 = vmatprep.subr.mxu0 0.0
  %1921 = vmatpush1.msra.mxu0 0.0
  %1922 = vmatprep.subr.mxu0 0.0
  %1923 = vmatpush1.msra.mxu0 0.0
  %1924 = vmatprep.subr.mxu0 0.0
  %1925 = vmatpush1.msra.mxu0 0.0
  %1926 = vmatprep.subr.mxu0 0.0
  %1927 = vmatpush1.msra.mxu0 0.0
  %1928 = vmatprep.subr.mxu0 0.0
  %1929 = vmatpush1.msra.mxu0 0.0
  %1930 = vmatprep.subr.mxu0 0.0
  %1931 = vmatpush1.msra.mxu0 0.0
  %1932 = vmatprep.subr.mxu0 0.0
  %1933 = vmatpush1.msra.mxu0 0.0
  %1934 = vmatprep.subr.mxu0 0.0
  %1935 = vmatpush1.msra.mxu0 0.0
  %1936 = vmatprep.subr.mxu0 0.0
  %1937 = vmatpush1.msra.mxu0 0.0
  %1938 = vmatprep.subr.mxu0 0.0
  %1939 = vmatpush1.msra.mxu0 0.0
  %1940 = vmatprep.subr.mxu0 0.0
  %1941 = vmatpush1.msra.mxu0 0.0
  %1942 = vmatprep.subr.mxu0 0.0
  %1943 = vmatpush1.msra.mxu0 0.0
  %1944 = vmatprep.subr.mxu0 0.0
  %1945 = vmatpush1.msra.mxu0 0.0
  %1946 = vmatprep.subr.mxu0 0.0
  %1947 = vmatpush1.msra.mxu0 0.0
  %1948 = vmatprep.subr.mxu0 0.0
  %1949 = vmatpush1.msra.mxu0 0.0
  %1950 = vmatprep.subr.mxu0 0.0
  %1951 = vmatpush1.msra.mxu0 0.0
  %1952 = vmatprep.subr.mxu0 0.0
  %1953 = vmatpush1.msra.mxu0 0.0
  %1954 = vmatprep.subr.mxu0 0.0
  %1955 = vmatpush1.msra.mxu0 0.0
  %1956 = vmatprep.subr.mxu0 0.0
  %1957 = vmatpush1.msra.mxu0 0.0
  %1958 = vmatprep.subr.mxu0 0.0
  %1959 = vmatpush1.msra.mxu0 0.0
  %1960 = vmatprep.subr.mxu0 0.0
  %1961 = vmatpush1.msra.mxu0 0.0
  %1962 = vmatprep.subr.mxu0 0.0
  %1963 = vmatpush1.msra.mxu0 0.0
  %1964 = vmatprep.mubr.f32.mxu0 0.0
  %1965 = vmatmul.mubr.f32.gmra.mrb[0].mxu0 %v1898
  %v1966 = vpop.f32.mrb[0].mxu0
  %v1967 = vadd.f32 0.0, %v1966
  %v1968 = vpop.f32.mrb[0].mxu0
  %1969 = vdwg.mxu0
  %v1971 = vrot.slane %v1967, 2
  %v1973 = vadd.f32 %v1131, %v1971
  %v1974 = vxor.u32 %v1973, 2147483648
  %v1975 = vmul.f32 %v1974, 1.442695
  %v1976 = vpow.pop %v1975
  %v1977 = vadd.f32 %v1976, 1.0
  %v1978 = vrcp.pop %v1977
  %v1979 = vmul.f32 1.0, %v1978
  %v1980 = vtanh.pop %v1973
  %v1982 = vrot.slane %v1883, 6
  %v1984 = vmul.f32 %v1979, %v1982
  %1986 = vrot.lane.b32.xlu0 %v1980, 64
  %v1987 = vpop.permute.xlu0 %1986
  %v1989 = vmul.f32 %v1979, %v1987
  %1991 = vrot.lane.b32.xlu0 %v1989, 32
  %v1992 = vpop.permute.xlu0 %1991
  %v1994 = vadd.f32 %v1984, %v1992
  %v1995 = vtanh.pop %v1994
  %1997 = vrot.lane.b32.xlu0 %v1995, 64
  %v1998 = vpop.permute.xlu0 %1997
  %v2000 = vmul.f32 %v1979, %v1998
  %2002 = vrot.lane.b32.xlu0 %v2000, 32
  %v2003 = vpop.permute.xlu0 %2002
  %2005 = vst.msk [vmem:[#allocation3 + $0x8] sm:$0xc0] %vm600, %v2003
  %v2006 = vld [vmem:[%s1] sm:$0xff]
  %v2007 = vld [vmem:[%s8] sm:$0xff]
  %v2008 = vld [vmem:[%s9] sm:$0x1]
  %v2010 = vlaneseq
  %v2011 = vshrl.u32 %v2010, 7
  %v2012 = vsub.s32 0, %v2011
  %v2013 = vrot.slane %v2008, %v2012
  %vm2015 = vcmask 64512
  %v2017 = vsel %vm2015, %v2006, 0
  %2019 = vmatprep.subr.mxu0 0.0
  %2020 = vmatpush1.msra.mxu0 %v2007
  %2021 = vmatprep.subr.mxu0 0.0
  %2022 = vmatpush1.msra.mxu0 0.0
  %2023 = vmatprep.subr.mxu0 0.0
  %2024 = vmatpush1.msra.mxu0 0.0
  %2025 = vmatprep.subr.mxu0 0.0
  %2026 = vmatpush1.msra.mxu0 0.0
  %2027 = vmatprep.subr.mxu0 0.0
  %2028 = vmatpush1.msra.mxu0 0.0
  %2029 = vmatprep.subr.mxu0 0.0
  %2030 = vmatpush1.msra.mxu0 0.0
  %2031 = vmatprep.subr.mxu0 0.0
  %2032 = vmatpush1.msra.mxu0 0.0
  %2033 = vmatprep.subr.mxu0 0.0
  %2034 = vmatpush1.msra.mxu0 0.0
  %2035 = vmatprep.subr.mxu0 0.0
  %2036 = vmatpush1.msra.mxu0 0.0
  %2037 = vmatprep.subr.mxu0 0.0
  %2038 = vmatpush1.msra.mxu0 0.0
  %2039 = vmatprep.subr.mxu0 0.0
  %2040 = vmatpush1.msra.mxu0 0.0
  %2041 = vmatprep.subr.mxu0 0.0
  %2042 = vmatpush1.msra.mxu0 0.0
  %2043 = vmatprep.subr.mxu0 0.0
  %2044 = vmatpush1.msra.mxu0 0.0
  %2045 = vmatprep.subr.mxu0 0.0
  %2046 = vmatpush1.msra.mxu0 0.0
  %2047 = vmatprep.subr.mxu0 0.0
  %2048 = vmatpush1.msra.mxu0 0.0
  %2049 = vmatprep.subr.mxu0 0.0
  %2050 = vmatpush1.msra.mxu0 0.0
  %2051 = vmatprep.subr.mxu0 0.0
  %2052 = vmatpush1.msra.mxu0 0.0
  %2053 = vmatprep.subr.mxu0 0.0
  %2054 = vmatpush1.msra.mxu0 0.0
  %2055 = vmatprep.subr.mxu0 0.0
  %2056 = vmatpush1.msra.mxu0 0.0
  %2057 = vmatprep.subr.mxu0 0.0
  %2058 = vmatpush1.msra.mxu0 0.0
  %2059 = vmatprep.subr.mxu0 0.0
  %2060 = vmatpush1.msra.mxu0 0.0
  %2061 = vmatprep.subr.mxu0 0.0
  %2062 = vmatpush1.msra.mxu0 0.0
  %2063 = vmatprep.subr.mxu0 0.0
  %2064 = vmatpush1.msra.mxu0 0.0
  %2065 = vmatprep.subr.mxu0 0.0
  %2066 = vmatpush1.msra.mxu0 0.0
  %2067 = vmatprep.subr.mxu0 0.0
  %2068 = vmatpush1.msra.mxu0 0.0
  %2069 = vmatprep.subr.mxu0 0.0
  %2070 = vmatpush1.msra.mxu0 0.0
  %2071 = vmatprep.subr.mxu0 0.0
  %2072 = vmatpush1.msra.mxu0 0.0
  %2073 = vmatprep.subr.mxu0 0.0
  %2074 = vmatpush1.msra.mxu0 0.0
  %2075 = vmatprep.subr.mxu0 0.0
  %2076 = vmatpush1.msra.mxu0 0.0
  %2077 = vmatprep.subr.mxu0 0.0
  %2078 = vmatpush1.msra.mxu0 0.0
  %2079 = vmatprep.subr.mxu0 0.0
  %2080 = vmatpush1.msra.mxu0 0.0
  %2081 = vmatprep.subr.mxu0 0.0
  %2082 = vmatpush1.msra.mxu0 0.0
  %2083 = vmatprep.mubr.f32.mxu0 0.0
  %2084 = vmatmul.mubr.f32.gmra.mrb[0].mxu0 %v2017
  %v2085 = vpop.f32.mrb[0].mxu0
  %v2086 = vadd.f32 %v2013, %v2085
  %v2087 = vpop.f32.mrb[0].mxu0
  %2088 = vdwg.mxu0
  %v2089 = vmax.f32 %v2086, 0.0
  %v2090 = vld [vmem:[%s10] sm:$0xff]
  %v2091 = vld [vmem:[%s10 + $0x8] sm:$0xff]
  %v2092 = vld [vmem:[%s10 + $0x10] sm:$0xff]
  %v2093 = vld [vmem:[%s10 + $0x18] sm:$0xff]
  %v2094 = vld [vmem:[%s11] sm:$0x1]
  %v2096 = vlaneseq
  %v2097 = vshrl.u32 %v2096, 7
  %v2098 = vsub.s32 0, %v2097
  %v2099 = vrot.slane %v2094, %v2098
  %v2102 = vsel %vm164, %v2089, 0
  %2104 = vmatprep.subr.mxu0 0.0
  %2105 = vmatpush1.msra.mxu0 %v2090
  %2106 = vmatprep.subr.mxu0 0.0
  %2107 = vmatpush1.msra.mxu0 %v2091
  %2108 = vmatprep.subr.mxu0 0.0
  %2109 = vmatpush1.msra.mxu0 %v2092
  %2110 = vmatprep.subr.mxu0 0.0
  %2111 = vmatpush1.msra.mxu0 %v2093
  %2112 = vmatprep.subr.mxu0 0.0
  %2113 = vmatpush1.msra.mxu0 0.0
  %2114 = vmatprep.subr.mxu0 0.0
  %2115 = vmatpush1.msra.mxu0 0.0
  %2116 = vmatprep.subr.mxu0 0.0
  %2117 = vmatpush1.msra.mxu0 0.0
  %2118 = vmatprep.subr.mxu0 0.0
  %2119 = vmatpush1.msra.mxu0 0.0
  %2120 = vmatprep.subr.mxu0 0.0
  %2121 = vmatpush1.msra.mxu0 0.0
  %2122 = vmatprep.subr.mxu0 0.0
  %2123 = vmatpush1.msra.mxu0 0.0
  %2124 = vmatprep.subr.mxu0 0.0
  %2125 = vmatpush1.msra.mxu0 0.0
  %2126 = vmatprep.subr.mxu0 0.0
  %2127 = vmatpush1.msra.mxu0 0.0
  %2128 = vmatprep.subr.mxu0 0.0
  %2129 = vmatpush1.msra.mxu0 0.0
  %2130 = vmatprep.subr.mxu0 0.0
  %2131 = vmatpush1.msra.mxu0 0.0
  %2132 = vmatprep.subr.mxu0 0.0
  %2133 = vmatpush1.msra.mxu0 0.0
  %2134 = vmatprep.subr.mxu0 0.0
  %2135 = vmatpush1.msra.mxu0 0.0
  %2136 = vmatprep.subr.mxu0 0.0
  %2137 = vmatpush1.msra.mxu0 0.0
  %2138 = vmatprep.subr.mxu0 0.0
  %2139 = vmatpush1.msra.mxu0 0.0
  %2140 = vmatprep.subr.mxu0 0.0
  %2141 = vmatpush1.msra.mxu0 0.0
  %2142 = vmatprep.subr.mxu0 0.0
  %2143 = vmatpush1.msra.mxu0 0.0
  %2144 = vmatprep.subr.mxu0 0.0
  %2145 = vmatpush1.msra.mxu0 0.0
  %2146 = vmatprep.subr.mxu0 0.0
  %2147 = vmatpush1.msra.mxu0 0.0
  %2148 = vmatprep.subr.mxu0 0.0
  %2149 = vmatpush1.msra.mxu0 0.0
  %2150 = vmatprep.subr.mxu0 0.0
  %2151 = vmatpush1.msra.mxu0 0.0
  %2152 = vmatprep.subr.mxu0 0.0
  %2153 = vmatpush1.msra.mxu0 0.0
  %2154 = vmatprep.subr.mxu0 0.0
  %2155 = vmatpush1.msra.mxu0 0.0
  %2156 = vmatprep.subr.mxu0 0.0
  %2157 = vmatpush1.msra.mxu0 0.0
  %2158 = vmatprep.subr.mxu0 0.0
  %2159 = vmatpush1.msra.mxu0 0.0
  %2160 = vmatprep.subr.mxu0 0.0
  %2161 = vmatpush1.msra.mxu0 0.0
  %2162 = vmatprep.subr.mxu0 0.0
  %2163 = vmatpush1.msra.mxu0 0.0
  %2164 = vmatprep.subr.mxu0 0.0
  %2165 = vmatpush1.msra.mxu0 0.0
  %2166 = vmatprep.subr.mxu0 0.0
  %2167 = vmatpush1.msra.mxu0 0.0
  %2168 = vmatprep.mubr.f32.mxu0 0.0
  %2169 = vmatmul.mubr.f32.gmra.mrb[0].mxu0 %v2102
  %v2170 = vpop.f32.mrb[0].mxu0
  %v2171 = vadd.f32 %v2099, %v2170
  %v2172 = vpop.f32.mrb[0].mxu0
  %2173 = vdwg.mxu0
  %v2174 = vld [vmem:[%s13] sm:$0xff]
  %v2176 = vsel %vm2015, %v2171, 0
  %2178 = vmatprep.subr.mxu0 0.0
  %2179 = vmatpush1.msra.mxu0 %v2174
  %2180 = vmatprep.subr.mxu0 0.0
  %2181 = vmatpush1.msra.mxu0 0.0
  %2182 = vmatprep.subr.mxu0 0.0
  %2183 = vmatpush1.msra.mxu0 0.0
  %2184 = vmatprep.subr.mxu0 0.0
  %2185 = vmatpush1.msra.mxu0 0.0
  %2186 = vmatprep.subr.mxu0 0.0
  %2187 = vmatpush1.msra.mxu0 0.0
  %2188 = vmatprep.subr.mxu0 0.0
  %2189 = vmatpush1.msra.mxu0 0.0
  %2190 = vmatprep.subr.mxu0 0.0
  %2191 = vmatpush1.msra.mxu0 0.0
  %2192 = vmatprep.subr.mxu0 0.0
  %2193 = vmatpush1.msra.mxu0 0.0
  %2194 = vmatprep.subr.mxu0 0.0
  %2195 = vmatpush1.msra.mxu0 0.0
  %2196 = vmatprep.subr.mxu0 0.0
  %2197 = vmatpush1.msra.mxu0 0.0
  %2198 = vmatprep.subr.mxu0 0.0
  %2199 = vmatpush1.msra.mxu0 0.0
  %2200 = vmatprep.subr.mxu0 0.0
  %2201 = vmatpush1.msra.mxu0 0.0
  %2202 = vmatprep.subr.mxu0 0.0
  %2203 = vmatpush1.msra.mxu0 0.0
  %2204 = vmatprep.subr.mxu0 0.0
  %2205 = vmatpush1.msra.mxu0 0.0
  %2206 = vmatprep.subr.mxu0 0.0
  %2207 = vmatpush1.msra.mxu0 0.0
  %2208 = vmatprep.subr.mxu0 0.0
  %2209 = vmatpush1.msra.mxu0 0.0
  %2210 = vmatprep.subr.mxu0 0.0
  %2211 = vmatpush1.msra.mxu0 0.0
  %2212 = vmatprep.subr.mxu0 0.0
  %2213 = vmatpush1.msra.mxu0 0.0
  %2214 = vmatprep.subr.mxu0 0.0
  %2215 = vmatpush1.msra.mxu0 0.0
  %2216 = vmatprep.subr.mxu0 0.0
  %2217 = vmatpush1.msra.mxu0 0.0
  %2218 = vmatprep.subr.mxu0 0.0
  %2219 = vmatpush1.msra.mxu0 0.0
  %2220 = vmatprep.subr.mxu0 0.0
  %2221 = vmatpush1.msra.mxu0 0.0
  %2222 = vmatprep.subr.mxu0 0.0
  %2223 = vmatpush1.msra.mxu0 0.0
  %2224 = vmatprep.subr.mxu0 0.0
  %2225 = vmatpush1.msra.mxu0 0.0
  %2226 = vmatprep.subr.mxu0 0.0
  %2227 = vmatpush1.msra.mxu0 0.0
  %2228 = vmatprep.subr.mxu0 0.0
  %2229 = vmatpush1.msra.mxu0 0.0
  %2230 = vmatprep.subr.mxu0 0.0
  %2231 = vmatpush1.msra.mxu0 0.0
  %2232 = vmatprep.subr.mxu0 0.0
  %2233 = vmatpush1.msra.mxu0 0.0
  %2234 = vmatprep.subr.mxu0 0.0
  %2235 = vmatpush1.msra.mxu0 0.0
  %2236 = vmatprep.subr.mxu0 0.0
  %2237 = vmatpush1.msra.mxu0 0.0
  %2238 = vmatprep.subr.mxu0 0.0
  %2239 = vmatpush1.msra.mxu0 0.0
  %2240 = vmatprep.subr.mxu0 0.0
  %2241 = vmatpush1.msra.mxu0 0.0
  %2242 = vmatprep.mubr.f32.mxu0 0.0
  %2243 = vmatmul.mubr.f32.gmra.mrb[0].mxu0 %v2176
  %v2244 = vpop.f32.mrb[0].mxu0
  %v2245 = vadd.f32 0.0, %v2244
  %v2246 = vpop.f32.mrb[0].mxu0
  %2247 = vdwg.mxu0
  %v2248 = vld [vmem:[#allocation3] sm:$0xff]
  %v2249 = vld [vmem:[#allocation3 + $0x8] sm:$0xff]
  %v2250 = vld [vmem:[%s12] sm:$0xff]
  %v2251 = vld [vmem:[%s12 + $0x8] sm:$0xff]
  %v2252 = vld [vmem:[%s12 + $0x10] sm:$0xff]
  %v2253 = vld [vmem:[%s12 + $0x18] sm:$0xff]
  %v2255 = vsel %vm164, %v2248, 0
  %v2258 = vsel %vm164, %v2249, 0
  %2260 = vmatprep.subr.mxu0 0.0
  %2261 = vmatpush1.msra.mxu0 %v2250
  %2262 = vmatprep.subr.mxu0 0.0
  %2263 = vmatpush1.msra.mxu0 %v2251
  %2264 = vmatprep.subr.mxu0 0.0
  %2265 = vmatpush1.msra.mxu0 %v2252
  %2266 = vmatprep.subr.mxu0 0.0
  %2267 = vmatpush1.msra.mxu0 %v2253
  %2268 = vmatprep.subr.mxu0 0.0
  %2269 = vmatpush1.msra.mxu0 0.0
  %2270 = vmatprep.subr.mxu0 0.0
  %2271 = vmatpush1.msra.mxu0 0.0
  %2272 = vmatprep.subr.mxu0 0.0
  %2273 = vmatpush1.msra.mxu0 0.0
  %2274 = vmatprep.subr.mxu0 0.0
  %2275 = vmatpush1.msra.mxu0 0.0
  %2276 = vmatprep.subr.mxu0 0.0
  %2277 = vmatpush1.msra.mxu0 0.0
  %2278 = vmatprep.subr.mxu0 0.0
  %2279 = vmatpush1.msra.mxu0 0.0
  %2280 = vmatprep.subr.mxu0 0.0
  %2281 = vmatpush1.msra.mxu0 0.0
  %2282 = vmatprep.subr.mxu0 0.0
  %2283 = vmatpush1.msra.mxu0 0.0
  %2284 = vmatprep.subr.mxu0 0.0
  %2285 = vmatpush1.msra.mxu0 0.0
  %2286 = vmatprep.subr.mxu0 0.0
  %2287 = vmatpush1.msra.mxu0 0.0
  %2288 = vmatprep.subr.mxu0 0.0
  %2289 = vmatpush1.msra.mxu0 0.0
  %2290 = vmatprep.subr.mxu0 0.0
  %2291 = vmatpush1.msra.mxu0 0.0
  %2292 = vmatprep.subr.mxu0 0.0
  %2293 = vmatpush1.msra.mxu0 0.0
  %2294 = vmatprep.subr.mxu0 0.0
  %2295 = vmatpush1.msra.mxu0 0.0
  %2296 = vmatprep.subr.mxu0 0.0
  %2297 = vmatpush1.msra.mxu0 0.0
  %2298 = vmatprep.subr.mxu0 0.0
  %2299 = vmatpush1.msra.mxu0 0.0
  %2300 = vmatprep.subr.mxu0 0.0
  %2301 = vmatpush1.msra.mxu0 0.0
  %2302 = vmatprep.subr.mxu0 0.0
  %2303 = vmatpush1.msra.mxu0 0.0
  %2304 = vmatprep.subr.mxu0 0.0
  %2305 = vmatpush1.msra.mxu0 0.0
  %2306 = vmatprep.subr.mxu0 0.0
  %2307 = vmatpush1.msra.mxu0 0.0
  %2308 = vmatprep.subr.mxu0 0.0
  %2309 = vmatpush1.msra.mxu0 0.0
  %2310 = vmatprep.subr.mxu0 0.0
  %2311 = vmatpush1.msra.mxu0 0.0
  %2312 = vmatprep.subr.mxu0 0.0
  %2313 = vmatpush1.msra.mxu0 0.0
  %2314 = vmatprep.subr.mxu0 0.0
  %2315 = vmatpush1.msra.mxu0 0.0
  %2316 = vmatprep.subr.mxu0 0.0
  %2317 = vmatpush1.msra.mxu0 0.0
  %2318 = vmatprep.subr.mxu0 0.0
  %2319 = vmatpush1.msra.mxu0 0.0
  %2320 = vmatprep.subr.mxu0 0.0
  %2321 = vmatpush1.msra.mxu0 0.0
  %2322 = vmatprep.subr.mxu0 0.0
  %2323 = vmatpush1.msra.mxu0 0.0
  %2324 = vmatprep.mubr.f32.mxu0 0.0
  %2325 = vmatmul.mubr.f32.gmra.mrb[0].mxu0 %v2255
  %v2326 = vpop.f32.mrb[0].mxu0
  %v2327 = vadd.f32 0.0, %v2326
  %v2328 = vpop.f32.mrb[0].mxu0
  %2329 = vmatprep.mubr.f32.mxu0 0.0
  %2330 = vmatmul.mubr.f32.gmra.mrb[0].mxu0 %v2258
  %v2331 = vpop.f32.mrb[0].mxu0
  %v2332 = vadd.f32 0.0, %v2331
  %v2333 = vpop.f32.mrb[0].mxu0
  %2334 = vdwg.mxu0
  %v2337 = vcombine.high %v2327, %v2327
  %v2339 = vunpack.c.l.s4 1983009808
  %v2340 = vunpack.c.0.s8 %v2339
  %v2341 = vlaneseq
  %v2342 = vshrl.u32 %v2341, 7
  %v2343 = vsub.s32 %v2340, %v2342
  %v2344 = vrot.slane %v2327, %v2343
  %v2346 = vunpack.c.l.s4 1983009808
  %v2347 = vunpack.c.0.s8 %v2346
  %v2348 = vlaneseq
  %v2349 = vshrl.u32 %v2348, 7
  %v2350 = vsub.s32 %v2347, %v2349
  %v2351 = vrot.slane %v2337, %v2350
  %v2352 = vcombine.high %v2344, %v2344
  %v2353 = vcombine.high %v2351, %v2351
  %v2354 = vcombine.high %v2332, %v2332
  %v2356 = vunpack.c.l.s4 1983009808
  %v2357 = vunpack.c.0.s8 %v2356
  %v2358 = vlaneseq
  %v2359 = vshrl.u32 %v2358, 7
  %v2360 = vsub.s32 %v2357, %v2359
  %v2361 = vrot.slane %v2332, %v2360
  %v2363 = vunpack.c.l.s4 1983009808
  %v2364 = vunpack.c.0.s8 %v2363
  %v2365 = vlaneseq
  %v2366 = vshrl.u32 %v2365, 7
  %v2367 = vsub.s32 %v2364, %v2366
  %v2368 = vrot.slane %v2354, %v2367
  %v2369 = vcombine.high %v2361, %v2361
  %v2370 = vcombine.high %v2368, %v2368
  %v2380 = vcombine.high %v2245, %v2245
  %v2382 = vunpack.c.l.s4 1966171168
  %v2383 = vunpack.c.0.s8 %v2382
  %v2384 = vlaneseq
  %v2385 = vshrl.u32 %v2384, 7
  %v2386 = vsub.s32 %v2383, %v2385
  %v2387 = vrot.slane %v2245, %v2386
  %v2389 = vunpack.c.l.s4 1966171168
  %v2390 = vunpack.c.0.s8 %v2389
  %v2391 = vlaneseq
  %v2392 = vshrl.u32 %v2391, 7
  %v2393 = vsub.s32 %v2390, %v2392
  %v2394 = vrot.slane %v2380, %v2393
  %v2395 = vcombine.high %v2387, %v2387
  %v2396 = vcombine.high %v2394, %v2394
  %v2398 = vunpack.c.l.s4 1966171168
  %v2399 = vunpack.c.0.s8 %v2398
  %v2400 = vlaneseq
  %v2401 = vshrl.u32 %v2400, 7
  %v2402 = vsub.s32 %v2399, %v2401
  %v2403 = vrot.slane %v2387, %v2402
  %v2405 = vunpack.c.l.s4 1966171168
  %v2406 = vunpack.c.0.s8 %v2405
  %v2407 = vlaneseq
  %v2408 = vshrl.u32 %v2407, 7
  %v2409 = vsub.s32 %v2406, %v2408
  %v2410 = vrot.slane %v2394, %v2409
  %v2412 = vunpack.c.l.s4 1966171168
  %v2413 = vunpack.c.0.s8 %v2412
  %v2414 = vlaneseq
  %v2415 = vshrl.u32 %v2414, 7
  %v2416 = vsub.s32 %v2413, %v2415
  %v2417 = vrot.slane %v2395, %v2416
  %v2419 = vunpack.c.l.s4 1966171168
  %v2420 = vunpack.c.0.s8 %v2419
  %v2421 = vlaneseq
  %v2422 = vshrl.u32 %v2421, 7
  %v2423 = vsub.s32 %v2420, %v2422
  %v2424 = vrot.slane %v2396, %v2423
  %v2425 = vcombine.high %v2403, %v2403
  %v2426 = vcombine.high %v2410, %v2410
  %v2427 = vcombine.high %v2417, %v2417
  %v2428 = vcombine.high %v2424, %v2424
  %v2429 = vlaneseq
  %v2430 = vshrl.u32 %v2429, 7
  %v2431 = vsub.s32 0, %v2430
  %v2432 = vrot.slane %v2403, %v2431
  %v2433 = vlaneseq
  %v2434 = vshrl.u32 %v2433, 7
  %v2435 = vsub.s32 0, %v2434
  %v2436 = vrot.slane %v2417, %v2435
  %v2437 = vlaneseq
  %v2438 = vshrl.u32 %v2437, 7
  %v2439 = vsub.s32 0, %v2438
  %v2440 = vrot.slane %v2425, %v2439
  %v2441 = vlaneseq
  %v2442 = vshrl.u32 %v2441, 7
  %v2443 = vsub.s32 0, %v2442
  %v2444 = vrot.slane %v2427, %v2443
  %v2445 = vlaneseq
  %v2446 = vshrl.u32 %v2445, 7
  %v2447 = vsub.s32 0, %v2446
  %v2448 = vrot.slane %v2410, %v2447
  %v2449 = vlaneseq
  %v2450 = vshrl.u32 %v2449, 7
  %v2451 = vsub.s32 0, %v2450
  %v2452 = vrot.slane %v2424, %v2451
  %v2453 = vlaneseq
  %v2454 = vshrl.u32 %v2453, 7
  %v2455 = vsub.s32 0, %v2454
  %v2456 = vrot.slane %v2426, %v2455
  %v2457 = vlaneseq
  %v2458 = vshrl.u32 %v2457, 7
  %v2459 = vsub.s32 0, %v2458
  %v2460 = vrot.slane %v2428, %v2459
  %v2469 = vadd.f32 %v2344, %v2432
  %v2470 = vadd.f32 %v2352, %v2436
  %v2471 = vadd.f32 %v2351, %v2440
  %v2472 = vadd.f32 %v2353, %v2444
  %v2473 = vadd.f32 %v2361, %v2448
  %v2474 = vadd.f32 %v2369, %v2452
  %v2475 = vadd.f32 %v2368, %v2456
  %v2476 = vadd.f32 %v2370, %v2460
  %v2477 = vld [vmem:[%s14] sm:$0x1]
  %v2479 = vlaneseq
  %v2480 = vshrl.u32 %v2479, 7
  %v2481 = vsub.s32 0, %v2480
  %v2482 = vrot.slane %v2477, %v2481
  %v2484 = vadd.f32 %v2469, %v2482
  %v2485 = vadd.f32 %v2470, %v2482
  %v2486 = vadd.f32 %v2471, %v2482
  %v2487 = vadd.f32 %v2472, %v2482
  %v2488 = vadd.f32 %v2473, %v2482
  %v2489 = vadd.f32 %v2474, %v2482
  %v2490 = vadd.f32 %v2475, %v2482
  %v2491 = vadd.f32 %v2476, %v2482
  %v2492 = vmax.f32 %v2484, 0.0
  %v2493 = vmax.f32 %v2485, 0.0
  %v2494 = vmax.f32 %v2486, 0.0
  %v2495 = vmax.f32 %v2487, 0.0
  %v2496 = vmax.f32 %v2488, 0.0
  %v2497 = vmax.f32 %v2489, 0.0
  %v2498 = vmax.f32 %v2490, 0.0
  %v2499 = vmax.f32 %v2491, 0.0
  %v2500 = vld [vmem:[%s15] sm:$0xff]
  %v2501 = vld [vmem:[%s15 + $0x8] sm:$0xff]
  %v2502 = vld [vmem:[%s15 + $0x10] sm:$0xff]
  %v2503 = vld [vmem:[%s15 + $0x18] sm:$0xff]
  %v2504 = vld [vmem:[%s16] sm:$0x1]
  %v2506 = vlaneseq
  %v2507 = vshrl.u32 %v2506, 7
  %v2508 = vsub.s32 0, %v2507
  %v2509 = vrot.slane %v2504, %v2508
  %v2519 = vcombine.low %v2492, %v2493
  %v2520 = vcombine.low %v2494, %v2495
  %v2522 = vunpack.c.l.s4 1983009808
  %v2523 = vunpack.c.0.s8 %v2522
  %v2524 = vlaneseq
  %v2525 = vshrl.u32 %v2524, 7
  %v2526 = vsub.s32 %v2523, %v2525
  %v2527 = vrot.slane %v2519, %v2526
  %v2529 = vunpack.c.l.s4 1983009808
  %v2530 = vunpack.c.0.s8 %v2529
  %v2531 = vlaneseq
  %v2532 = vshrl.u32 %v2531, 7
  %v2533 = vsub.s32 %v2530, %v2532
  %v2534 = vrot.slane %v2520, %v2533
  %v2535 = vcombine.low %v2527, %v2534
  %v2536 = vcombine.low %v2496, %v2497
  %v2537 = vcombine.low %v2498, %v2499
  %v2539 = vunpack.c.l.s4 1983009808
  %v2540 = vunpack.c.0.s8 %v2539
  %v2541 = vlaneseq
  %v2542 = vshrl.u32 %v2541, 7
  %v2543 = vsub.s32 %v2540, %v2542
  %v2544 = vrot.slane %v2536, %v2543
  %v2546 = vunpack.c.l.s4 1983009808
  %v2547 = vunpack.c.0.s8 %v2546
  %v2548 = vlaneseq
  %v2549 = vshrl.u32 %v2548, 7
  %v2550 = vsub.s32 %v2547, %v2549
  %v2551 = vrot.slane %v2537, %v2550
  %v2552 = vcombine.low %v2544, %v2551
  %v2553 = vsel %vm164, %v2535, 0
  %v2555 = vsel %vm164, %v2552, 0
  %2557 = vmatprep.subr.mxu0 0.0
  %2558 = vmatpush1.msra.mxu0 %v2500
  %2559 = vmatprep.subr.mxu0 0.0
  %2560 = vmatpush1.msra.mxu0 %v2501
  %2561 = vmatprep.subr.mxu0 0.0
  %2562 = vmatpush1.msra.mxu0 %v2502
  %2563 = vmatprep.subr.mxu0 0.0
  %2564 = vmatpush1.msra.mxu0 %v2503
  %2565 = vmatprep.subr.mxu0 0.0
  %2566 = vmatpush1.msra.mxu0 0.0
  %2567 = vmatprep.subr.mxu0 0.0
  %2568 = vmatpush1.msra.mxu0 0.0
  %2569 = vmatprep.subr.mxu0 0.0
  %2570 = vmatpush1.msra.mxu0 0.0
  %2571 = vmatprep.subr.mxu0 0.0
  %2572 = vmatpush1.msra.mxu0 0.0
  %2573 = vmatprep.subr.mxu0 0.0
  %2574 = vmatpush1.msra.mxu0 0.0
  %2575 = vmatprep.subr.mxu0 0.0
  %2576 = vmatpush1.msra.mxu0 0.0
  %2577 = vmatprep.subr.mxu0 0.0
  %2578 = vmatpush1.msra.mxu0 0.0
  %2579 = vmatprep.subr.mxu0 0.0
  %2580 = vmatpush1.msra.mxu0 0.0
  %2581 = vmatprep.subr.mxu0 0.0
  %2582 = vmatpush1.msra.mxu0 0.0
  %2583 = vmatprep.subr.mxu0 0.0
  %2584 = vmatpush1.msra.mxu0 0.0
  %2585 = vmatprep.subr.mxu0 0.0
  %2586 = vmatpush1.msra.mxu0 0.0
  %2587 = vmatprep.subr.mxu0 0.0
  %2588 = vmatpush1.msra.mxu0 0.0
  %2589 = vmatprep.subr.mxu0 0.0
  %2590 = vmatpush1.msra.mxu0 0.0
  %2591 = vmatprep.subr.mxu0 0.0
  %2592 = vmatpush1.msra.mxu0 0.0
  %2593 = vmatprep.subr.mxu0 0.0
  %2594 = vmatpush1.msra.mxu0 0.0
  %2595 = vmatprep.subr.mxu0 0.0
  %2596 = vmatpush1.msra.mxu0 0.0
  %2597 = vmatprep.subr.mxu0 0.0
  %2598 = vmatpush1.msra.mxu0 0.0
  %2599 = vmatprep.subr.mxu0 0.0
  %2600 = vmatpush1.msra.mxu0 0.0
  %2601 = vmatprep.subr.mxu0 0.0
  %2602 = vmatpush1.msra.mxu0 0.0
  %2603 = vmatprep.subr.mxu0 0.0
  %2604 = vmatpush1.msra.mxu0 0.0
  %2605 = vmatprep.subr.mxu0 0.0
  %2606 = vmatpush1.msra.mxu0 0.0
  %2607 = vmatprep.subr.mxu0 0.0
  %2608 = vmatpush1.msra.mxu0 0.0
  %2609 = vmatprep.subr.mxu0 0.0
  %2610 = vmatpush1.msra.mxu0 0.0
  %2611 = vmatprep.subr.mxu0 0.0
  %2612 = vmatpush1.msra.mxu0 0.0
  %2613 = vmatprep.subr.mxu0 0.0
  %2614 = vmatpush1.msra.mxu0 0.0
  %2615 = vmatprep.subr.mxu0 0.0
  %2616 = vmatpush1.msra.mxu0 0.0
  %2617 = vmatprep.subr.mxu0 0.0
  %2618 = vmatpush1.msra.mxu0 0.0
  %2619 = vmatprep.subr.mxu0 0.0
  %2620 = vmatpush1.msra.mxu0 0.0
  %2621 = vmatprep.mubr.f32.mxu0 0.0
  %2622 = vmatmul.mubr.f32.gmra.mrb[0].mxu0 %v2553
  %v2623 = vpop.f32.mrb[0].mxu0
  %v2624 = vadd.f32 %v2509, %v2623
  %v2625 = vpop.f32.mrb[0].mxu0
  %2626 = vmatprep.mubr.f32.mxu0 0.0
  %2627 = vmatmul.mubr.f32.gmra.mrb[0].mxu0 %v2555
  %v2628 = vpop.f32.mrb[0].mxu0
  %v2629 = vadd.f32 %v2509, %v2628
  %v2630 = vpop.f32.mrb[0].mxu0
  %2631 = vdwg.mxu0
  %v2632 = vmax.f32 %v2624, 0.0
  %v2633 = vmax.f32 %v2629, 0.0
  %v2634 = vld [vmem:[%s17] sm:$0xff]
  %v2635 = vld [vmem:[%s17 + $0x8] sm:$0xff]
  %v2636 = vld [vmem:[%s17 + $0x10] sm:$0xff]
  %v2637 = vld [vmem:[%s17 + $0x18] sm:$0xff]
  %v2638 = vld [vmem:[#allocation4] sm:$0x1]
  %v2640 = vlaneseq
  %v2641 = vshrl.u32 %v2640, 7
  %v2642 = vsub.s32 0, %v2641
  %v2643 = vrot.slane %v2638, %v2642
  %v2646 = vsel %vm164, %v2632, 0
  %v2649 = vsel %vm164, %v2633, 0
  %2651 = vmatprep.subr.mxu0 0.0
  %2652 = vmatpush1.msra.mxu0 %v2634
  %2653 = vmatprep.subr.mxu0 0.0
  %2654 = vmatpush1.msra.mxu0 %v2635
  %2655 = vmatprep.subr.mxu0 0.0
  %2656 = vmatpush1.msra.mxu0 %v2636
  %2657 = vmatprep.subr.mxu0 0.0
  %2658 = vmatpush1.msra.mxu0 %v2637
  %2659 = vmatprep.subr.mxu0 0.0
  %2660 = vmatpush1.msra.mxu0 0.0
  %2661 = vmatprep.subr.mxu0 0.0
  %2662 = vmatpush1.msra.mxu0 0.0
  %2663 = vmatprep.subr.mxu0 0.0
  %2664 = vmatpush1.msra.mxu0 0.0
  %2665 = vmatprep.subr.mxu0 0.0
  %2666 = vmatpush1.msra.mxu0 0.0
  %2667 = vmatprep.subr.mxu0 0.0
  %2668 = vmatpush1.msra.mxu0 0.0
  %2669 = vmatprep.subr.mxu0 0.0
  %2670 = vmatpush1.msra.mxu0 0.0
  %2671 = vmatprep.subr.mxu0 0.0
  %2672 = vmatpush1.msra.mxu0 0.0
  %2673 = vmatprep.subr.mxu0 0.0
  %2674 = vmatpush1.msra.mxu0 0.0
  %2675 = vmatprep.subr.mxu0 0.0
  %2676 = vmatpush1.msra.mxu0 0.0
  %2677 = vmatprep.subr.mxu0 0.0
  %2678 = vmatpush1.msra.mxu0 0.0
  %2679 = vmatprep.subr.mxu0 0.0
  %2680 = vmatpush1.msra.mxu0 0.0
  %2681 = vmatprep.subr.mxu0 0.0
  %2682 = vmatpush1.msra.mxu0 0.0
  %2683 = vmatprep.subr.mxu0 0.0
  %2684 = vmatpush1.msra.mxu0 0.0
  %2685 = vmatprep.subr.mxu0 0.0
  %2686 = vmatpush1.msra.mxu0 0.0
  %2687 = vmatprep.subr.mxu0 0.0
  %2688 = vmatpush1.msra.mxu0 0.0
  %2689 = vmatprep.subr.mxu0 0.0
  %2690 = vmatpush1.msra.mxu0 0.0
  %2691 = vmatprep.subr.mxu0 0.0
  %2692 = vmatpush1.msra.mxu0 0.0
  %2693 = vmatprep.subr.mxu0 0.0
  %2694 = vmatpush1.msra.mxu0 0.0
  %2695 = vmatprep.subr.mxu0 0.0
  %2696 = vmatpush1.msra.mxu0 0.0
  %2697 = vmatprep.subr.mxu0 0.0
  %2698 = vmatpush1.msra.mxu0 0.0
  %2699 = vmatprep.subr.mxu0 0.0
  %2700 = vmatpush1.msra.mxu0 0.0
  %2701 = vmatprep.subr.mxu0 0.0
  %2702 = vmatpush1.msra.mxu0 0.0
  %2703 = vmatprep.subr.mxu0 0.0
  %2704 = vmatpush1.msra.mxu0 0.0
  %2705 = vmatprep.subr.mxu0 0.0
  %2706 = vmatpush1.msra.mxu0 0.0
  %2707 = vmatprep.subr.mxu0 0.0
  %2708 = vmatpush1.msra.mxu0 0.0
  %2709 = vmatprep.subr.mxu0 0.0
  %2710 = vmatpush1.msra.mxu0 0.0
  %2711 = vmatprep.subr.mxu0 0.0
  %2712 = vmatpush1.msra.mxu0 0.0
  %2713 = vmatprep.subr.mxu0 0.0
  %2714 = vmatpush1.msra.mxu0 0.0
  %2715 = vmatprep.mubr.f32.mxu0 0.0
  %2716 = vmatmul.mubr.f32.gmra.mrb[0].mxu0 %v2646
  %v2717 = vpop.f32.mrb[0].mxu0
  %v2718 = vadd.f32 %v2643, %v2717
  %v2719 = vpop.f32.mrb[0].mxu0
  %2720 = vmatprep.mubr.f32.mxu0 0.0
  %2721 = vmatmul.mubr.f32.gmra.mrb[0].mxu0 %v2649
  %v2722 = vpop.f32.mrb[0].mxu0
  %v2723 = vadd.f32 %v2643, %v2722
  %v2724 = vpop.f32.mrb[0].mxu0
  %2725 = vdwg.mxu0
  %vm2726 = vcmask 7168
  %2727 = vst.msk [vmem:[%s19] sm:$0xff] %vm2726, %v2718
  %2728 = vst.msk [vmem:[%s19 + $0x8] sm:$0xff] %vm2726, %v2723
  // Predicated region
  $region78: #{forecast_lstm_forward.1} parent=0 // pred_check
    _
  $region79: #{forecast_lstm_forward.1} parent=0 // pred_check_branch
    %2730 = sbr.rel (0) target = $region81
  $region80: #{forecast_lstm_forward.1} parent=0 // pred_region
    _
  $region81: #{forecast_lstm_forward.1} parent=0 // pred_fallthru
    _
  // Predicated region
  $region82: #{forecast_lstm_forward.1} parent=0 // pred_check
    _
  $region83: #{forecast_lstm_forward.1} parent=0 // pred_check_branch
    %2732 = sbr.rel (0) target = $region85
  $region84: #{forecast_lstm_forward.1} parent=0 // pred_region
    _
  $region85: #{forecast_lstm_forward.1} parent=0 // pred_fallthru
    _

</llo_original>
